<compile_context>
chip_gen: v7x
topology: tpu7x:2x2x1
jax: 0.10.0
libtpu: 0.0.40
codegen_flags: <defaults>
</compile_context>

<pallas_src>
import math
import functools

import jax
import jax.numpy as jnp
from jax.experimental import pallas as pl
from jax.experimental.pallas import tpu as pltpu

EPS = 1e-5          # nn.LayerNorm / attentions.LayerNorm eps
WINDOW = 4          # VITS relative-attention window_size


# ----------------------------------------------------------------------------
# helpers
# ----------------------------------------------------------------------------
def _round_up(v, m):
    return (v + m - 1) // m * m


def gen_sin_table(max_len, d_model):
    pos = jnp.arange(max_len, dtype=jnp.float32)[:, None]
    div = jnp.exp(jnp.arange(0, d_model, 2, dtype=jnp.float32)
                  * (-math.log(10000.0) / d_model))
    ang = pos * div
    pe = jnp.zeros((max_len, d_model), jnp.float32)
    pe = pe.at[:, 0::2].set(jnp.sin(ang))
    pe = pe.at[:, 1::2].set(jnp.cos(ang))
    return pe[None]  # (1, max_len, d_model)


def _layer_norm(z, gamma, beta):
    mu = jnp.mean(z, axis=-1, keepdims=True)
    var = jnp.mean((z - mu) ** 2, axis=-1, keepdims=True)
    return (z - mu) * jax.lax.rsqrt(var + EPS) * gamma + beta


def _bf16(v):
    return v.astype(jnp.bfloat16)


def _shift_rows(a, s):
    """out[t] = a[t - s] (static shift); rows shifted in from outside are zero."""
    T = a.shape[0]
    if s == 0:
        return a
    z = jnp.zeros((abs(s), a.shape[1]), a.dtype)
    if s > 0:
        return jnp.concatenate([z, a[:T - s]], axis=0)
    return jnp.concatenate([a[-s:], z], axis=0)


def _tpu_kind():
    try:
        return jax.devices()[0].device_kind.lower()
    except Exception:  # pragma: no cover
        return ""


def _hw_tuning():
    """(use bf16 for elementwise band math, scoped VMEM limit) per generation."""
    kind = _tpu_kind()
    ew_bf16 = ("v6" in kind) or ("v7" in kind)      # v5e has no bf16 VPU
    if "v7" in kind:
        vmem_limit = 56 * 1024 * 1024               # 64 MiB physical on v7x
    elif ("v5" in kind) or ("v6" in kind):
        vmem_limit = 100 * 1024 * 1024              # 128 MiB physical
    else:
        vmem_limit = 56 * 1024 * 1024               # conservative default
    return ew_bf16, vmem_limit


# ----------------------------------------------------------------------------
# fused encoder kernel: front (l==0) + attn layer + FFN layer + proj (l==last)
# ----------------------------------------------------------------------------
def encoder_kernel(x_in_ref, emo_ref, pe_ref, mrow_ref, mcol_ref,
                   w_emb_ref, b_emb_ref, g_emb_ref, be_emb_ref,
                   wqkv_ref, wo_ref, relk_ref, relv_ref, w1_ref, w2_ref,
                   bqkv_ref, bo_ref, g1_ref, be1_ref,
                   bf1_ref, bf2_ref, g2_ref, be2_ref,
                   wp_ref, bp_ref,
                   x_ref, stats_ref, rel_sc,
                   *, n_heads, d_head, dp, window, ksize, xscale, ew_bf16):
    ew = jnp.bfloat16 if ew_bf16 else jnp.float32
    l = pl.program_id(1)
    n_layers = pl.num_programs(1)
    nrel = 2 * window + 1

    mcol = mcol_ref[0]                                            # (T, 1)
    mrow = mrow_ref[0]                                            # (1, T)

    # -------- layer 0: emb Linear + LayerNorm + emo add + pos-enc + entry mask,
    #          plus the cached clipped (j - i) relative-position matrix.
    @pl.when(l == 0)
    def _():
        h0 = jnp.dot(_bf16(x_in_ref[0]), w_emb_ref[...],
                     preferred_element_type=jnp.float32) + b_emb_ref[...]
        h0 = _layer_norm(h0, g_emb_ref[...], be_emb_ref[...])
        h0 = h0 + emo_ref[0]                                      # (1,H) broadcast
        h0 = h0 * xscale + pe_ref[0]                              # pe pre-scaled by alpha
        x_ref[0] = h0 * mcol                                      # encoder entry mask

        T0 = x_ref.shape[1]
        ii = jax.lax.broadcasted_iota(jnp.int32, (T0, T0), 0)
        jj = jax.lax.broadcasted_iota(jnp.int32, (T0, T0), 1)
        rel_sc[...] = jnp.clip(jj - ii, -(window + 1), window + 1).astype(ew)

    x = x_ref[0]                                                  # (T, H) f32, VMEM-resident
    T, H = x.shape
    Hq = n_heads * dp
    inv = 1.0 / math.sqrt(d_head)

    # -------- self-attention with relative-position window + residual + LN ----
    rel = rel_sc[...]
    band = [(rel == float(r - window)).astype(ew) for r in range(nrel)]
    key_mask = mrow > 0.0                                         # (1, T) bool

    xb = _bf16(x)
    qkv = jnp.dot(xb, wqkv_ref[l],
                  preferred_element_type=jnp.float32) + bqkv_ref[0]   # (T, 3*Hq)
    relk_l = relk_ref[l]                                          # (dp, 128) bf16
    relv_l = relv_ref[l]                                          # (16, dp)  f32
    wo_l = wo_ref[l]                                              # (Hq, H)   bf16

    y = jnp.zeros((T, H), jnp.float32) + bo_ref[0]
    for h in range(n_heads):
        q0 = h * dp
        k0 = Hq + h * dp
        v0 = 2 * Hq + h * dp
        qh = _bf16(qkv[:, q0:q0 + dp] * inv)
        kh = _bf16(qkv[:, k0:k0 + dp])
        vh = _bf16(qkv[:, v0:v0 + dp])

        scores = jax.lax.dot_general(qh, kh, (((1,), (1,)), ((), ())),
                                     preferred_element_type=jnp.float32)   # q k^T
        # relative-key bias: scores[i,j] += q[i] . emb_rel_k[w + (j-i)], |j-i|<=w
        rel_logits = jnp.dot(qh, relk_l, preferred_element_type=jnp.float32)
        bias = band[0] * rel_logits[:, 0:1].astype(ew)
        for r in range(1, nrel):
            bias = bias + band[r] * rel_logits[:, r:r + 1].astype(ew)
        scores = scores + bias
        scores = jnp.where(key_mask, scores, -1e4)                # key-side masked_fill

        m = jnp.max(scores, axis=-1, keepdims=True)
        p = jnp.exp(scores - m)
        p = p * pl.reciprocal(jnp.sum(p, axis=-1, keepdims=True), approx=True)

        pb = _bf16(p)
        p_e = pb if ew_bf16 else p
        oh = jnp.dot(pb, vh, preferred_element_type=jnp.float32)  # (T, dp)
        # relative-value path: each band has exactly one active key per row,
        # so the masked lane-reduce extracts p[i, i + r - w] exactly.
        for r in range(nrel):
            wcol = jnp.sum(p_e * band[r], axis=-1, keepdims=True)  # (T, 1)
            oh = oh + wcol.astype(jnp.float32) * relv_l[r:r + 1, :]
        # fold the output projection into the head loop (no attn scratch)
        y = y + jnp.dot(_bf16(oh), wo_l[q0:q0 + dp, :],
                        preferred_element_type=jnp.float32)

    x = _layer_norm(x + y, g1_ref[0], be1_ref[0])

    # -------- FFN: Conv1d(k) -> ReLU -> Conv1d(k) (same pad) + residual + LN
    # TODO(synk): emotional-vits' FFN2 variant specifics are unavailable; the
    #             standard VITS FFN (conv-relu-conv, same padding) is used here.
    pad_l = (ksize - 1) // 2
    xm = _bf16(x * mcol)
    F = bf1_ref.shape[-1]
    acc = jnp.zeros((T, F), jnp.float32)
    for u in range(ksize):                                        # per-tap accumulation
        acc = acc + jnp.dot(_shift_rows(xm, pad_l - u), w1_ref[l * ksize + u],
                            preferred_element_type=jnp.float32)
    hh = jnp.maximum(acc + bf1_ref[0], 0.0)                       # ReLU (dropout = id)
    hm = _bf16(hh * mcol)
    acc2 = jnp.zeros((T, H), jnp.float32)
    for u in range(ksize):
        acc2 = acc2 + jnp.dot(_shift_rows(hm, pad_l - u), w2_ref[l * ksize + u],
                              preferred_element_type=jnp.float32)
    yf = (acc2 + bf2_ref[0]) * mcol
    x = _layer_norm(x + yf, g2_ref[0], be2_ref[0])

    x_ref[0] = x                                                  # carry to next layer

    # -------- exit mask + proj (1x1 Conv1d -> 2*out, lane-padded) * mask ------
    @pl.when(l == n_layers - 1)
    def _():
        xm_out = x * mcol
        x_ref[0] = xm_out                                         # encoder exit mask
        s = jnp.dot(_bf16(xm_out), wp_ref[...],
                    preferred_element_type=jnp.float32) + bp_ref[...]
        stats_ref[0] = s * mcol


# ----------------------------------------------------------------------------
# BlockSpec helpers
# ----------------------------------------------------------------------------
def _const_spec(arr):
    n = arr.ndim
    return pl.BlockSpec(arr.shape, lambda *_, n=n: (0,) * n)


def _batch_spec(arr):
    s = arr.shape
    k = len(s) - 1
    return pl.BlockSpec((1,) + s[1:], lambda b, l, k=k: (b,) + (0,) * k)


def _layer_spec(arr):
    s = arr.shape
    k = len(s) - 1
    return pl.BlockSpec((1,) + s[1:], lambda b, l, k=k: (l,) + (0,) * k)


# ----------------------------------------------------------------------------
# parameter init (deterministic, synthetic).  Per-layer weights stacked on
# axis 0; QKV / WO head-padded to a 128-lane head dim; rel embeddings padded;
# conv weights stored per-tap: (L*ksize, C_in, C_out).
# ----------------------------------------------------------------------------
def init_params(key, in_ch, hidden, filt, n_heads, n_layers, ksize, out_ch):
    d = hidden // n_heads
    dp = _round_up(d, 128)
    Hq = n_heads * dp
    nrel = 2 * WINDOW + 1
    NRELP = 128                      # lane-padded width for emb_rel_k^T
    NRELS = _round_up(nrel, 8)       # sublane-padded rows for emb_rel_v
    Pp = _round_up(2 * out_ch, 128)  # lane-padded stats width
    L = n_layers

    keys = iter(jax.random.split(key, 64))
    nrm = lambda shape, s: jax.random.normal(next(keys), shape, jnp.float32) * s

    wqkv = jnp.zeros((L, hidden, 3 * Hq), jnp.float32)
    bqkv = jnp.zeros((L, 1, 3 * Hq), jnp.float32)
    wo = jnp.zeros((L, Hq, hidden), jnp.float32)
    for c in range(3):
        for h in range(n_heads):
            dst = c * Hq + h * dp
            wqkv = wqkv.at[:, :, dst:dst + d].set(nrm((L, hidden, d), hidden ** -0.5))
            bqkv = bqkv.at[:, :, dst:dst + d].set(nrm((L, 1, d), 0.02))
    for h in range(n_heads):
        wo = wo.at[:, h * dp:h * dp + d, :].set(nrm((L, d, hidden), hidden ** -0.5))

    relk = jnp.zeros((L, dp, NRELP), jnp.float32)
    relk = relk.at[:, :d, :nrel].set(nrm((L, d, nrel), d ** -0.5))     # emb_rel_k^T
    relv = jnp.zeros((L, NRELS, dp), jnp.float32)
    relv = relv.at[:, :nrel, :d].set(nrm((L, nrel, d), d ** -0.5))     # emb_rel_v

    w_proj = jnp.zeros((hidden, Pp), jnp.float32).at[:, :2 * out_ch].set(
        nrm((hidden, 2 * out_ch), (hidden + 2 * out_ch) ** -0.5))
    b_proj = jnp.zeros((1, Pp), jnp.float32).at[:, :2 * out_ch].set(
        nrm((1, 2 * out_ch), 0.02))

    p = {
        "w_emb": _bf16(nrm((in_ch, hidden), in_ch ** -0.5)),
        "b_emb": nrm((1, hidden), 0.02),
        "g_emb": jnp.ones((1, hidden), jnp.float32),
        "be_emb": jnp.zeros((1, hidden), jnp.float32),
        "w_emo": nrm((1024, hidden), (1024 + hidden) ** -0.5),
        "b_emo": nrm((1, hidden), 0.02),
        "alpha": jnp.ones((), jnp.float32),
        "w_proj": _bf16(w_proj),
        "b_proj": b_proj,
        # ---- stacked per-layer weights; MXU operands stored as bf16 ----
        "wqkv": _bf16(wqkv),
        "bqkv": bqkv,
        "wo": _bf16(wo),
        "bo": nrm((L, 1, hidden), 0.02),
        "relk": _bf16(relk),
        "relv": relv,
        "g1": jnp.ones((L, 1, hidden), jnp.float32),
        "be1": jnp.zeros((L, 1, hidden), jnp.float32),
        "w1": _bf16(nrm((L * ksize, hidden, filt), (hidden * ksize) ** -0.5)),
        "bf1": nrm((L, 1, filt), 0.02),
        "w2": _bf16(nrm((L * ksize, filt, hidden), (filt * ksize) ** -0.5)),
        "bf2": nrm((L, 1, hidden), 0.02),
        "g2": jnp.ones((L, 1, hidden), jnp.float32),
        "be2": jnp.zeros((L, 1, hidden), jnp.float32),
    }
    return p


# ----------------------------------------------------------------------------
# full forward (matches TextEncoder.forward return convention)
# ----------------------------------------------------------------------------
def text_encoder_forward(p, sin_table, x, x_lengths, emo, g=None,
                         *, n_heads, ksize, out_ch):
    # TODO(synk): gin_channels=0 so the encoder's `g` conditioning path is unused.
    B, T0, _ = x.shape
    H = p["g_emb"].shape[1]
    L = p["bo"].shape[0]
    dp = p["relk"].shape[1]
    Pp = p["w_proj"].shape[1]
    d = H // n_heads

    # sublane-friendly sequence length
    Tp = max(16, _round_up(T0, 16))
    if Tp != T0:
        x = jnp.pad(x, ((0, 0), (0, Tp - T0), (0, 0)))

    x_mask = (jnp.arange(Tp)[None, :] < x_lengths[:, None]).astype(jnp.float32)
    mrow = x_mask[:, None, :]                                     # (B, 1, Tp)
    mcol = x_mask[:, :, None]                                     # (B, Tp, 1)

    pe_alpha = sin_table[:, :Tp, :] * p["alpha"]                  # (1, Tp, H)
    emo_h = (emo @ p["w_emo"] + p["b_emo"])[:, None, :]           # (B, 1, H)  one XLA matmul

    ew_bf16, vmem_limit = _hw_tuning()
    ew_dtype = jnp.bfloat16 if ew_bf16 else jnp.float32

    kern = functools.partial(encoder_kernel, n_heads=n_heads, d_head=d, dp=dp,
                             window=WINDOW, ksize=ksize, xscale=math.sqrt(H),
                             ew_bf16=ew_bf16)

    args = (x, emo_h, pe_alpha, mrow, mcol,
            p["w_emb"], p["b_emb"], p["g_emb"], p["be_emb"],
            p["wqkv"], p["wo"], p["relk"], p["relv"], p["w1"], p["w2"],
            p["bqkv"], p["bo"], p["g1"], p["be1"],
            p["bf1"], p["bf2"], p["g2"], p["be2"],
            p["w_proj"], p["b_proj"])

    in_specs = [
        _batch_spec(x), _batch_spec(emo_h), _const_spec(pe_alpha),
        _batch_spec(mrow), _batch_spec(mcol),
        _const_spec(p["w_emb"]), _const_spec(p["b_emb"]),
        _const_spec(p["g_emb"]), _const_spec(p["be_emb"]),
        # resident stacked weights: one DMA for the whole grid, indexed by layer
        _const_spec(p["wqkv"]), _const_spec(p["wo"]),
        _const_spec(p["relk"]), _const_spec(p["relv"]),
        _const_spec(p["w1"]), _const_spec(p["w2"]),
        # tiny per-layer vectors stay as streamed per-(b,l) blocks
        _layer_spec(p["bqkv"]), _layer_spec(p["bo"]),
        _layer_spec(p["g1"]), _layer_spec(p["be1"]),
        _layer_spec(p["bf1"]), _layer_spec(p["bf2"]),
        _layer_spec(p["g2"]), _layer_spec(p["be2"]),
        _const_spec(p["w_proj"]), _const_spec(p["b_proj"]),
    ]

    x_enc, stats = pl.pallas_call(
        kern,
        out_shape=(jax.ShapeDtypeStruct((B, Tp, H), jnp.float32),
                   jax.ShapeDtypeStruct((B, Tp, Pp), jnp.float32)),
        grid=(B, L),
        in_specs=in_specs,
        out_specs=(pl.BlockSpec((1, Tp, H), lambda b, l: (b, 0, 0)),
                   pl.BlockSpec((1, Tp, Pp), lambda b, l: (b, 0, 0))),
        scratch_shapes=[pltpu.VMEM((Tp, Tp), ew_dtype)],          # cached clipped (j - i)
        compiler_params=pltpu.CompilerParams(
            dimension_semantics=("parallel", "arbitrary"),
            vmem_limit_bytes=vmem_limit),
    )(*args)

    # back to PyTorch (B, C, T) convention, dropping lane/sequence padding
    x_out = jnp.transpose(x_enc[:, :T0, :], (0, 2, 1))
    stats_t = jnp.transpose(stats[:, :T0, :2 * out_ch], (0, 2, 1))
    m, logs = stats_t[:, :out_ch, :], stats_t[:, out_ch:, :]
    return x_out, m, logs, mrow[:, :, :T0]                        # x_mask = (B, 1, T)


# ----------------------------------------------------------------------------
if __name__ == "__main__":
    B, T = 2, 16
    in_channels, hidden, filt = 8, 32, 64
    n_heads, n_layers, ksize, out_ch = 2, 2, 3, 4

    key = jax.random.PRNGKey(0)
    kp, kx, ke = jax.random.split(key, 3)

    params = init_params(kp, in_channels, hidden, filt, n_heads, n_layers, ksize, out_ch)
    sin_table = gen_sin_table(256 + 128, hidden)

    x = jax.random.normal(kx, (B, T, in_channels), jnp.float32)
    emo = jax.random.normal(ke, (B, 1024), jnp.float32)
    x_lengths = jnp.array([T, 11], jnp.int32)

    x_out, m, logs, x_mask = text_encoder_forward(
        params, sin_table, x, x_lengths, emo, g=None,
        n_heads=n_heads, ksize=ksize, out_ch=out_ch)

    jax.block_until_ready((x_out, m, logs, x_mask))
    assert x_out.shape == (B, hidden, T)
    assert m.shape == (B, out_ch, T) and logs.shape == (B, out_ch, T)
    assert x_mask.shape == (B, 1, T)
    assert bool(jnp.all(jnp.isfinite(x_out))) and bool(jnp.all(jnp.isfinite(m)))
    print("KERNEL_OK")
</pallas_src>

<mosaic_0001>
module attributes {stable_mosaic.version = 11 : i64} {
  func.func @encoder_kernel(%arg0: i32, %arg1: i32, %arg2: memref<1x16x8xf32, #tpu.memory_space<vmem>>, %arg3: memref<1x1x32xf32, #tpu.memory_space<vmem>>, %arg4: memref<1x16x32xf32, #tpu.memory_space<vmem>>, %arg5: memref<1x1x16xf32, #tpu.memory_space<vmem>>, %arg6: memref<1x16x1xf32, #tpu.memory_space<vmem>>, %arg7: memref<8x32xbf16, #tpu.memory_space<vmem>>, %arg8: memref<1x32xf32, #tpu.memory_space<vmem>>, %arg9: memref<1x32xf32, #tpu.memory_space<vmem>>, %arg10: memref<1x32xf32, #tpu.memory_space<vmem>>, %arg11: memref<2x32x768xbf16, #tpu.memory_space<vmem>>, %arg12: memref<2x256x32xbf16, #tpu.memory_space<vmem>>, %arg13: memref<2x128x128xbf16, #tpu.memory_space<vmem>>, %arg14: memref<2x16x128xf32, #tpu.memory_space<vmem>>, %arg15: memref<6x32x64xbf16, #tpu.memory_space<vmem>>, %arg16: memref<6x64x32xbf16, #tpu.memory_space<vmem>>, %arg17: memref<1x1x768xf32, #tpu.memory_space<vmem>>, %arg18: memref<1x1x32xf32, #tpu.memory_space<vmem>>, %arg19: memref<1x1x32xf32, #tpu.memory_space<vmem>>, %arg20: memref<1x1x32xf32, #tpu.memory_space<vmem>>, %arg21: memref<1x1x64xf32, #tpu.memory_space<vmem>>, %arg22: memref<1x1x32xf32, #tpu.memory_space<vmem>>, %arg23: memref<1x1x32xf32, #tpu.memory_space<vmem>>, %arg24: memref<1x1x32xf32, #tpu.memory_space<vmem>>, %arg25: memref<32x128xbf16, #tpu.memory_space<vmem>>, %arg26: memref<1x128xf32, #tpu.memory_space<vmem>>, %arg27: memref<1x16x32xf32, #tpu.memory_space<vmem>>, %arg28: memref<1x16x128xf32, #tpu.memory_space<vmem>>, %arg29: memref<16x16xf32, #tpu.memory_space<vmem>>) attributes {dimension_semantics = [#tpu.dimension_semantics<parallel>, #tpu.dimension_semantics<arbitrary>], iteration_bounds = array<i64: 2, 2>, scalar_prefetch = 0 : i64, scratch_operands = 1 : i64, tpu.core_type = #tpu.core_type<tc>, window_params = [{transform_indices = @transform_0, window_bounds = array<i64: 1, 16, 8>}, {transform_indices = @transform_1, window_bounds = array<i64: 1, 1, 32>}, {pipeline_mode = #tpu.pipeline_mode<synchronous>, transform_indices = @transform_2, window_bounds = array<i64: 1, 16, 32>}, {transform_indices = @transform_3, window_bounds = array<i64: 1, 1, 16>}, {transform_indices = @transform_4, window_bounds = array<i64: 1, 16, 1>}, {pipeline_mode = #tpu.pipeline_mode<synchronous>, transform_indices = @transform_5, window_bounds = array<i64: 8, 32>}, {pipeline_mode = #tpu.pipeline_mode<synchronous>, transform_indices = @transform_6, window_bounds = array<i64: 1, 32>}, {pipeline_mode = #tpu.pipeline_mode<synchronous>, transform_indices = @transform_7, window_bounds = array<i64: 1, 32>}, {pipeline_mode = #tpu.pipeline_mode<synchronous>, transform_indices = @transform_8, window_bounds = array<i64: 1, 32>}, {pipeline_mode = #tpu.pipeline_mode<synchronous>, transform_indices = @transform_9, window_bounds = array<i64: 2, 32, 768>}, {pipeline_mode = #tpu.pipeline_mode<synchronous>, transform_indices = @transform_10, window_bounds = array<i64: 2, 256, 32>}, {pipeline_mode = #tpu.pipeline_mode<synchronous>, transform_indices = @transform_11, window_bounds = array<i64: 2, 128, 128>}, {pipeline_mode = #tpu.pipeline_mode<synchronous>, transform_indices = @transform_12, window_bounds = array<i64: 2, 16, 128>}, {pipeline_mode = #tpu.pipeline_mode<synchronous>, transform_indices = @transform_13, window_bounds = array<i64: 6, 32, 64>}, {pipeline_mode = #tpu.pipeline_mode<synchronous>, transform_indices = @transform_14, window_bounds = array<i64: 6, 64, 32>}, {transform_indices = @transform_15, window_bounds = array<i64: 1, 1, 768>}, {transform_indices = @transform_16, window_bounds = array<i64: 1, 1, 32>}, {transform_indices = @transform_17, window_bounds = array<i64: 1, 1, 32>}, {transform_indices = @transform_18, window_bounds = array<i64: 1, 1, 32>}, {transform_indices = @transform_19, window_bounds = array<i64: 1, 1, 64>}, {transform_indices = @transform_20, window_bounds = array<i64: 1, 1, 32>}, {transform_indices = @transform_21, window_bounds = array<i64: 1, 1, 32>}, {transform_indices = @transform_22, window_bounds = array<i64: 1, 1, 32>}, {pipeline_mode = #tpu.pipeline_mode<synchronous>, transform_indices = @transform_23, window_bounds = array<i64: 32, 128>}, {pipeline_mode = #tpu.pipeline_mode<synchronous>, transform_indices = @transform_24, window_bounds = array<i64: 1, 128>}, {transform_indices = @transform_25, window_bounds = array<i64: 1, 16, 32>}, {transform_indices = @transform_26, window_bounds = array<i64: 1, 16, 128>}]} {
    %c0 = arith.constant 0 : index
    %c0_0 = arith.constant 0 : index
    %c0_1 = arith.constant 0 : index
    %0 = vector.load %arg6[%c0, %c0_0, %c0_1] : memref<1x16x1xf32, #tpu.memory_space<vmem>>, vector<1x16x1xf32>
    %1 = vector.shape_cast %0 : vector<1x16x1xf32> to vector<16x1xf32>
    %c0_2 = arith.constant 0 : index
    %c0_3 = arith.constant 0 : index
    %c0_4 = arith.constant 0 : index
    %2 = vector.load %arg5[%c0_2, %c0_3, %c0_4] : memref<1x1x16xf32, #tpu.memory_space<vmem>>, vector<1x1x16xf32>
    %3 = vector.shape_cast %2 : vector<1x1x16xf32> to vector<1x16xf32>
    %c0_i32 = arith.constant 0 : i32
    %4 = arith.cmpi eq, %arg1, %c0_i32 : i32
    %5 = arith.extui %4 : i1 to i32
    %c0_i32_5 = arith.constant 0 : i32
    %6 = arith.cmpi ne, %5, %c0_i32_5 : i32
    scf.if %6 {
      %c0_137 = arith.constant 0 : index
      %c0_138 = arith.constant 0 : index
      %c0_139 = arith.constant 0 : index
      %481 = vector.load %arg2[%c0_137, %c0_138, %c0_139] : memref<1x16x8xf32, #tpu.memory_space<vmem>>, vector<1x16x8xf32>
      %482 = vector.shape_cast %481 : vector<1x16x8xf32> to vector<16x8xf32>
      %483 = arith.truncf %482 : vector<16x8xf32> to vector<16x8xbf16>
      %c0_140 = arith.constant 0 : index
      %c0_141 = arith.constant 0 : index
      %484 = vector.load %arg7[%c0_140, %c0_141] : memref<8x32xbf16, #tpu.memory_space<vmem>>, vector<8x32xbf16>
      %cst_142 = arith.constant dense<0.000000e+00> : vector<16x32xf32>
      %485 = tpu.matmul %483, %484, %cst_142 {dimension_numbers = #tpu.dot_dimension_numbers<[1], [0], [0], [1], [0, 0, 1, 1], [], []>} : vector<16x8xbf16>, vector<8x32xbf16>, vector<16x32xf32> -> vector<16x32xf32>
      %c0_143 = arith.constant 0 : index
      %c0_144 = arith.constant 0 : index
      %486 = vector.load %arg8[%c0_143, %c0_144] : memref<1x32xf32, #tpu.memory_space<vmem>>, vector<1x32xf32>
      %487 = vector.broadcast %486 : vector<1x32xf32> to vector<16x32xf32>
      %488 = arith.addf %485, %487 : vector<16x32xf32>
      %c0_145 = arith.constant 0 : index
      %c0_146 = arith.constant 0 : index
      %489 = vector.load %arg9[%c0_145, %c0_146] : memref<1x32xf32, #tpu.memory_space<vmem>>, vector<1x32xf32>
      %c0_147 = arith.constant 0 : index
      %c0_148 = arith.constant 0 : index
      %490 = vector.load %arg10[%c0_147, %c0_148] : memref<1x32xf32, #tpu.memory_space<vmem>>, vector<1x32xf32>
      %cst_149 = arith.constant dense<0.000000e+00> : vector<16xf32>
      %491 = vector.multi_reduction <add>, %488, %cst_149 [1] : vector<16x32xf32> to vector<16xf32>
      %492 = vector.shape_cast %491 : vector<16xf32> to vector<16x1xf32>
      %cst_150 = arith.constant 3.200000e+01 : f32
      %493 = vector.broadcast %cst_150 : f32 to vector<16x1xf32>
      %494 = arith.divf %492, %493 : vector<16x1xf32>
      %495 = vector.broadcast %494 : vector<16x1xf32> to vector<16x32xf32>
      %496 = arith.subf %488, %495 : vector<16x32xf32>
      %497 = arith.mulf %496, %496 : vector<16x32xf32>
      %cst_151 = arith.constant dense<0.000000e+00> : vector<16xf32>
      %498 = vector.multi_reduction <add>, %497, %cst_151 [1] : vector<16x32xf32> to vector<16xf32>
      %499 = vector.shape_cast %498 : vector<16xf32> to vector<16x1xf32>
      %cst_152 = arith.constant 3.200000e+01 : f32
      %500 = vector.broadcast %cst_152 : f32 to vector<16x1xf32>
      %501 = arith.divf %499, %500 : vector<16x1xf32>
      %502 = vector.broadcast %494 : vector<16x1xf32> to vector<16x32xf32>
      %503 = arith.subf %488, %502 : vector<16x32xf32>
      %cst_153 = arith.constant 9.99999974E-6 : f32
      %504 = vector.broadcast %cst_153 : f32 to vector<16x1xf32>
      %505 = arith.addf %501, %504 : vector<16x1xf32>
      %506 = math.rsqrt %505 : vector<16x1xf32>
      %507 = vector.broadcast %506 : vector<16x1xf32> to vector<16x32xf32>
      %508 = arith.mulf %503, %507 : vector<16x32xf32>
      %509 = vector.broadcast %489 : vector<1x32xf32> to vector<16x32xf32>
      %510 = arith.mulf %508, %509 : vector<16x32xf32>
      %511 = vector.broadcast %490 : vector<1x32xf32> to vector<16x32xf32>
      %512 = arith.addf %510, %511 : vector<16x32xf32>
      %c0_154 = arith.constant 0 : index
      %c0_155 = arith.constant 0 : index
      %c0_156 = arith.constant 0 : index
      %513 = vector.load %arg3[%c0_154, %c0_155, %c0_156] : memref<1x1x32xf32, #tpu.memory_space<vmem>>, vector<1x1x32xf32>
      %514 = vector.shape_cast %513 : vector<1x1x32xf32> to vector<1x32xf32>
      %515 = vector.broadcast %514 : vector<1x32xf32> to vector<16x32xf32>
      %516 = arith.addf %512, %515 : vector<16x32xf32>
      %cst_157 = arith.constant 5.65685415 : f32
      %517 = vector.broadcast %cst_157 : f32 to vector<16x32xf32>
      %518 = arith.mulf %516, %517 : vector<16x32xf32>
      %c0_158 = arith.constant 0 : index
      %c0_159 = arith.constant 0 : index
      %c0_160 = arith.constant 0 : index
      %519 = vector.load %arg4[%c0_158, %c0_159, %c0_160] : memref<1x16x32xf32, #tpu.memory_space<vmem>>, vector<1x16x32xf32>
      %520 = vector.shape_cast %519 : vector<1x16x32xf32> to vector<16x32xf32>
      %521 = arith.addf %518, %520 : vector<16x32xf32>
      %522 = vector.broadcast %1 : vector<16x1xf32> to vector<16x32xf32>
      %523 = arith.mulf %521, %522 : vector<16x32xf32>
      %c0_161 = arith.constant 0 : index
      %c0_162 = arith.constant 0 : index
      %c0_163 = arith.constant 0 : index
      %524 = vector.load %arg27[%c0_161, %c0_162, %c0_163] : memref<1x16x32xf32, #tpu.memory_space<vmem>>, vector<1x16x32xf32>
      %525 = vector.shape_cast %524 : vector<1x16x32xf32> to vector<16x32xf32>
      %526 = vector.shape_cast %523 : vector<16x32xf32> to vector<1x16x32xf32>
      tpu.vector_store %arg27[%c0_161, %c0_162, %c0_163], %526 {strides = array<i32>} : memref<1x16x32xf32, #tpu.memory_space<vmem>>, vector<1x16x32xf32>,
      %527 = tpu.iota {dimensions = array<i32: 0>} : vector<16x16xi32>
      %528 = tpu.iota {dimensions = array<i32: 1>} : vector<16x16xi32>
      %529 = arith.subi %528, %527 : vector<16x16xi32>
      %c-5_i32 = arith.constant -5 : i32
      %c5_i32 = arith.constant 5 : i32
      %530 = vector.broadcast %c-5_i32 : i32 to vector<16x16xi32>
      %531 = arith.maxsi %530, %529 : vector<16x16xi32>
      %532 = vector.broadcast %c5_i32 : i32 to vector<16x16xi32>
      %533 = arith.minsi %532, %531 : vector<16x16xi32>
      %534 = arith.sitofp %533 : vector<16x16xi32> to vector<16x16xf32>
      %c0_164 = arith.constant 0 : index
      %c0_165 = arith.constant 0 : index
      %535 = vector.load %arg29[%c0_164, %c0_165] : memref<16x16xf32, #tpu.memory_space<vmem>>, vector<16x16xf32>
      tpu.vector_store %arg29[%c0_164, %c0_165], %534 {strides = array<i32>} : memref<16x16xf32, #tpu.memory_space<vmem>>, vector<16x16xf32>,
    } else {
    }
    %c0_6 = arith.constant 0 : index
    %c0_7 = arith.constant 0 : index
    %c0_8 = arith.constant 0 : index
    %7 = vector.load %arg27[%c0_6, %c0_7, %c0_8] : memref<1x16x32xf32, #tpu.memory_space<vmem>>, vector<1x16x32xf32>
    %8 = vector.shape_cast %7 : vector<1x16x32xf32> to vector<16x32xf32>
    %c0_9 = arith.constant 0 : index
    %c0_10 = arith.constant 0 : index
    %9 = vector.load %arg29[%c0_9, %c0_10] : memref<16x16xf32, #tpu.memory_space<vmem>>, vector<16x16xf32>
    %cst = arith.constant -4.000000e+00 : f32
    %10 = vector.broadcast %cst : f32 to vector<16x16xf32>
    %11 = arith.cmpf oeq, %9, %10 : vector<16x16xf32>
    %12 = arith.extui %11 : vector<16x16xi1> to vector<16x16xi32>
    %13 = arith.sitofp %12 : vector<16x16xi32> to vector<16x16xf32>
    %cst_11 = arith.constant -3.000000e+00 : f32
    %14 = vector.broadcast %cst_11 : f32 to vector<16x16xf32>
    %15 = arith.cmpf oeq, %9, %14 : vector<16x16xf32>
    %16 = arith.extui %15 : vector<16x16xi1> to vector<16x16xi32>
    %17 = arith.sitofp %16 : vector<16x16xi32> to vector<16x16xf32>
    %cst_12 = arith.constant -2.000000e+00 : f32
    %18 = vector.broadcast %cst_12 : f32 to vector<16x16xf32>
    %19 = arith.cmpf oeq, %9, %18 : vector<16x16xf32>
    %20 = arith.extui %19 : vector<16x16xi1> to vector<16x16xi32>
    %21 = arith.sitofp %20 : vector<16x16xi32> to vector<16x16xf32>
    %cst_13 = arith.constant -1.000000e+00 : f32
    %22 = vector.broadcast %cst_13 : f32 to vector<16x16xf32>
    %23 = arith.cmpf oeq, %9, %22 : vector<16x16xf32>
    %24 = arith.extui %23 : vector<16x16xi1> to vector<16x16xi32>
    %25 = arith.sitofp %24 : vector<16x16xi32> to vector<16x16xf32>
    %cst_14 = arith.constant 0.000000e+00 : f32
    %26 = vector.broadcast %cst_14 : f32 to vector<16x16xf32>
    %27 = arith.cmpf oeq, %9, %26 : vector<16x16xf32>
    %28 = arith.extui %27 : vector<16x16xi1> to vector<16x16xi32>
    %29 = arith.sitofp %28 : vector<16x16xi32> to vector<16x16xf32>
    %cst_15 = arith.constant 1.000000e+00 : f32
    %30 = vector.broadcast %cst_15 : f32 to vector<16x16xf32>
    %31 = arith.cmpf oeq, %9, %30 : vector<16x16xf32>
    %32 = arith.extui %31 : vector<16x16xi1> to vector<16x16xi32>
    %33 = arith.sitofp %32 : vector<16x16xi32> to vector<16x16xf32>
    %cst_16 = arith.constant 2.000000e+00 : f32
    %34 = vector.broadcast %cst_16 : f32 to vector<16x16xf32>
    %35 = arith.cmpf oeq, %9, %34 : vector<16x16xf32>
    %36 = arith.extui %35 : vector<16x16xi1> to vector<16x16xi32>
    %37 = arith.sitofp %36 : vector<16x16xi32> to vector<16x16xf32>
    %cst_17 = arith.constant 3.000000e+00 : f32
    %38 = vector.broadcast %cst_17 : f32 to vector<16x16xf32>
    %39 = arith.cmpf oeq, %9, %38 : vector<16x16xf32>
    %40 = arith.extui %39 : vector<16x16xi1> to vector<16x16xi32>
    %41 = arith.sitofp %40 : vector<16x16xi32> to vector<16x16xf32>
    %cst_18 = arith.constant 4.000000e+00 : f32
    %42 = vector.broadcast %cst_18 : f32 to vector<16x16xf32>
    %43 = arith.cmpf oeq, %9, %42 : vector<16x16xf32>
    %44 = arith.extui %43 : vector<16x16xi1> to vector<16x16xi32>
    %45 = arith.sitofp %44 : vector<16x16xi32> to vector<16x16xf32>
    %cst_19 = arith.constant 0.000000e+00 : f32
    %46 = vector.broadcast %cst_19 : f32 to vector<1x16xf32>
    %47 = arith.cmpf ogt, %3, %46 : vector<1x16xf32>
    %48 = arith.truncf %8 : vector<16x32xf32> to vector<16x32xbf16>
    %49 = arith.index_cast %arg1 : i32 to index
    %c0_20 = arith.constant 0 : index
    %c0_21 = arith.constant 0 : index
    %50 = vector.load %arg11[%49, %c0_20, %c0_21] : memref<2x32x768xbf16, #tpu.memory_space<vmem>>, vector<1x32x768xbf16>
    %51 = vector.shape_cast %50 : vector<1x32x768xbf16> to vector<32x768xbf16>
    %cst_22 = arith.constant dense<0.000000e+00> : vector<16x768xf32>
    %52 = tpu.matmul %48, %51, %cst_22 {dimension_numbers = #tpu.dot_dimension_numbers<[1], [0], [0], [1], [0, 0, 1, 1], [], []>} : vector<16x32xbf16>, vector<32x768xbf16>, vector<16x768xf32> -> vector<16x768xf32>
    %c0_23 = arith.constant 0 : index
    %c0_24 = arith.constant 0 : index
    %c0_25 = arith.constant 0 : index
    %53 = vector.load %arg17[%c0_23, %c0_24, %c0_25] : memref<1x1x768xf32, #tpu.memory_space<vmem>>, vector<1x1x768xf32>
    %54 = vector.shape_cast %53 : vector<1x1x768xf32> to vector<1x768xf32>
    %55 = vector.broadcast %54 : vector<1x768xf32> to vector<16x768xf32>
    %56 = arith.addf %52, %55 : vector<16x768xf32>
    %57 = arith.index_cast %arg1 : i32 to index
    %c0_26 = arith.constant 0 : index
    %c0_27 = arith.constant 0 : index
    %58 = vector.load %arg13[%57, %c0_26, %c0_27] : memref<2x128x128xbf16, #tpu.memory_space<vmem>>, vector<1x128x128xbf16>
    %59 = vector.shape_cast %58 : vector<1x128x128xbf16> to vector<128x128xbf16>
    %60 = arith.index_cast %arg1 : i32 to index
    %c0_28 = arith.constant 0 : index
    %c0_29 = arith.constant 0 : index
    %61 = vector.load %arg14[%60, %c0_28, %c0_29] : memref<2x16x128xf32, #tpu.memory_space<vmem>>, vector<1x16x128xf32>
    %62 = vector.shape_cast %61 : vector<1x16x128xf32> to vector<16x128xf32>
    %63 = arith.index_cast %arg1 : i32 to index
    %c0_30 = arith.constant 0 : index
    %c0_31 = arith.constant 0 : index
    %64 = vector.load %arg12[%63, %c0_30, %c0_31] : memref<2x256x32xbf16, #tpu.memory_space<vmem>>, vector<1x256x32xbf16>
    %65 = vector.shape_cast %64 : vector<1x256x32xbf16> to vector<256x32xbf16>
    %cst_32 = arith.constant 0.000000e+00 : f32
    %66 = vector.broadcast %cst_32 : f32 to vector<16x32xf32>
    %c0_33 = arith.constant 0 : index
    %c0_34 = arith.constant 0 : index
    %c0_35 = arith.constant 0 : index
    %67 = vector.load %arg18[%c0_33, %c0_34, %c0_35] : memref<1x1x32xf32, #tpu.memory_space<vmem>>, vector<1x1x32xf32>
    %68 = vector.shape_cast %67 : vector<1x1x32xf32> to vector<1x32xf32>
    %69 = vector.broadcast %68 : vector<1x32xf32> to vector<16x32xf32>
    %70 = arith.addf %66, %69 : vector<16x32xf32>
    %71 = vector.extract_strided_slice %56 {offsets = [0, 0], sizes = [16, 128], strides = [1, 1]} : vector<16x768xf32> to vector<16x128xf32>
    %cst_36 = arith.constant 2.500000e-01 : f32
    %72 = vector.broadcast %cst_36 : f32 to vector<16x128xf32>
    %73 = arith.mulf %71, %72 : vector<16x128xf32>
    %74 = arith.truncf %73 : vector<16x128xf32> to vector<16x128xbf16>
    %75 = vector.extract_strided_slice %56 {offsets = [0, 256], sizes = [16, 128], strides = [1, 1]} : vector<16x768xf32> to vector<16x128xf32>
    %76 = arith.truncf %75 : vector<16x128xf32> to vector<16x128xbf16>
    %77 = vector.extract_strided_slice %56 {offsets = [0, 512], sizes = [16, 128], strides = [1, 1]} : vector<16x768xf32> to vector<16x128xf32>
    %78 = arith.truncf %77 : vector<16x128xf32> to vector<16x128xbf16>
    %cst_37 = arith.constant dense<0.000000e+00> : vector<16x16xf32>
    %79 = tpu.matmul %74, %76, %cst_37 {dimension_numbers = #tpu.dot_dimension_numbers<[1], [1], [0], [0], [0, 0, 1, 0], [], []>} : vector<16x128xbf16>, vector<16x128xbf16>, vector<16x16xf32> -> vector<16x16xf32>
    %cst_38 = arith.constant dense<0.000000e+00> : vector<16x128xf32>
    %80 = tpu.matmul %74, %59, %cst_38 {dimension_numbers = #tpu.dot_dimension_numbers<[1], [0], [0], [1], [0, 0, 1, 1], [], []>} : vector<16x128xbf16>, vector<128x128xbf16>, vector<16x128xf32> -> vector<16x128xf32>
    %81 = vector.extract_strided_slice %80 {offsets = [0, 0], sizes = [16, 1], strides = [1, 1]} : vector<16x128xf32> to vector<16x1xf32>
    %82 = vector.broadcast %81 : vector<16x1xf32> to vector<16x16xf32>
    %83 = arith.mulf %13, %82 : vector<16x16xf32>
    %84 = vector.extract_strided_slice %80 {offsets = [0, 1], sizes = [16, 1], strides = [1, 1]} : vector<16x128xf32> to vector<16x1xf32>
    %85 = vector.broadcast %84 : vector<16x1xf32> to vector<16x16xf32>
    %86 = arith.mulf %17, %85 : vector<16x16xf32>
    %87 = arith.addf %83, %86 : vector<16x16xf32>
    %88 = vector.extract_strided_slice %80 {offsets = [0, 2], sizes = [16, 1], strides = [1, 1]} : vector<16x128xf32> to vector<16x1xf32>
    %89 = vector.broadcast %88 : vector<16x1xf32> to vector<16x16xf32>
    %90 = arith.mulf %21, %89 : vector<16x16xf32>
    %91 = arith.addf %87, %90 : vector<16x16xf32>
    %92 = vector.extract_strided_slice %80 {offsets = [0, 3], sizes = [16, 1], strides = [1, 1]} : vector<16x128xf32> to vector<16x1xf32>
    %93 = vector.broadcast %92 : vector<16x1xf32> to vector<16x16xf32>
    %94 = arith.mulf %25, %93 : vector<16x16xf32>
    %95 = arith.addf %91, %94 : vector<16x16xf32>
    %96 = vector.extract_strided_slice %80 {offsets = [0, 4], sizes = [16, 1], strides = [1, 1]} : vector<16x128xf32> to vector<16x1xf32>
    %97 = vector.broadcast %96 : vector<16x1xf32> to vector<16x16xf32>
    %98 = arith.mulf %29, %97 : vector<16x16xf32>
    %99 = arith.addf %95, %98 : vector<16x16xf32>
    %100 = vector.extract_strided_slice %80 {offsets = [0, 5], sizes = [16, 1], strides = [1, 1]} : vector<16x128xf32> to vector<16x1xf32>
    %101 = vector.broadcast %100 : vector<16x1xf32> to vector<16x16xf32>
    %102 = arith.mulf %33, %101 : vector<16x16xf32>
    %103 = arith.addf %99, %102 : vector<16x16xf32>
    %104 = vector.extract_strided_slice %80 {offsets = [0, 6], sizes = [16, 1], strides = [1, 1]} : vector<16x128xf32> to vector<16x1xf32>
    %105 = vector.broadcast %104 : vector<16x1xf32> to vector<16x16xf32>
    %106 = arith.mulf %37, %105 : vector<16x16xf32>
    %107 = arith.addf %103, %106 : vector<16x16xf32>
    %108 = vector.extract_strided_slice %80 {offsets = [0, 7], sizes = [16, 1], strides = [1, 1]} : vector<16x128xf32> to vector<16x1xf32>
    %109 = vector.broadcast %108 : vector<16x1xf32> to vector<16x16xf32>
    %110 = arith.mulf %41, %109 : vector<16x16xf32>
    %111 = arith.addf %107, %110 : vector<16x16xf32>
    %112 = vector.extract_strided_slice %80 {offsets = [0, 8], sizes = [16, 1], strides = [1, 1]} : vector<16x128xf32> to vector<16x1xf32>
    %113 = vector.broadcast %112 : vector<16x1xf32> to vector<16x16xf32>
    %114 = arith.mulf %45, %113 : vector<16x16xf32>
    %115 = arith.addf %111, %114 : vector<16x16xf32>
    %116 = arith.addf %79, %115 : vector<16x16xf32>
    %cst_39 = arith.constant -1.000000e+04 : f32
    %117 = vector.shape_cast %47 : vector<1x16xi1> to vector<1x16xi1>
    %118 = vector.broadcast %117 : vector<1x16xi1> to vector<16x16xi1>
    %119 = vector.broadcast %cst_39 : f32 to vector<16x16xf32>
    %120 = arith.select %118, %116, %119 : vector<16x16xi1>, vector<16x16xf32>
    %cst_40 = arith.constant dense<0xFF800000> : vector<16xf32>
    %121 = vector.multi_reduction <maximumf>, %120, %cst_40 [1] : vector<16x16xf32> to vector<16xf32>
    %122 = vector.shape_cast %121 : vector<16xf32> to vector<16x1xf32>
    %123 = vector.broadcast %122 : vector<16x1xf32> to vector<16x16xf32>
    %124 = arith.subf %120, %123 : vector<16x16xf32>
    %125 = math.exp %124 : vector<16x16xf32>
    %cst_41 = arith.constant dense<0.000000e+00> : vector<16xf32>
    %126 = vector.multi_reduction <add>, %125, %cst_41 [1] : vector<16x16xf32> to vector<16xf32>
    %127 = vector.shape_cast %126 : vector<16xf32> to vector<16x1xf32>
    %128 = tpu.reciprocal %127 {approx = true} : vector<16x1xf32> -> vector<16x1xf32>
    %129 = vector.broadcast %128 : vector<16x1xf32> to vector<16x16xf32>
    %130 = arith.mulf %125, %129 : vector<16x16xf32>
    %131 = arith.truncf %130 : vector<16x16xf32> to vector<16x16xbf16>
    %cst_42 = arith.constant dense<0.000000e+00> : vector<16x128xf32>
    %132 = tpu.matmul %131, %78, %cst_42 {dimension_numbers = #tpu.dot_dimension_numbers<[1], [0], [0], [1], [0, 0, 1, 1], [], []>} : vector<16x16xbf16>, vector<16x128xbf16>, vector<16x128xf32> -> vector<16x128xf32>
    %133 = arith.mulf %130, %13 : vector<16x16xf32>
    %cst_43 = arith.constant dense<0.000000e+00> : vector<16xf32>
    %134 = vector.multi_reduction <add>, %133, %cst_43 [1] : vector<16x16xf32> to vector<16xf32>
    %135 = vector.shape_cast %134 : vector<16xf32> to vector<16x1xf32>
    %136 = vector.extract_strided_slice %62 {offsets = [0, 0], sizes = [1, 128], strides = [1, 1]} : vector<16x128xf32> to vector<1x128xf32>
    %137 = vector.broadcast %135 : vector<16x1xf32> to vector<16x128xf32>
    %138 = vector.broadcast %136 : vector<1x128xf32> to vector<16x128xf32>
    %139 = arith.mulf %137, %138 : vector<16x128xf32>
    %140 = arith.addf %132, %139 : vector<16x128xf32>
    %141 = arith.mulf %130, %17 : vector<16x16xf32>
    %cst_44 = arith.constant dense<0.000000e+00> : vector<16xf32>
    %142 = vector.multi_reduction <add>, %141, %cst_44 [1] : vector<16x16xf32> to vector<16xf32>
    %143 = vector.shape_cast %142 : vector<16xf32> to vector<16x1xf32>
    %144 = vector.extract_strided_slice %62 {offsets = [1, 0], sizes = [1, 128], strides = [1, 1]} : vector<16x128xf32> to vector<1x128xf32>
    %145 = vector.broadcast %143 : vector<16x1xf32> to vector<16x128xf32>
    %146 = vector.broadcast %144 : vector<1x128xf32> to vector<16x128xf32>
    %147 = arith.mulf %145, %146 : vector<16x128xf32>
    %148 = arith.addf %140, %147 : vector<16x128xf32>
    %149 = arith.mulf %130, %21 : vector<16x16xf32>
    %cst_45 = arith.constant dense<0.000000e+00> : vector<16xf32>
    %150 = vector.multi_reduction <add>, %149, %cst_45 [1] : vector<16x16xf32> to vector<16xf32>
    %151 = vector.shape_cast %150 : vector<16xf32> to vector<16x1xf32>
    %152 = vector.extract_strided_slice %62 {offsets = [2, 0], sizes = [1, 128], strides = [1, 1]} : vector<16x128xf32> to vector<1x128xf32>
    %153 = vector.broadcast %151 : vector<16x1xf32> to vector<16x128xf32>
    %154 = vector.broadcast %152 : vector<1x128xf32> to vector<16x128xf32>
    %155 = arith.mulf %153, %154 : vector<16x128xf32>
    %156 = arith.addf %148, %155 : vector<16x128xf32>
    %157 = arith.mulf %130, %25 : vector<16x16xf32>
    %cst_46 = arith.constant dense<0.000000e+00> : vector<16xf32>
    %158 = vector.multi_reduction <add>, %157, %cst_46 [1] : vector<16x16xf32> to vector<16xf32>
    %159 = vector.shape_cast %158 : vector<16xf32> to vector<16x1xf32>
    %160 = vector.extract_strided_slice %62 {offsets = [3, 0], sizes = [1, 128], strides = [1, 1]} : vector<16x128xf32> to vector<1x128xf32>
    %161 = vector.broadcast %159 : vector<16x1xf32> to vector<16x128xf32>
    %162 = vector.broadcast %160 : vector<1x128xf32> to vector<16x128xf32>
    %163 = arith.mulf %161, %162 : vector<16x128xf32>
    %164 = arith.addf %156, %163 : vector<16x128xf32>
    %165 = arith.mulf %130, %29 : vector<16x16xf32>
    %cst_47 = arith.constant dense<0.000000e+00> : vector<16xf32>
    %166 = vector.multi_reduction <add>, %165, %cst_47 [1] : vector<16x16xf32> to vector<16xf32>
    %167 = vector.shape_cast %166 : vector<16xf32> to vector<16x1xf32>
    %168 = vector.extract_strided_slice %62 {offsets = [4, 0], sizes = [1, 128], strides = [1, 1]} : vector<16x128xf32> to vector<1x128xf32>
    %169 = vector.broadcast %167 : vector<16x1xf32> to vector<16x128xf32>
    %170 = vector.broadcast %168 : vector<1x128xf32> to vector<16x128xf32>
    %171 = arith.mulf %169, %170 : vector<16x128xf32>
    %172 = arith.addf %164, %171 : vector<16x128xf32>
    %173 = arith.mulf %130, %33 : vector<16x16xf32>
    %cst_48 = arith.constant dense<0.000000e+00> : vector<16xf32>
    %174 = vector.multi_reduction <add>, %173, %cst_48 [1] : vector<16x16xf32> to vector<16xf32>
    %175 = vector.shape_cast %174 : vector<16xf32> to vector<16x1xf32>
    %176 = vector.extract_strided_slice %62 {offsets = [5, 0], sizes = [1, 128], strides = [1, 1]} : vector<16x128xf32> to vector<1x128xf32>
    %177 = vector.broadcast %175 : vector<16x1xf32> to vector<16x128xf32>
    %178 = vector.broadcast %176 : vector<1x128xf32> to vector<16x128xf32>
    %179 = arith.mulf %177, %178 : vector<16x128xf32>
    %180 = arith.addf %172, %179 : vector<16x128xf32>
    %181 = arith.mulf %130, %37 : vector<16x16xf32>
    %cst_49 = arith.constant dense<0.000000e+00> : vector<16xf32>
    %182 = vector.multi_reduction <add>, %181, %cst_49 [1] : vector<16x16xf32> to vector<16xf32>
    %183 = vector.shape_cast %182 : vector<16xf32> to vector<16x1xf32>
    %184 = vector.extract_strided_slice %62 {offsets = [6, 0], sizes = [1, 128], strides = [1, 1]} : vector<16x128xf32> to vector<1x128xf32>
    %185 = vector.broadcast %183 : vector<16x1xf32> to vector<16x128xf32>
    %186 = vector.broadcast %184 : vector<1x128xf32> to vector<16x128xf32>
    %187 = arith.mulf %185, %186 : vector<16x128xf32>
    %188 = arith.addf %180, %187 : vector<16x128xf32>
    %189 = arith.mulf %130, %41 : vector<16x16xf32>
    %cst_50 = arith.constant dense<0.000000e+00> : vector<16xf32>
    %190 = vector.multi_reduction <add>, %189, %cst_50 [1] : vector<16x16xf32> to vector<16xf32>
    %191 = vector.shape_cast %190 : vector<16xf32> to vector<16x1xf32>
    %192 = vector.extract_strided_slice %62 {offsets = [7, 0], sizes = [1, 128], strides = [1, 1]} : vector<16x128xf32> to vector<1x128xf32>
    %193 = vector.broadcast %191 : vector<16x1xf32> to vector<16x128xf32>
    %194 = vector.broadcast %192 : vector<1x128xf32> to vector<16x128xf32>
    %195 = arith.mulf %193, %194 : vector<16x128xf32>
    %196 = arith.addf %188, %195 : vector<16x128xf32>
    %197 = arith.mulf %130, %45 : vector<16x16xf32>
    %cst_51 = arith.constant dense<0.000000e+00> : vector<16xf32>
    %198 = vector.multi_reduction <add>, %197, %cst_51 [1] : vector<16x16xf32> to vector<16xf32>
    %199 = vector.shape_cast %198 : vector<16xf32> to vector<16x1xf32>
    %200 = vector.extract_strided_slice %62 {offsets = [8, 0], sizes = [1, 128], strides = [1, 1]} : vector<16x128xf32> to vector<1x128xf32>
    %201 = vector.broadcast %199 : vector<16x1xf32> to vector<16x128xf32>
    %202 = vector.broadcast %200 : vector<1x128xf32> to vector<16x128xf32>
    %203 = arith.mulf %201, %202 : vector<16x128xf32>
    %204 = arith.addf %196, %203 : vector<16x128xf32>
    %205 = arith.truncf %204 : vector<16x128xf32> to vector<16x128xbf16>
    %206 = vector.extract_strided_slice %65 {offsets = [0, 0], sizes = [128, 32], strides = [1, 1]} : vector<256x32xbf16> to vector<128x32xbf16>
    %cst_52 = arith.constant dense<0.000000e+00> : vector<16x32xf32>
    %207 = tpu.matmul %205, %206, %cst_52 {dimension_numbers = #tpu.dot_dimension_numbers<[1], [0], [0], [1], [0, 0, 1, 1], [], []>} : vector<16x128xbf16>, vector<128x32xbf16>, vector<16x32xf32> -> vector<16x32xf32>
    %208 = arith.addf %70, %207 : vector<16x32xf32>
    %209 = vector.extract_strided_slice %56 {offsets = [0, 128], sizes = [16, 128], strides = [1, 1]} : vector<16x768xf32> to vector<16x128xf32>
    %cst_53 = arith.constant 2.500000e-01 : f32
    %210 = vector.broadcast %cst_53 : f32 to vector<16x128xf32>
    %211 = arith.mulf %209, %210 : vector<16x128xf32>
    %212 = arith.truncf %211 : vector<16x128xf32> to vector<16x128xbf16>
    %213 = vector.extract_strided_slice %56 {offsets = [0, 384], sizes = [16, 128], strides = [1, 1]} : vector<16x768xf32> to vector<16x128xf32>
    %214 = arith.truncf %213 : vector<16x128xf32> to vector<16x128xbf16>
    %215 = vector.extract_strided_slice %56 {offsets = [0, 640], sizes = [16, 128], strides = [1, 1]} : vector<16x768xf32> to vector<16x128xf32>
    %216 = arith.truncf %215 : vector<16x128xf32> to vector<16x128xbf16>
    %cst_54 = arith.constant dense<0.000000e+00> : vector<16x16xf32>
    %217 = tpu.matmul %212, %214, %cst_54 {dimension_numbers = #tpu.dot_dimension_numbers<[1], [1], [0], [0], [0, 0, 1, 0], [], []>} : vector<16x128xbf16>, vector<16x128xbf16>, vector<16x16xf32> -> vector<16x16xf32>
    %cst_55 = arith.constant dense<0.000000e+00> : vector<16x128xf32>
    %218 = tpu.matmul %212, %59, %cst_55 {dimension_numbers = #tpu.dot_dimension_numbers<[1], [0], [0], [1], [0, 0, 1, 1], [], []>} : vector<16x128xbf16>, vector<128x128xbf16>, vector<16x128xf32> -> vector<16x128xf32>
    %219 = vector.extract_strided_slice %218 {offsets = [0, 0], sizes = [16, 1], strides = [1, 1]} : vector<16x128xf32> to vector<16x1xf32>
    %220 = vector.broadcast %219 : vector<16x1xf32> to vector<16x16xf32>
    %221 = arith.mulf %13, %220 : vector<16x16xf32>
    %222 = vector.extract_strided_slice %218 {offsets = [0, 1], sizes = [16, 1], strides = [1, 1]} : vector<16x128xf32> to vector<16x1xf32>
    %223 = vector.broadcast %222 : vector<16x1xf32> to vector<16x16xf32>
    %224 = arith.mulf %17, %223 : vector<16x16xf32>
    %225 = arith.addf %221, %224 : vector<16x16xf32>
    %226 = vector.extract_strided_slice %218 {offsets = [0, 2], sizes = [16, 1], strides = [1, 1]} : vector<16x128xf32> to vector<16x1xf32>
    %227 = vector.broadcast %226 : vector<16x1xf32> to vector<16x16xf32>
    %228 = arith.mulf %21, %227 : vector<16x16xf32>
    %229 = arith.addf %225, %228 : vector<16x16xf32>
    %230 = vector.extract_strided_slice %218 {offsets = [0, 3], sizes = [16, 1], strides = [1, 1]} : vector<16x128xf32> to vector<16x1xf32>
    %231 = vector.broadcast %230 : vector<16x1xf32> to vector<16x16xf32>
    %232 = arith.mulf %25, %231 : vector<16x16xf32>
    %233 = arith.addf %229, %232 : vector<16x16xf32>
    %234 = vector.extract_strided_slice %218 {offsets = [0, 4], sizes = [16, 1], strides = [1, 1]} : vector<16x128xf32> to vector<16x1xf32>
    %235 = vector.broadcast %234 : vector<16x1xf32> to vector<16x16xf32>
    %236 = arith.mulf %29, %235 : vector<16x16xf32>
    %237 = arith.addf %233, %236 : vector<16x16xf32>
    %238 = vector.extract_strided_slice %218 {offsets = [0, 5], sizes = [16, 1], strides = [1, 1]} : vector<16x128xf32> to vector<16x1xf32>
    %239 = vector.broadcast %238 : vector<16x1xf32> to vector<16x16xf32>
    %240 = arith.mulf %33, %239 : vector<16x16xf32>
    %241 = arith.addf %237, %240 : vector<16x16xf32>
    %242 = vector.extract_strided_slice %218 {offsets = [0, 6], sizes = [16, 1], strides = [1, 1]} : vector<16x128xf32> to vector<16x1xf32>
    %243 = vector.broadcast %242 : vector<16x1xf32> to vector<16x16xf32>
    %244 = arith.mulf %37, %243 : vector<16x16xf32>
    %245 = arith.addf %241, %244 : vector<16x16xf32>
    %246 = vector.extract_strided_slice %218 {offsets = [0, 7], sizes = [16, 1], strides = [1, 1]} : vector<16x128xf32> to vector<16x1xf32>
    %247 = vector.broadcast %246 : vector<16x1xf32> to vector<16x16xf32>
    %248 = arith.mulf %41, %247 : vector<16x16xf32>
    %249 = arith.addf %245, %248 : vector<16x16xf32>
    %250 = vector.extract_strided_slice %218 {offsets = [0, 8], sizes = [16, 1], strides = [1, 1]} : vector<16x128xf32> to vector<16x1xf32>
    %251 = vector.broadcast %250 : vector<16x1xf32> to vector<16x16xf32>
    %252 = arith.mulf %45, %251 : vector<16x16xf32>
    %253 = arith.addf %249, %252 : vector<16x16xf32>
    %254 = arith.addf %217, %253 : vector<16x16xf32>
    %cst_56 = arith.constant -1.000000e+04 : f32
    %255 = vector.shape_cast %47 : vector<1x16xi1> to vector<1x16xi1>
    %256 = vector.broadcast %255 : vector<1x16xi1> to vector<16x16xi1>
    %257 = vector.broadcast %cst_56 : f32 to vector<16x16xf32>
    %258 = arith.select %256, %254, %257 : vector<16x16xi1>, vector<16x16xf32>
    %cst_57 = arith.constant dense<0xFF800000> : vector<16xf32>
    %259 = vector.multi_reduction <maximumf>, %258, %cst_57 [1] : vector<16x16xf32> to vector<16xf32>
    %260 = vector.shape_cast %259 : vector<16xf32> to vector<16x1xf32>
    %261 = vector.broadcast %260 : vector<16x1xf32> to vector<16x16xf32>
    %262 = arith.subf %258, %261 : vector<16x16xf32>
    %263 = math.exp %262 : vector<16x16xf32>
    %cst_58 = arith.constant dense<0.000000e+00> : vector<16xf32>
    %264 = vector.multi_reduction <add>, %263, %cst_58 [1] : vector<16x16xf32> to vector<16xf32>
    %265 = vector.shape_cast %264 : vector<16xf32> to vector<16x1xf32>
    %266 = tpu.reciprocal %265 {approx = true} : vector<16x1xf32> -> vector<16x1xf32>
    %267 = vector.broadcast %266 : vector<16x1xf32> to vector<16x16xf32>
    %268 = arith.mulf %263, %267 : vector<16x16xf32>
    %269 = arith.truncf %268 : vector<16x16xf32> to vector<16x16xbf16>
    %cst_59 = arith.constant dense<0.000000e+00> : vector<16x128xf32>
    %270 = tpu.matmul %269, %216, %cst_59 {dimension_numbers = #tpu.dot_dimension_numbers<[1], [0], [0], [1], [0, 0, 1, 1], [], []>} : vector<16x16xbf16>, vector<16x128xbf16>, vector<16x128xf32> -> vector<16x128xf32>
    %271 = arith.mulf %268, %13 : vector<16x16xf32>
    %cst_60 = arith.constant dense<0.000000e+00> : vector<16xf32>
    %272 = vector.multi_reduction <add>, %271, %cst_60 [1] : vector<16x16xf32> to vector<16xf32>
    %273 = vector.shape_cast %272 : vector<16xf32> to vector<16x1xf32>
    %274 = vector.extract_strided_slice %62 {offsets = [0, 0], sizes = [1, 128], strides = [1, 1]} : vector<16x128xf32> to vector<1x128xf32>
    %275 = vector.broadcast %273 : vector<16x1xf32> to vector<16x128xf32>
    %276 = vector.broadcast %274 : vector<1x128xf32> to vector<16x128xf32>
    %277 = arith.mulf %275, %276 : vector<16x128xf32>
    %278 = arith.addf %270, %277 : vector<16x128xf32>
    %279 = arith.mulf %268, %17 : vector<16x16xf32>
    %cst_61 = arith.constant dense<0.000000e+00> : vector<16xf32>
    %280 = vector.multi_reduction <add>, %279, %cst_61 [1] : vector<16x16xf32> to vector<16xf32>
    %281 = vector.shape_cast %280 : vector<16xf32> to vector<16x1xf32>
    %282 = vector.extract_strided_slice %62 {offsets = [1, 0], sizes = [1, 128], strides = [1, 1]} : vector<16x128xf32> to vector<1x128xf32>
    %283 = vector.broadcast %281 : vector<16x1xf32> to vector<16x128xf32>
    %284 = vector.broadcast %282 : vector<1x128xf32> to vector<16x128xf32>
    %285 = arith.mulf %283, %284 : vector<16x128xf32>
    %286 = arith.addf %278, %285 : vector<16x128xf32>
    %287 = arith.mulf %268, %21 : vector<16x16xf32>
    %cst_62 = arith.constant dense<0.000000e+00> : vector<16xf32>
    %288 = vector.multi_reduction <add>, %287, %cst_62 [1] : vector<16x16xf32> to vector<16xf32>
    %289 = vector.shape_cast %288 : vector<16xf32> to vector<16x1xf32>
    %290 = vector.extract_strided_slice %62 {offsets = [2, 0], sizes = [1, 128], strides = [1, 1]} : vector<16x128xf32> to vector<1x128xf32>
    %291 = vector.broadcast %289 : vector<16x1xf32> to vector<16x128xf32>
    %292 = vector.broadcast %290 : vector<1x128xf32> to vector<16x128xf32>
    %293 = arith.mulf %291, %292 : vector<16x128xf32>
    %294 = arith.addf %286, %293 : vector<16x128xf32>
    %295 = arith.mulf %268, %25 : vector<16x16xf32>
    %cst_63 = arith.constant dense<0.000000e+00> : vector<16xf32>
    %296 = vector.multi_reduction <add>, %295, %cst_63 [1] : vector<16x16xf32> to vector<16xf32>
    %297 = vector.shape_cast %296 : vector<16xf32> to vector<16x1xf32>
    %298 = vector.extract_strided_slice %62 {offsets = [3, 0], sizes = [1, 128], strides = [1, 1]} : vector<16x128xf32> to vector<1x128xf32>
    %299 = vector.broadcast %297 : vector<16x1xf32> to vector<16x128xf32>
    %300 = vector.broadcast %298 : vector<1x128xf32> to vector<16x128xf32>
    %301 = arith.mulf %299, %300 : vector<16x128xf32>
    %302 = arith.addf %294, %301 : vector<16x128xf32>
    %303 = arith.mulf %268, %29 : vector<16x16xf32>
    %cst_64 = arith.constant dense<0.000000e+00> : vector<16xf32>
    %304 = vector.multi_reduction <add>, %303, %cst_64 [1] : vector<16x16xf32> to vector<16xf32>
    %305 = vector.shape_cast %304 : vector<16xf32> to vector<16x1xf32>
    %306 = vector.extract_strided_slice %62 {offsets = [4, 0], sizes = [1, 128], strides = [1, 1]} : vector<16x128xf32> to vector<1x128xf32>
    %307 = vector.broadcast %305 : vector<16x1xf32> to vector<16x128xf32>
    %308 = vector.broadcast %306 : vector<1x128xf32> to vector<16x128xf32>
    %309 = arith.mulf %307, %308 : vector<16x128xf32>
    %310 = arith.addf %302, %309 : vector<16x128xf32>
    %311 = arith.mulf %268, %33 : vector<16x16xf32>
    %cst_65 = arith.constant dense<0.000000e+00> : vector<16xf32>
    %312 = vector.multi_reduction <add>, %311, %cst_65 [1] : vector<16x16xf32> to vector<16xf32>
    %313 = vector.shape_cast %312 : vector<16xf32> to vector<16x1xf32>
    %314 = vector.extract_strided_slice %62 {offsets = [5, 0], sizes = [1, 128], strides = [1, 1]} : vector<16x128xf32> to vector<1x128xf32>
    %315 = vector.broadcast %313 : vector<16x1xf32> to vector<16x128xf32>
    %316 = vector.broadcast %314 : vector<1x128xf32> to vector<16x128xf32>
    %317 = arith.mulf %315, %316 : vector<16x128xf32>
    %318 = arith.addf %310, %317 : vector<16x128xf32>
    %319 = arith.mulf %268, %37 : vector<16x16xf32>
    %cst_66 = arith.constant dense<0.000000e+00> : vector<16xf32>
    %320 = vector.multi_reduction <add>, %319, %cst_66 [1] : vector<16x16xf32> to vector<16xf32>
    %321 = vector.shape_cast %320 : vector<16xf32> to vector<16x1xf32>
    %322 = vector.extract_strided_slice %62 {offsets = [6, 0], sizes = [1, 128], strides = [1, 1]} : vector<16x128xf32> to vector<1x128xf32>
    %323 = vector.broadcast %321 : vector<16x1xf32> to vector<16x128xf32>
    %324 = vector.broadcast %322 : vector<1x128xf32> to vector<16x128xf32>
    %325 = arith.mulf %323, %324 : vector<16x128xf32>
    %326 = arith.addf %318, %325 : vector<16x128xf32>
    %327 = arith.mulf %268, %41 : vector<16x16xf32>
    %cst_67 = arith.constant dense<0.000000e+00> : vector<16xf32>
    %328 = vector.multi_reduction <add>, %327, %cst_67 [1] : vector<16x16xf32> to vector<16xf32>
    %329 = vector.shape_cast %328 : vector<16xf32> to vector<16x1xf32>
    %330 = vector.extract_strided_slice %62 {offsets = [7, 0], sizes = [1, 128], strides = [1, 1]} : vector<16x128xf32> to vector<1x128xf32>
    %331 = vector.broadcast %329 : vector<16x1xf32> to vector<16x128xf32>
    %332 = vector.broadcast %330 : vector<1x128xf32> to vector<16x128xf32>
    %333 = arith.mulf %331, %332 : vector<16x128xf32>
    %334 = arith.addf %326, %333 : vector<16x128xf32>
    %335 = arith.mulf %268, %45 : vector<16x16xf32>
    %cst_68 = arith.constant dense<0.000000e+00> : vector<16xf32>
    %336 = vector.multi_reduction <add>, %335, %cst_68 [1] : vector<16x16xf32> to vector<16xf32>
    %337 = vector.shape_cast %336 : vector<16xf32> to vector<16x1xf32>
    %338 = vector.extract_strided_slice %62 {offsets = [8, 0], sizes = [1, 128], strides = [1, 1]} : vector<16x128xf32> to vector<1x128xf32>
    %339 = vector.broadcast %337 : vector<16x1xf32> to vector<16x128xf32>
    %340 = vector.broadcast %338 : vector<1x128xf32> to vector<16x128xf32>
    %341 = arith.mulf %339, %340 : vector<16x128xf32>
    %342 = arith.addf %334, %341 : vector<16x128xf32>
    %343 = arith.truncf %342 : vector<16x128xf32> to vector<16x128xbf16>
    %344 = vector.extract_strided_slice %65 {offsets = [128, 0], sizes = [128, 32], strides = [1, 1]} : vector<256x32xbf16> to vector<128x32xbf16>
    %cst_69 = arith.constant dense<0.000000e+00> : vector<16x32xf32>
    %345 = tpu.matmul %343, %344, %cst_69 {dimension_numbers = #tpu.dot_dimension_numbers<[1], [0], [0], [1], [0, 0, 1, 1], [], []>} : vector<16x128xbf16>, vector<128x32xbf16>, vector<16x32xf32> -> vector<16x32xf32>
    %346 = arith.addf %208, %345 : vector<16x32xf32>
    %347 = arith.addf %8, %346 : vector<16x32xf32>
    %c0_70 = arith.constant 0 : index
    %c0_71 = arith.constant 0 : index
    %c0_72 = arith.constant 0 : index
    %348 = vector.load %arg19[%c0_70, %c0_71, %c0_72] : memref<1x1x32xf32, #tpu.memory_space<vmem>>, vector<1x1x32xf32>
    %349 = vector.shape_cast %348 : vector<1x1x32xf32> to vector<1x32xf32>
    %c0_73 = arith.constant 0 : index
    %c0_74 = arith.constant 0 : index
    %c0_75 = arith.constant 0 : index
    %350 = vector.load %arg20[%c0_73, %c0_74, %c0_75] : memref<1x1x32xf32, #tpu.memory_space<vmem>>, vector<1x1x32xf32>
    %351 = vector.shape_cast %350 : vector<1x1x32xf32> to vector<1x32xf32>
    %cst_76 = arith.constant dense<0.000000e+00> : vector<16xf32>
    %352 = vector.multi_reduction <add>, %347, %cst_76 [1] : vector<16x32xf32> to vector<16xf32>
    %353 = vector.shape_cast %352 : vector<16xf32> to vector<16x1xf32>
    %cst_77 = arith.constant 3.200000e+01 : f32
    %354 = vector.broadcast %cst_77 : f32 to vector<16x1xf32>
    %355 = arith.divf %353, %354 : vector<16x1xf32>
    %356 = vector.broadcast %355 : vector<16x1xf32> to vector<16x32xf32>
    %357 = arith.subf %347, %356 : vector<16x32xf32>
    %358 = arith.mulf %357, %357 : vector<16x32xf32>
    %cst_78 = arith.constant dense<0.000000e+00> : vector<16xf32>
    %359 = vector.multi_reduction <add>, %358, %cst_78 [1] : vector<16x32xf32> to vector<16xf32>
    %360 = vector.shape_cast %359 : vector<16xf32> to vector<16x1xf32>
    %cst_79 = arith.constant 3.200000e+01 : f32
    %361 = vector.broadcast %cst_79 : f32 to vector<16x1xf32>
    %362 = arith.divf %360, %361 : vector<16x1xf32>
    %363 = vector.broadcast %355 : vector<16x1xf32> to vector<16x32xf32>
    %364 = arith.subf %347, %363 : vector<16x32xf32>
    %cst_80 = arith.constant 9.99999974E-6 : f32
    %365 = vector.broadcast %cst_80 : f32 to vector<16x1xf32>
    %366 = arith.addf %362, %365 : vector<16x1xf32>
    %367 = math.rsqrt %366 : vector<16x1xf32>
    %368 = vector.broadcast %367 : vector<16x1xf32> to vector<16x32xf32>
    %369 = arith.mulf %364, %368 : vector<16x32xf32>
    %370 = vector.broadcast %349 : vector<1x32xf32> to vector<16x32xf32>
    %371 = arith.mulf %369, %370 : vector<16x32xf32>
    %372 = vector.broadcast %351 : vector<1x32xf32> to vector<16x32xf32>
    %373 = arith.addf %371, %372 : vector<16x32xf32>
    %374 = vector.broadcast %1 : vector<16x1xf32> to vector<16x32xf32>
    %375 = arith.mulf %373, %374 : vector<16x32xf32>
    %376 = arith.truncf %375 : vector<16x32xf32> to vector<16x32xbf16>
    %cst_81 = arith.constant 0.000000e+00 : f32
    %377 = vector.broadcast %cst_81 : f32 to vector<16x64xf32>
    %cst_82 = arith.constant 0.000000e+00 : bf16
    %378 = vector.broadcast %cst_82 : bf16 to vector<1x32xbf16>
    %379 = vector.extract_strided_slice %376 {offsets = [0, 0], sizes = [15, 32], strides = [1, 1]} : vector<16x32xbf16> to vector<15x32xbf16>
    %380 = tpu.concatenate %378, %379 in 0 : vector<1x32xbf16>, vector<15x32xbf16> -> vector<16x32xbf16>
    %c3_i32 = arith.constant 3 : i32
    %381 = arith.muli %arg1, %c3_i32 : i32
    %c0_i32_83 = arith.constant 0 : i32
    %382 = arith.addi %381, %c0_i32_83 : i32
    %383 = arith.index_cast %382 : i32 to index
    %c0_84 = arith.constant 0 : index
    %c0_85 = arith.constant 0 : index
    %384 = vector.load %arg15[%383, %c0_84, %c0_85] : memref<6x32x64xbf16, #tpu.memory_space<vmem>>, vector<1x32x64xbf16>
    %385 = vector.shape_cast %384 : vector<1x32x64xbf16> to vector<32x64xbf16>
    %cst_86 = arith.constant dense<0.000000e+00> : vector<16x64xf32>
    %386 = tpu.matmul %380, %385, %cst_86 {dimension_numbers = #tpu.dot_dimension_numbers<[1], [0], [0], [1], [0, 0, 1, 1], [], []>} : vector<16x32xbf16>, vector<32x64xbf16>, vector<16x64xf32> -> vector<16x64xf32>
    %387 = arith.addf %377, %386 : vector<16x64xf32>
    %c3_i32_87 = arith.constant 3 : i32
    %388 = arith.muli %arg1, %c3_i32_87 : i32
    %c1_i32 = arith.constant 1 : i32
    %389 = arith.addi %388, %c1_i32 : i32
    %390 = arith.index_cast %389 : i32 to index
    %c0_88 = arith.constant 0 : index
    %c0_89 = arith.constant 0 : index
    %391 = vector.load %arg15[%390, %c0_88, %c0_89] : memref<6x32x64xbf16, #tpu.memory_space<vmem>>, vector<1x32x64xbf16>
    %392 = vector.shape_cast %391 : vector<1x32x64xbf16> to vector<32x64xbf16>
    %cst_90 = arith.constant dense<0.000000e+00> : vector<16x64xf32>
    %393 = tpu.matmul %376, %392, %cst_90 {dimension_numbers = #tpu.dot_dimension_numbers<[1], [0], [0], [1], [0, 0, 1, 1], [], []>} : vector<16x32xbf16>, vector<32x64xbf16>, vector<16x64xf32> -> vector<16x64xf32>
    %394 = arith.addf %387, %393 : vector<16x64xf32>
    %cst_91 = arith.constant 0.000000e+00 : bf16
    %395 = vector.broadcast %cst_91 : bf16 to vector<1x32xbf16>
    %396 = vector.extract_strided_slice %376 {offsets = [1, 0], sizes = [15, 32], strides = [1, 1]} : vector<16x32xbf16> to vector<15x32xbf16>
    %397 = tpu.concatenate %396, %395 in 0 : vector<15x32xbf16>, vector<1x32xbf16> -> vector<16x32xbf16>
    %c3_i32_92 = arith.constant 3 : i32
    %398 = arith.muli %arg1, %c3_i32_92 : i32
    %c2_i32 = arith.constant 2 : i32
    %399 = arith.addi %398, %c2_i32 : i32
    %400 = arith.index_cast %399 : i32 to index
    %c0_93 = arith.constant 0 : index
    %c0_94 = arith.constant 0 : index
    %401 = vector.load %arg15[%400, %c0_93, %c0_94] : memref<6x32x64xbf16, #tpu.memory_space<vmem>>, vector<1x32x64xbf16>
    %402 = vector.shape_cast %401 : vector<1x32x64xbf16> to vector<32x64xbf16>
    %cst_95 = arith.constant dense<0.000000e+00> : vector<16x64xf32>
    %403 = tpu.matmul %397, %402, %cst_95 {dimension_numbers = #tpu.dot_dimension_numbers<[1], [0], [0], [1], [0, 0, 1, 1], [], []>} : vector<16x32xbf16>, vector<32x64xbf16>, vector<16x64xf32> -> vector<16x64xf32>
    %404 = arith.addf %394, %403 : vector<16x64xf32>
    %c0_96 = arith.constant 0 : index
    %c0_97 = arith.constant 0 : index
    %c0_98 = arith.constant 0 : index
    %405 = vector.load %arg21[%c0_96, %c0_97, %c0_98] : memref<1x1x64xf32, #tpu.memory_space<vmem>>, vector<1x1x64xf32>
    %406 = vector.shape_cast %405 : vector<1x1x64xf32> to vector<1x64xf32>
    %407 = vector.broadcast %406 : vector<1x64xf32> to vector<16x64xf32>
    %408 = arith.addf %404, %407 : vector<16x64xf32>
    %cst_99 = arith.constant 0.000000e+00 : f32
    %409 = vector.broadcast %cst_99 : f32 to vector<16x64xf32>
    %410 = arith.maximumf %408, %409 : vector<16x64xf32>
    %411 = vector.broadcast %1 : vector<16x1xf32> to vector<16x64xf32>
    %412 = arith.mulf %410, %411 : vector<16x64xf32>
    %413 = arith.truncf %412 : vector<16x64xf32> to vector<16x64xbf16>
    %cst_100 = arith.constant 0.000000e+00 : f32
    %414 = vector.broadcast %cst_100 : f32 to vector<16x32xf32>
    %cst_101 = arith.constant 0.000000e+00 : bf16
    %415 = vector.broadcast %cst_101 : bf16 to vector<1x64xbf16>
    %416 = vector.extract_strided_slice %413 {offsets = [0, 0], sizes = [15, 64], strides = [1, 1]} : vector<16x64xbf16> to vector<15x64xbf16>
    %417 = tpu.concatenate %415, %416 in 0 : vector<1x64xbf16>, vector<15x64xbf16> -> vector<16x64xbf16>
    %c3_i32_102 = arith.constant 3 : i32
    %418 = arith.muli %arg1, %c3_i32_102 : i32
    %c0_i32_103 = arith.constant 0 : i32
    %419 = arith.addi %418, %c0_i32_103 : i32
    %420 = arith.index_cast %419 : i32 to index
    %c0_104 = arith.constant 0 : index
    %c0_105 = arith.constant 0 : index
    %421 = vector.load %arg16[%420, %c0_104, %c0_105] : memref<6x64x32xbf16, #tpu.memory_space<vmem>>, vector<1x64x32xbf16>
    %422 = vector.shape_cast %421 : vector<1x64x32xbf16> to vector<64x32xbf16>
    %cst_106 = arith.constant dense<0.000000e+00> : vector<16x32xf32>
    %423 = tpu.matmul %417, %422, %cst_106 {dimension_numbers = #tpu.dot_dimension_numbers<[1], [0], [0], [1], [0, 0, 1, 1], [], []>} : vector<16x64xbf16>, vector<64x32xbf16>, vector<16x32xf32> -> vector<16x32xf32>
    %424 = arith.addf %414, %423 : vector<16x32xf32>
    %c3_i32_107 = arith.constant 3 : i32
    %425 = arith.muli %arg1, %c3_i32_107 : i32
    %c1_i32_108 = arith.constant 1 : i32
    %426 = arith.addi %425, %c1_i32_108 : i32
    %427 = arith.index_cast %426 : i32 to index
    %c0_109 = arith.constant 0 : index
    %c0_110 = arith.constant 0 : index
    %428 = vector.load %arg16[%427, %c0_109, %c0_110] : memref<6x64x32xbf16, #tpu.memory_space<vmem>>, vector<1x64x32xbf16>
    %429 = vector.shape_cast %428 : vector<1x64x32xbf16> to vector<64x32xbf16>
    %cst_111 = arith.constant dense<0.000000e+00> : vector<16x32xf32>
    %430 = tpu.matmul %413, %429, %cst_111 {dimension_numbers = #tpu.dot_dimension_numbers<[1], [0], [0], [1], [0, 0, 1, 1], [], []>} : vector<16x64xbf16>, vector<64x32xbf16>, vector<16x32xf32> -> vector<16x32xf32>
    %431 = arith.addf %424, %430 : vector<16x32xf32>
    %cst_112 = arith.constant 0.000000e+00 : bf16
    %432 = vector.broadcast %cst_112 : bf16 to vector<1x64xbf16>
    %433 = vector.extract_strided_slice %413 {offsets = [1, 0], sizes = [15, 64], strides = [1, 1]} : vector<16x64xbf16> to vector<15x64xbf16>
    %434 = tpu.concatenate %433, %432 in 0 : vector<15x64xbf16>, vector<1x64xbf16> -> vector<16x64xbf16>
    %c3_i32_113 = arith.constant 3 : i32
    %435 = arith.muli %arg1, %c3_i32_113 : i32
    %c2_i32_114 = arith.constant 2 : i32
    %436 = arith.addi %435, %c2_i32_114 : i32
    %437 = arith.index_cast %436 : i32 to index
    %c0_115 = arith.constant 0 : index
    %c0_116 = arith.constant 0 : index
    %438 = vector.load %arg16[%437, %c0_115, %c0_116] : memref<6x64x32xbf16, #tpu.memory_space<vmem>>, vector<1x64x32xbf16>
    %439 = vector.shape_cast %438 : vector<1x64x32xbf16> to vector<64x32xbf16>
    %cst_117 = arith.constant dense<0.000000e+00> : vector<16x32xf32>
    %440 = tpu.matmul %434, %439, %cst_117 {dimension_numbers = #tpu.dot_dimension_numbers<[1], [0], [0], [1], [0, 0, 1, 1], [], []>} : vector<16x64xbf16>, vector<64x32xbf16>, vector<16x32xf32> -> vector<16x32xf32>
    %441 = arith.addf %431, %440 : vector<16x32xf32>
    %c0_118 = arith.constant 0 : index
    %c0_119 = arith.constant 0 : index
    %c0_120 = arith.constant 0 : index
    %442 = vector.load %arg22[%c0_118, %c0_119, %c0_120] : memref<1x1x32xf32, #tpu.memory_space<vmem>>, vector<1x1x32xf32>
    %443 = vector.shape_cast %442 : vector<1x1x32xf32> to vector<1x32xf32>
    %444 = vector.broadcast %443 : vector<1x32xf32> to vector<16x32xf32>
    %445 = arith.addf %441, %444 : vector<16x32xf32>
    %446 = vector.broadcast %1 : vector<16x1xf32> to vector<16x32xf32>
    %447 = arith.mulf %445, %446 : vector<16x32xf32>
    %448 = arith.addf %373, %447 : vector<16x32xf32>
    %c0_121 = arith.constant 0 : index
    %c0_122 = arith.constant 0 : index
    %c0_123 = arith.constant 0 : index
    %449 = vector.load %arg23[%c0_121, %c0_122, %c0_123] : memref<1x1x32xf32, #tpu.memory_space<vmem>>, vector<1x1x32xf32>
    %450 = vector.shape_cast %449 : vector<1x1x32xf32> to vector<1x32xf32>
    %c0_124 = arith.constant 0 : index
    %c0_125 = arith.constant 0 : index
    %c0_126 = arith.constant 0 : index
    %451 = vector.load %arg24[%c0_124, %c0_125, %c0_126] : memref<1x1x32xf32, #tpu.memory_space<vmem>>, vector<1x1x32xf32>
    %452 = vector.shape_cast %451 : vector<1x1x32xf32> to vector<1x32xf32>
    %cst_127 = arith.constant dense<0.000000e+00> : vector<16xf32>
    %453 = vector.multi_reduction <add>, %448, %cst_127 [1] : vector<16x32xf32> to vector<16xf32>
    %454 = vector.shape_cast %453 : vector<16xf32> to vector<16x1xf32>
    %cst_128 = arith.constant 3.200000e+01 : f32
    %455 = vector.broadcast %cst_128 : f32 to vector<16x1xf32>
    %456 = arith.divf %454, %455 : vector<16x1xf32>
    %457 = vector.broadcast %456 : vector<16x1xf32> to vector<16x32xf32>
    %458 = arith.subf %448, %457 : vector<16x32xf32>
    %459 = arith.mulf %458, %458 : vector<16x32xf32>
    %cst_129 = arith.constant dense<0.000000e+00> : vector<16xf32>
    %460 = vector.multi_reduction <add>, %459, %cst_129 [1] : vector<16x32xf32> to vector<16xf32>
    %461 = vector.shape_cast %460 : vector<16xf32> to vector<16x1xf32>
    %cst_130 = arith.constant 3.200000e+01 : f32
    %462 = vector.broadcast %cst_130 : f32 to vector<16x1xf32>
    %463 = arith.divf %461, %462 : vector<16x1xf32>
    %464 = vector.broadcast %456 : vector<16x1xf32> to vector<16x32xf32>
    %465 = arith.subf %448, %464 : vector<16x32xf32>
    %cst_131 = arith.constant 9.99999974E-6 : f32
    %466 = vector.broadcast %cst_131 : f32 to vector<16x1xf32>
    %467 = arith.addf %463, %466 : vector<16x1xf32>
    %468 = math.rsqrt %467 : vector<16x1xf32>
    %469 = vector.broadcast %468 : vector<16x1xf32> to vector<16x32xf32>
    %470 = arith.mulf %465, %469 : vector<16x32xf32>
    %471 = vector.broadcast %450 : vector<1x32xf32> to vector<16x32xf32>
    %472 = arith.mulf %470, %471 : vector<16x32xf32>
    %473 = vector.broadcast %452 : vector<1x32xf32> to vector<16x32xf32>
    %474 = arith.addf %472, %473 : vector<16x32xf32>
    %c0_132 = arith.constant 0 : index
    %c0_133 = arith.constant 0 : index
    %c0_134 = arith.constant 0 : index
    %475 = vector.load %arg27[%c0_132, %c0_133, %c0_134] : memref<1x16x32xf32, #tpu.memory_space<vmem>>, vector<1x16x32xf32>
    %476 = vector.shape_cast %475 : vector<1x16x32xf32> to vector<16x32xf32>
    %477 = vector.shape_cast %474 : vector<16x32xf32> to vector<1x16x32xf32>
    tpu.vector_store %arg27[%c0_132, %c0_133, %c0_134], %477 {strides = array<i32>} : memref<1x16x32xf32, #tpu.memory_space<vmem>>, vector<1x16x32xf32>,
    %c1_i32_135 = arith.constant 1 : i32
    %478 = arith.cmpi eq, %arg1, %c1_i32_135 : i32
    %479 = arith.extui %478 : i1 to i32
    %c0_i32_136 = arith.constant 0 : i32
    %480 = arith.cmpi ne, %479, %c0_i32_136 : i32
    scf.if %480 {
      %481 = vector.broadcast %1 : vector<16x1xf32> to vector<16x32xf32>
      %482 = arith.mulf %474, %481 : vector<16x32xf32>
      %c0_137 = arith.constant 0 : index
      %c0_138 = arith.constant 0 : index
      %c0_139 = arith.constant 0 : index
      %483 = vector.load %arg27[%c0_137, %c0_138, %c0_139] : memref<1x16x32xf32, #tpu.memory_space<vmem>>, vector<1x16x32xf32>
      %484 = vector.shape_cast %483 : vector<1x16x32xf32> to vector<16x32xf32>
      %485 = vector.shape_cast %482 : vector<16x32xf32> to vector<1x16x32xf32>
      tpu.vector_store %arg27[%c0_137, %c0_138, %c0_139], %485 {strides = array<i32>} : memref<1x16x32xf32, #tpu.memory_space<vmem>>, vector<1x16x32xf32>,
      %486 = arith.truncf %482 : vector<16x32xf32> to vector<16x32xbf16>
      %c0_140 = arith.constant 0 : index
      %c0_141 = arith.constant 0 : index
      %487 = vector.load %arg25[%c0_140, %c0_141] : memref<32x128xbf16, #tpu.memory_space<vmem>>, vector<32x128xbf16>
      %cst_142 = arith.constant dense<0.000000e+00> : vector<16x128xf32>
      %488 = tpu.matmul %486, %487, %cst_142 {dimension_numbers = #tpu.dot_dimension_numbers<[1], [0], [0], [1], [0, 0, 1, 1], [], []>} : vector<16x32xbf16>, vector<32x128xbf16>, vector<16x128xf32> -> vector<16x128xf32>
      %c0_143 = arith.constant 0 : index
      %c0_144 = arith.constant 0 : index
      %489 = vector.load %arg26[%c0_143, %c0_144] : memref<1x128xf32, #tpu.memory_space<vmem>>, vector<1x128xf32>
      %490 = vector.broadcast %489 : vector<1x128xf32> to vector<16x128xf32>
      %491 = arith.addf %488, %490 : vector<16x128xf32>
      %492 = vector.broadcast %1 : vector<16x1xf32> to vector<16x128xf32>
      %493 = arith.mulf %491, %492 : vector<16x128xf32>
      %c0_145 = arith.constant 0 : index
      %c0_146 = arith.constant 0 : index
      %c0_147 = arith.constant 0 : index
      %494 = vector.load %arg28[%c0_145, %c0_146, %c0_147] : memref<1x16x128xf32, #tpu.memory_space<vmem>>, vector<1x16x128xf32>
      %495 = vector.shape_cast %494 : vector<1x16x128xf32> to vector<16x128xf32>
      %496 = vector.shape_cast %493 : vector<16x128xf32> to vector<1x16x128xf32>
      tpu.vector_store %arg28[%c0_145, %c0_146, %c0_147], %496 {strides = array<i32>} : memref<1x16x128xf32, #tpu.memory_space<vmem>>, vector<1x16x128xf32>,
    } else {
    }
    return
  }
  func.func @transform_0(%arg0: i32, %arg1: i32) -> (i32, i32, i32) {
    %c0_i32 = arith.constant 0 : i32
    %c0_i32_0 = arith.constant 0 : i32
    %c0_i32_1 = arith.constant 0 : i32
    return %arg0, %c0_i32, %c0_i32_0 : i32, i32, i32
  }
  func.func @transform_1(%arg0: i32, %arg1: i32) -> (i32, i32, i32) {
    %c0_i32 = arith.constant 0 : i32
    %c0_i32_0 = arith.constant 0 : i32
    %c0_i32_1 = arith.constant 0 : i32
    return %arg0, %c0_i32, %c0_i32_0 : i32, i32, i32
  }
  func.func @transform_2(%arg0: i32, %arg1: i32) -> (i32, i32, i32) {
    %c0_i32 = arith.constant 0 : i32
    %c0_i32_0 = arith.constant 0 : i32
    %c0_i32_1 = arith.constant 0 : i32
    %c0_i32_2 = arith.constant 0 : i32
    return %c0_i32, %c0_i32_0, %c0_i32_1 : i32, i32, i32
  }
  func.func @transform_3(%arg0: i32, %arg1: i32) -> (i32, i32, i32) {
    %c0_i32 = arith.constant 0 : i32
    %c0_i32_0 = arith.constant 0 : i32
    %c0_i32_1 = arith.constant 0 : i32
    return %arg0, %c0_i32, %c0_i32_0 : i32, i32, i32
  }
  func.func @transform_4(%arg0: i32, %arg1: i32) -> (i32, i32, i32) {
    %c0_i32 = arith.constant 0 : i32
    %c0_i32_0 = arith.constant 0 : i32
    %c0_i32_1 = arith.constant 0 : i32
    return %arg0, %c0_i32, %c0_i32_0 : i32, i32, i32
  }
  func.func @transform_5(%arg0: i32, %arg1: i32) -> (i32, i32) {
    %c0_i32 = arith.constant 0 : i32
    %c0_i32_0 = arith.constant 0 : i32
    %c0_i32_1 = arith.constant 0 : i32
    return %c0_i32, %c0_i32_0 : i32, i32
  }
  func.func @transform_6(%arg0: i32, %arg1: i32) -> (i32, i32) {
    %c0_i32 = arith.constant 0 : i32
    %c0_i32_0 = arith.constant 0 : i32
    %c0_i32_1 = arith.constant 0 : i32
    return %c0_i32, %c0_i32_0 : i32, i32
  }
  func.func @transform_7(%arg0: i32, %arg1: i32) -> (i32, i32) {
    %c0_i32 = arith.constant 0 : i32
    %c0_i32_0 = arith.constant 0 : i32
    %c0_i32_1 = arith.constant 0 : i32
    return %c0_i32, %c0_i32_0 : i32, i32
  }
  func.func @transform_8(%arg0: i32, %arg1: i32) -> (i32, i32) {
    %c0_i32 = arith.constant 0 : i32
    %c0_i32_0 = arith.constant 0 : i32
    %c0_i32_1 = arith.constant 0 : i32
    return %c0_i32, %c0_i32_0 : i32, i32
  }
  func.func @transform_9(%arg0: i32, %arg1: i32) -> (i32, i32, i32) {
    %c0_i32 = arith.constant 0 : i32
    %c0_i32_0 = arith.constant 0 : i32
    %c0_i32_1 = arith.constant 0 : i32
    %c0_i32_2 = arith.constant 0 : i32
    return %c0_i32, %c0_i32_0, %c0_i32_1 : i32, i32, i32
  }
  func.func @transform_10(%arg0: i32, %arg1: i32) -> (i32, i32, i32) {
    %c0_i32 = arith.constant 0 : i32
    %c0_i32_0 = arith.constant 0 : i32
    %c0_i32_1 = arith.constant 0 : i32
    %c0_i32_2 = arith.constant 0 : i32
    return %c0_i32, %c0_i32_0, %c0_i32_1 : i32, i32, i32
  }
  func.func @transform_11(%arg0: i32, %arg1: i32) -> (i32, i32, i32) {
    %c0_i32 = arith.constant 0 : i32
    %c0_i32_0 = arith.constant 0 : i32
    %c0_i32_1 = arith.constant 0 : i32
    %c0_i32_2 = arith.constant 0 : i32
    return %c0_i32, %c0_i32_0, %c0_i32_1 : i32, i32, i32
  }
  func.func @transform_12(%arg0: i32, %arg1: i32) -> (i32, i32, i32) {
    %c0_i32 = arith.constant 0 : i32
    %c0_i32_0 = arith.constant 0 : i32
    %c0_i32_1 = arith.constant 0 : i32
    %c0_i32_2 = arith.constant 0 : i32
    return %c0_i32, %c0_i32_0, %c0_i32_1 : i32, i32, i32
  }
  func.func @transform_13(%arg0: i32, %arg1: i32) -> (i32, i32, i32) {
    %c0_i32 = arith.constant 0 : i32
    %c0_i32_0 = arith.constant 0 : i32
    %c0_i32_1 = arith.constant 0 : i32
    %c0_i32_2 = arith.constant 0 : i32
    return %c0_i32, %c0_i32_0, %c0_i32_1 : i32, i32, i32
  }
  func.func @transform_14(%arg0: i32, %arg1: i32) -> (i32, i32, i32) {
    %c0_i32 = arith.constant 0 : i32
    %c0_i32_0 = arith.constant 0 : i32
    %c0_i32_1 = arith.constant 0 : i32
    %c0_i32_2 = arith.constant 0 : i32
    return %c0_i32, %c0_i32_0, %c0_i32_1 : i32, i32, i32
  }
  func.func @transform_15(%arg0: i32, %arg1: i32) -> (i32, i32, i32) {
    %c0_i32 = arith.constant 0 : i32
    %c0_i32_0 = arith.constant 0 : i32
    %c0_i32_1 = arith.constant 0 : i32
    return %arg1, %c0_i32, %c0_i32_0 : i32, i32, i32
  }
  func.func @transform_16(%arg0: i32, %arg1: i32) -> (i32, i32, i32) {
    %c0_i32 = arith.constant 0 : i32
    %c0_i32_0 = arith.constant 0 : i32
    %c0_i32_1 = arith.constant 0 : i32
    return %arg1, %c0_i32, %c0_i32_0 : i32, i32, i32
  }
  func.func @transform_17(%arg0: i32, %arg1: i32) -> (i32, i32, i32) {
    %c0_i32 = arith.constant 0 : i32
    %c0_i32_0 = arith.constant 0 : i32
    %c0_i32_1 = arith.constant 0 : i32
    return %arg1, %c0_i32, %c0_i32_0 : i32, i32, i32
  }
  func.func @transform_18(%arg0: i32, %arg1: i32) -> (i32, i32, i32) {
    %c0_i32 = arith.constant 0 : i32
    %c0_i32_0 = arith.constant 0 : i32
    %c0_i32_1 = arith.constant 0 : i32
    return %arg1, %c0_i32, %c0_i32_0 : i32, i32, i32
  }
  func.func @transform_19(%arg0: i32, %arg1: i32) -> (i32, i32, i32) {
    %c0_i32 = arith.constant 0 : i32
    %c0_i32_0 = arith.constant 0 : i32
    %c0_i32_1 = arith.constant 0 : i32
    return %arg1, %c0_i32, %c0_i32_0 : i32, i32, i32
  }
  func.func @transform_20(%arg0: i32, %arg1: i32) -> (i32, i32, i32) {
    %c0_i32 = arith.constant 0 : i32
    %c0_i32_0 = arith.constant 0 : i32
    %c0_i32_1 = arith.constant 0 : i32
    return %arg1, %c0_i32, %c0_i32_0 : i32, i32, i32
  }
  func.func @transform_21(%arg0: i32, %arg1: i32) -> (i32, i32, i32) {
    %c0_i32 = arith.constant 0 : i32
    %c0_i32_0 = arith.constant 0 : i32
    %c0_i32_1 = arith.constant 0 : i32
    return %arg1, %c0_i32, %c0_i32_0 : i32, i32, i32
  }
  func.func @transform_22(%arg0: i32, %arg1: i32) -> (i32, i32, i32) {
    %c0_i32 = arith.constant 0 : i32
    %c0_i32_0 = arith.constant 0 : i32
    %c0_i32_1 = arith.constant 0 : i32
    return %arg1, %c0_i32, %c0_i32_0 : i32, i32, i32
  }
  func.func @transform_23(%arg0: i32, %arg1: i32) -> (i32, i32) {
    %c0_i32 = arith.constant 0 : i32
    %c0_i32_0 = arith.constant 0 : i32
    %c0_i32_1 = arith.constant 0 : i32
    return %c0_i32, %c0_i32_0 : i32, i32
  }
  func.func @transform_24(%arg0: i32, %arg1: i32) -> (i32, i32) {
    %c0_i32 = arith.constant 0 : i32
    %c0_i32_0 = arith.constant 0 : i32
    %c0_i32_1 = arith.constant 0 : i32
    return %c0_i32, %c0_i32_0 : i32, i32
  }
  func.func @transform_25(%arg0: i32, %arg1: i32) -> (i32, i32, i32) {
    %c0_i32 = arith.constant 0 : i32
    %c0_i32_0 = arith.constant 0 : i32
    %c0_i32_1 = arith.constant 0 : i32
    return %arg0, %c0_i32, %c0_i32_0 : i32, i32, i32
  }
  func.func @transform_26(%arg0: i32, %arg1: i32) -> (i32, i32, i32) {
    %c0_i32 = arith.constant 0 : i32
    %c0_i32_0 = arith.constant 0 : i32
    %c0_i32_1 = arith.constant 0 : i32
    return %arg0, %c0_i32, %c0_i32_0 : i32, i32, i32
  }
}

</mosaic_0001>

<llo_original>
// kernel: tpu_custom_call.1
$region0: #{tpu_custom_call.1}
  #allocation0 [shape = 'u32[]', space=smem, size = 0x4, offset = 0x4, fixed_abs, tag = 'smem constant byte address 0x4 - core index']
  #allocation1 [shape = 'u32[144,128]{1,0:T(1,128)}', space=vmem, size = 0x12000, scoped, tag = 'internal scratch']
  #allocation2 [shape = 'f32[16,16]{1,0:T(8,128)}', space=vmem, size = 0x2000, scoped, tag = 'scratch operand']
  %s0 = inlined_call_operand.vmem [shape: f32[2,16,8], index: 0, kind: input, shape index: {}]
  %s1 = inlined_call_operand.vmem [shape: f32[2,1,32], index: 1, kind: input, shape index: {}]
  %s2 = inlined_call_operand.vmem [shape: f32[1,16,32], index: 2, kind: input, shape index: {}]
  %s3 = inlined_call_operand.vmem [shape: f32[2,1,16], index: 3, kind: input, shape index: {}]
  %s4 = inlined_call_operand.vmem [shape: f32[2,16,1], index: 4, kind: input, shape index: {}]
  %s5 = inlined_call_operand.vmem [shape: bf16[8,32], index: 5, kind: input, shape index: {}]
  %s6 = inlined_call_operand.vmem [shape: f32[1,32], index: 6, kind: input, shape index: {}]
  %s7 = inlined_call_operand.vmem [shape: f32[1,32], index: 7, kind: input, shape index: {}]
  %s8 = inlined_call_operand.vmem [shape: f32[1,32], index: 8, kind: input, shape index: {}]
  %s9 = inlined_call_operand.vmem [shape: bf16[2,32,768], index: 9, kind: input, shape index: {}]
  %s10 = inlined_call_operand.vmem [shape: bf16[2,256,32], index: 10, kind: input, shape index: {}]
  %s11 = inlined_call_operand.vmem [shape: bf16[2,128,128], index: 11, kind: input, shape index: {}]
  %s12 = inlined_call_operand.vmem [shape: f32[2,16,128], index: 12, kind: input, shape index: {}]
  %s13 = inlined_call_operand.vmem [shape: bf16[6,32,64], index: 13, kind: input, shape index: {}]
  %s14 = inlined_call_operand.vmem [shape: bf16[6,64,32], index: 14, kind: input, shape index: {}]
  %s15 = inlined_call_operand.vmem [shape: f32[2,1,768], index: 15, kind: input, shape index: {}]
  %s16 = inlined_call_operand.vmem [shape: f32[2,1,32], index: 16, kind: input, shape index: {}]
  %s17 = inlined_call_operand.vmem [shape: f32[2,1,32], index: 17, kind: input, shape index: {}]
  %s18 = inlined_call_operand.vmem [shape: f32[2,1,32], index: 18, kind: input, shape index: {}]
  %s19 = inlined_call_operand.vmem [shape: f32[2,1,64], index: 19, kind: input, shape index: {}]
  %s20 = inlined_call_operand.vmem [shape: f32[2,1,32], index: 20, kind: input, shape index: {}]
  %s21 = inlined_call_operand.vmem [shape: f32[2,1,32], index: 21, kind: input, shape index: {}]
  %s22 = inlined_call_operand.vmem [shape: f32[2,1,32], index: 22, kind: input, shape index: {}]
  %s23 = inlined_call_operand.vmem [shape: bf16[32,128], index: 23, kind: input, shape index: {}]
  %s24 = inlined_call_operand.vmem [shape: f32[1,128], index: 24, kind: input, shape index: {}]
  %s25 = inlined_call_operand.hbm [shape: f32[2,16,32], index: 25, kind: output, shape index: {0}]
  %s26 = inlined_call_operand.hbm [shape: f32[2,16,128], index: 26, kind: output, shape index: {1}]
  %27 = xla_tuple %s25, %s26
  %s28 = sld [smem:[#allocation0]]
  $region149: #{tpu_custom_call.1} parent=0
    _
  %s30 = ssub.s32 1, %s28
  %s31 = scalar_select 0, %s30, %s28
  $region1: #{tpu_custom_call.1} parent=0
    #allocation3 [shape = 'u8[16384]{0}', space=vmem, size = 0x4000, scoped, tag = 'output window, operand 0']
    #allocation4 [shape = 's32[2]{0}', space=sflag, size = 0x8, scoped, tag = 'scoped memory for tpu_custom_call.1']
    #allocation5 [shape = 'u8[16384]{0}', space=vmem, size = 0x4000, scoped, tag = 'output window, operand 1']
    #allocation6 [shape = 's32[2]{0}', space=sflag, size = 0x8, scoped, tag = 'scoped memory for tpu_custom_call.1']
    %32 = vsyncpa [#allocation4], 0
    %s33 = scalar_lea.sflag [#allocation4], 1
    %34 = vsyncpa %s33, 0
    %35 = vsyncpa [#allocation6], 0
    %s36 = scalar_lea.sflag [#allocation6], 1
    %37 = vsyncpa %s36, 0
    loop: start=0, step=1, limit=6
    $region2: #{tpu_custom_call.1} parent=1 // loop_pre_header
      _
    $region3: #{tpu_custom_call.1} parent=1 // loop_header
      %s39 = sphi 0, %s43
      %p40 = scmp.ge.s32.totalorder %s39, 6
      %s46 = sphi 0, %s58
      %s47 = sphi 0, %s54
      %s48 = sphi 0, %s46
      %s49 = sphi 0, %s47
      %s50 = sphi 0, %s48
      %s51 = sphi 0, %s49
      %s61 = sphi 0, %s63
      %s64 = sphi 0, %s61
      %s65 = sphi 0, %s64
      %s81 = sphi 0, %s65
      %s87 = sphi 0, %s89
      %s90 = sphi 0, %s87
      %s91 = sphi 0, %s90
      %s107 = sphi 0, %s91
      %s111 = sphi 0, %s111
      %s113 = sphi 0, %s111
      %s114 = sphi 0, %s113
      %s128 = sphi 0, %s114
      %s134 = sphi 0, %s136
      %s137 = sphi 0, %s134
      %s138 = sphi 0, %s137
      %s154 = sphi 0, %s138
      %s160 = sphi 0, %s162
      %s163 = sphi 0, %s160
      %s164 = sphi 0, %s163
      %s180 = sphi 0, %s164
      %s184 = sphi 0, %s184
      %s186 = sphi 0, %s184
      %s187 = sphi 0, %s186
      %s201 = sphi 0, %s187
      %s205 = sphi 0, %s205
      %s207 = sphi 0, %s205
      %s208 = sphi 0, %s207
      %s222 = sphi 0, %s208
      %s226 = sphi 0, %s226
      %s228 = sphi 0, %s226
      %s229 = sphi 0, %s228
      %s243 = sphi 0, %s229
      %s247 = sphi 0, %s247
      %s249 = sphi 0, %s247
      %s250 = sphi 0, %s249
      %s264 = sphi 0, %s250
      %s268 = sphi 0, %s268
      %s270 = sphi 0, %s268
      %s271 = sphi 0, %s270
      %s285 = sphi 0, %s271
      %s289 = sphi 0, %s289
      %s291 = sphi 0, %s289
      %s292 = sphi 0, %s291
      %s306 = sphi 0, %s292
      %s310 = sphi 0, %s310
      %s312 = sphi 0, %s310
      %s313 = sphi 0, %s312
      %s327 = sphi 0, %s313
      %s331 = sphi 0, %s331
      %s333 = sphi 0, %s331
      %s334 = sphi 0, %s333
      %s348 = sphi 0, %s334
      %s352 = sphi 0, %s352
      %s354 = sphi 0, %s352
      %s355 = sphi 0, %s354
      %s369 = sphi 0, %s355
      %s373 = sphi 0, %s373
      %s375 = sphi 0, %s373
      %s376 = sphi 0, %s375
      %s390 = sphi 0, %s376
      %s396 = sphi 0, %s398
      %s399 = sphi 0, %s396
      %s400 = sphi 0, %s399
      %s416 = sphi 0, %s400
      %s422 = sphi 0, %s424
      %s425 = sphi 0, %s422
      %s426 = sphi 0, %s425
      %s442 = sphi 0, %s426
      %s448 = sphi 0, %s450
      %s451 = sphi 0, %s448
      %s452 = sphi 0, %s451
      %s468 = sphi 0, %s452
      %s474 = sphi 0, %s476
      %s477 = sphi 0, %s474
      %s478 = sphi 0, %s477
      %s494 = sphi 0, %s478
      %s500 = sphi 0, %s502
      %s503 = sphi 0, %s500
      %s504 = sphi 0, %s503
      %s520 = sphi 0, %s504
      %s526 = sphi 0, %s528
      %s529 = sphi 0, %s526
      %s530 = sphi 0, %s529
      %s546 = sphi 0, %s530
      %s552 = sphi 0, %s554
      %s555 = sphi 0, %s552
      %s556 = sphi 0, %s555
      %s572 = sphi 0, %s556
      %s578 = sphi 0, %s580
      %s581 = sphi 0, %s578
      %s582 = sphi 0, %s581
      %s598 = sphi 0, %s582
      %s602 = sphi 0, %s602
      %s604 = sphi 0, %s602
      %s605 = sphi 0, %s604
      %s619 = sphi 0, %s605
      %s623 = sphi 0, %s623
      %s625 = sphi 0, %s623
      %s626 = sphi 0, %s625
      %s640 = sphi 0, %s626
      %s646 = sphi 0, %s648
      %s649 = sphi 0, %s646
      %s650 = sphi 0, %s649
      %s666 = sphi 0, %s650
      %s672 = sphi 0, %s674
      %s675 = sphi 0, %s672
      %s676 = sphi 0, %s675
      %s692 = sphi 0, %s676
    $region4: #{tpu_custom_call.1} parent=1 // loop_header_branch
      %42 = sbr.rel (%p40) target = $region8
    $region5: #{tpu_custom_call.1} parent=1 // loop_body
      %s44 = ssub.s32 %s39, 1
      %s45 = ssub.s32 %s39, 2
      %s52 = sadd.s32 1, %s47
      %p53 = scmp.ge.s32.totalorder %s52, 2
      %s54 = scalar_select %p53, 0, %s52
      %s55 = sadd.s32 1, %s46
      %s56 = scalar_select %p53, %s55, %s46
      %p57 = scmp.ge.s32.totalorder %s56, 2
      %s58 = scalar_select %p57, 0, %s56
      %s59 = ssub.s32 %s46, %s58
      %p60 = scmp.eq.s32.totalorder %s59, 0
      %s62 = sadd.s32 %s61, 1
      %s63 = scalar_select %p60, %s61, %s62
      %p66 = pneg %p60
      %p67 = scmp.eq.s32.totalorder %s39, 3
      %p68 = por %p66, %p67
      %p69 = scmp.ne.s32.totalorder %s61, %s64
      %p70 = scmp.eq.s32.totalorder %s39, 0
      %p71 = por %p69, %p70
      %p72 = scmp.ne.s32.totalorder %s61, %s64
      %p73 = scmp.eq.s32.totalorder %s44, 3
      %p74 = por %p72, %p73
      %p75 = scmp.ne.s32.totalorder %s64, %s65
      %p76 = scmp.eq.s32.totalorder %s44, 0
      %p77 = por %p75, %p76
      %p78 = scmp.ne.s32.totalorder %s64, %s65
      %p79 = scmp.eq.s32.totalorder %s45, 3
      %p80 = por %p78, %p79
      %p82 = scmp.ne.s32.totalorder %s65, %s81
      %p83 = scmp.eq.s32.totalorder %s45, 0
      %p84 = por %p82, %p83
      %s85 = ssub.s32 %s46, %s58
      %p86 = scmp.eq.s32.totalorder %s85, 0
      %s88 = sadd.s32 %s87, 1
      %s89 = scalar_select %p86, %s87, %s88
      %p92 = pneg %p86
      %p93 = scmp.eq.s32.totalorder %s39, 3
      %p94 = por %p92, %p93
      %p95 = scmp.ne.s32.totalorder %s87, %s90
      %p96 = scmp.eq.s32.totalorder %s39, 0
      %p97 = por %p95, %p96
      %p98 = scmp.ne.s32.totalorder %s87, %s90
      %p99 = scmp.eq.s32.totalorder %s44, 3
      %p100 = por %p98, %p99
      %p101 = scmp.ne.s32.totalorder %s90, %s91
      %p102 = scmp.eq.s32.totalorder %s44, 0
      %p103 = por %p101, %p102
      %p104 = scmp.ne.s32.totalorder %s90, %s91
      %p105 = scmp.eq.s32.totalorder %s45, 3
      %p106 = por %p104, %p105
      %p108 = scmp.ne.s32.totalorder %s91, %s107
      %p109 = scmp.eq.s32.totalorder %s45, 0
      %p110 = por %p108, %p109
      %s112 = sadd.s32 %s111, 1
      %p115 = scmp.eq.s32.totalorder %s39, 3
      %p116 = scmp.ne.s32.totalorder %s111, %s113
      %p117 = scmp.eq.s32.totalorder %s39, 0
      %p118 = por %p116, %p117
      %p119 = scmp.ne.s32.totalorder %s111, %s113
      %p120 = scmp.eq.s32.totalorder %s44, 3
      %p121 = por %p119, %p120
      %p122 = scmp.ne.s32.totalorder %s113, %s114
      %p123 = scmp.eq.s32.totalorder %s44, 0
      %p124 = por %p122, %p123
      %p125 = scmp.ne.s32.totalorder %s113, %s114
      %p126 = scmp.eq.s32.totalorder %s45, 3
      %p127 = por %p125, %p126
      %p129 = scmp.ne.s32.totalorder %s114, %s128
      %p130 = scmp.eq.s32.totalorder %s45, 0
      %p131 = por %p129, %p130
      %s132 = ssub.s32 %s46, %s58
      %p133 = scmp.eq.s32.totalorder %s132, 0
      %s135 = sadd.s32 %s134, 1
      %s136 = scalar_select %p133, %s134, %s135
      %p139 = pneg %p133
      %p140 = scmp.eq.s32.totalorder %s39, 3
      %p141 = por %p139, %p140
      %p142 = scmp.ne.s32.totalorder %s134, %s137
      %p143 = scmp.eq.s32.totalorder %s39, 0
      %p144 = por %p142, %p143
      %p145 = scmp.ne.s32.totalorder %s134, %s137
      %p146 = scmp.eq.s32.totalorder %s44, 3
      %p147 = por %p145, %p146
      %p148 = scmp.ne.s32.totalorder %s137, %s138
      %p149 = scmp.eq.s32.totalorder %s44, 0
      %p150 = por %p148, %p149
      %p151 = scmp.ne.s32.totalorder %s137, %s138
      %p152 = scmp.eq.s32.totalorder %s45, 3
      %p153 = por %p151, %p152
      %p155 = scmp.ne.s32.totalorder %s138, %s154
      %p156 = scmp.eq.s32.totalorder %s45, 0
      %p157 = por %p155, %p156
      %s158 = ssub.s32 %s46, %s58
      %p159 = scmp.eq.s32.totalorder %s158, 0
      %s161 = sadd.s32 %s160, 1
      %s162 = scalar_select %p159, %s160, %s161
      %p165 = pneg %p159
      %p166 = scmp.eq.s32.totalorder %s39, 3
      %p167 = por %p165, %p166
      %p168 = scmp.ne.s32.totalorder %s160, %s163
      %p169 = scmp.eq.s32.totalorder %s39, 0
      %p170 = por %p168, %p169
      %p171 = scmp.ne.s32.totalorder %s160, %s163
      %p172 = scmp.eq.s32.totalorder %s44, 3
      %p173 = por %p171, %p172
      %p174 = scmp.ne.s32.totalorder %s163, %s164
      %p175 = scmp.eq.s32.totalorder %s44, 0
      %p176 = por %p174, %p175
      %p177 = scmp.ne.s32.totalorder %s163, %s164
      %p178 = scmp.eq.s32.totalorder %s45, 3
      %p179 = por %p177, %p178
      %p181 = scmp.ne.s32.totalorder %s164, %s180
      %p182 = scmp.eq.s32.totalorder %s45, 0
      %p183 = por %p181, %p182
      %s185 = sadd.s32 %s184, 1
      %p188 = scmp.eq.s32.totalorder %s39, 3
      %p189 = scmp.ne.s32.totalorder %s184, %s186
      %p190 = scmp.eq.s32.totalorder %s39, 0
      %p191 = por %p189, %p190
      %p192 = scmp.ne.s32.totalorder %s184, %s186
      %p193 = scmp.eq.s32.totalorder %s44, 3
      %p194 = por %p192, %p193
      %p195 = scmp.ne.s32.totalorder %s186, %s187
      %p196 = scmp.eq.s32.totalorder %s44, 0
      %p197 = por %p195, %p196
      %p198 = scmp.ne.s32.totalorder %s186, %s187
      %p199 = scmp.eq.s32.totalorder %s45, 3
      %p200 = por %p198, %p199
      %p202 = scmp.ne.s32.totalorder %s187, %s201
      %p203 = scmp.eq.s32.totalorder %s45, 0
      %p204 = por %p202, %p203
      %s206 = sadd.s32 %s205, 1
      %p209 = scmp.eq.s32.totalorder %s39, 3
      %p210 = scmp.ne.s32.totalorder %s205, %s207
      %p211 = scmp.eq.s32.totalorder %s39, 0
      %p212 = por %p210, %p211
      %p213 = scmp.ne.s32.totalorder %s205, %s207
      %p214 = scmp.eq.s32.totalorder %s44, 3
      %p215 = por %p213, %p214
      %p216 = scmp.ne.s32.totalorder %s207, %s208
      %p217 = scmp.eq.s32.totalorder %s44, 0
      %p218 = por %p216, %p217
      %p219 = scmp.ne.s32.totalorder %s207, %s208
      %p220 = scmp.eq.s32.totalorder %s45, 3
      %p221 = por %p219, %p220
      %p223 = scmp.ne.s32.totalorder %s208, %s222
      %p224 = scmp.eq.s32.totalorder %s45, 0
      %p225 = por %p223, %p224
      %s227 = sadd.s32 %s226, 1
      %p230 = scmp.eq.s32.totalorder %s39, 3
      %p231 = scmp.ne.s32.totalorder %s226, %s228
      %p232 = scmp.eq.s32.totalorder %s39, 0
      %p233 = por %p231, %p232
      %p234 = scmp.ne.s32.totalorder %s226, %s228
      %p235 = scmp.eq.s32.totalorder %s44, 3
      %p236 = por %p234, %p235
      %p237 = scmp.ne.s32.totalorder %s228, %s229
      %p238 = scmp.eq.s32.totalorder %s44, 0
      %p239 = por %p237, %p238
      %p240 = scmp.ne.s32.totalorder %s228, %s229
      %p241 = scmp.eq.s32.totalorder %s45, 3
      %p242 = por %p240, %p241
      %p244 = scmp.ne.s32.totalorder %s229, %s243
      %p245 = scmp.eq.s32.totalorder %s45, 0
      %p246 = por %p244, %p245
      %s248 = sadd.s32 %s247, 1
      %p251 = scmp.eq.s32.totalorder %s39, 3
      %p252 = scmp.ne.s32.totalorder %s247, %s249
      %p253 = scmp.eq.s32.totalorder %s39, 0
      %p254 = por %p252, %p253
      %p255 = scmp.ne.s32.totalorder %s247, %s249
      %p256 = scmp.eq.s32.totalorder %s44, 3
      %p257 = por %p255, %p256
      %p258 = scmp.ne.s32.totalorder %s249, %s250
      %p259 = scmp.eq.s32.totalorder %s44, 0
      %p260 = por %p258, %p259
      %p261 = scmp.ne.s32.totalorder %s249, %s250
      %p262 = scmp.eq.s32.totalorder %s45, 3
      %p263 = por %p261, %p262
      %p265 = scmp.ne.s32.totalorder %s250, %s264
      %p266 = scmp.eq.s32.totalorder %s45, 0
      %p267 = por %p265, %p266
      %s269 = sadd.s32 %s268, 1
      %p272 = scmp.eq.s32.totalorder %s39, 3
      %p273 = scmp.ne.s32.totalorder %s268, %s270
      %p274 = scmp.eq.s32.totalorder %s39, 0
      %p275 = por %p273, %p274
      %p276 = scmp.ne.s32.totalorder %s268, %s270
      %p277 = scmp.eq.s32.totalorder %s44, 3
      %p278 = por %p276, %p277
      %p279 = scmp.ne.s32.totalorder %s270, %s271
      %p280 = scmp.eq.s32.totalorder %s44, 0
      %p281 = por %p279, %p280
      %p282 = scmp.ne.s32.totalorder %s270, %s271
      %p283 = scmp.eq.s32.totalorder %s45, 3
      %p284 = por %p282, %p283
      %p286 = scmp.ne.s32.totalorder %s271, %s285
      %p287 = scmp.eq.s32.totalorder %s45, 0
      %p288 = por %p286, %p287
      %s290 = sadd.s32 %s289, 1
      %p293 = scmp.eq.s32.totalorder %s39, 3
      %p294 = scmp.ne.s32.totalorder %s289, %s291
      %p295 = scmp.eq.s32.totalorder %s39, 0
      %p296 = por %p294, %p295
      %p297 = scmp.ne.s32.totalorder %s289, %s291
      %p298 = scmp.eq.s32.totalorder %s44, 3
      %p299 = por %p297, %p298
      %p300 = scmp.ne.s32.totalorder %s291, %s292
      %p301 = scmp.eq.s32.totalorder %s44, 0
      %p302 = por %p300, %p301
      %p303 = scmp.ne.s32.totalorder %s291, %s292
      %p304 = scmp.eq.s32.totalorder %s45, 3
      %p305 = por %p303, %p304
      %p307 = scmp.ne.s32.totalorder %s292, %s306
      %p308 = scmp.eq.s32.totalorder %s45, 0
      %p309 = por %p307, %p308
      %s311 = sadd.s32 %s310, 1
      %p314 = scmp.eq.s32.totalorder %s39, 3
      %p315 = scmp.ne.s32.totalorder %s310, %s312
      %p316 = scmp.eq.s32.totalorder %s39, 0
      %p317 = por %p315, %p316
      %p318 = scmp.ne.s32.totalorder %s310, %s312
      %p319 = scmp.eq.s32.totalorder %s44, 3
      %p320 = por %p318, %p319
      %p321 = scmp.ne.s32.totalorder %s312, %s313
      %p322 = scmp.eq.s32.totalorder %s44, 0
      %p323 = por %p321, %p322
      %p324 = scmp.ne.s32.totalorder %s312, %s313
      %p325 = scmp.eq.s32.totalorder %s45, 3
      %p326 = por %p324, %p325
      %p328 = scmp.ne.s32.totalorder %s313, %s327
      %p329 = scmp.eq.s32.totalorder %s45, 0
      %p330 = por %p328, %p329
      %s332 = sadd.s32 %s331, 1
      %p335 = scmp.eq.s32.totalorder %s39, 3
      %p336 = scmp.ne.s32.totalorder %s331, %s333
      %p337 = scmp.eq.s32.totalorder %s39, 0
      %p338 = por %p336, %p337
      %p339 = scmp.ne.s32.totalorder %s331, %s333
      %p340 = scmp.eq.s32.totalorder %s44, 3
      %p341 = por %p339, %p340
      %p342 = scmp.ne.s32.totalorder %s333, %s334
      %p343 = scmp.eq.s32.totalorder %s44, 0
      %p344 = por %p342, %p343
      %p345 = scmp.ne.s32.totalorder %s333, %s334
      %p346 = scmp.eq.s32.totalorder %s45, 3
      %p347 = por %p345, %p346
      %p349 = scmp.ne.s32.totalorder %s334, %s348
      %p350 = scmp.eq.s32.totalorder %s45, 0
      %p351 = por %p349, %p350
      %s353 = sadd.s32 %s352, 1
      %p356 = scmp.eq.s32.totalorder %s39, 3
      %p357 = scmp.ne.s32.totalorder %s352, %s354
      %p358 = scmp.eq.s32.totalorder %s39, 0
      %p359 = por %p357, %p358
      %p360 = scmp.ne.s32.totalorder %s352, %s354
      %p361 = scmp.eq.s32.totalorder %s44, 3
      %p362 = por %p360, %p361
      %p363 = scmp.ne.s32.totalorder %s354, %s355
      %p364 = scmp.eq.s32.totalorder %s44, 0
      %p365 = por %p363, %p364
      %p366 = scmp.ne.s32.totalorder %s354, %s355
      %p367 = scmp.eq.s32.totalorder %s45, 3
      %p368 = por %p366, %p367
      %p370 = scmp.ne.s32.totalorder %s355, %s369
      %p371 = scmp.eq.s32.totalorder %s45, 0
      %p372 = por %p370, %p371
      %s374 = sadd.s32 %s373, 1
      %p377 = scmp.eq.s32.totalorder %s39, 3
      %p378 = scmp.ne.s32.totalorder %s373, %s375
      %p379 = scmp.eq.s32.totalorder %s39, 0
      %p380 = por %p378, %p379
      %p381 = scmp.ne.s32.totalorder %s373, %s375
      %p382 = scmp.eq.s32.totalorder %s44, 3
      %p383 = por %p381, %p382
      %p384 = scmp.ne.s32.totalorder %s375, %s376
      %p385 = scmp.eq.s32.totalorder %s44, 0
      %p386 = por %p384, %p385
      %p387 = scmp.ne.s32.totalorder %s375, %s376
      %p388 = scmp.eq.s32.totalorder %s45, 3
      %p389 = por %p387, %p388
      %p391 = scmp.ne.s32.totalorder %s376, %s390
      %p392 = scmp.eq.s32.totalorder %s45, 0
      %p393 = por %p391, %p392
      %s394 = ssub.s32 %s47, %s54
      %p395 = scmp.eq.s32.totalorder %s394, 0
      %s397 = sadd.s32 %s396, 1
      %s398 = scalar_select %p395, %s396, %s397
      %p401 = pneg %p395
      %p402 = scmp.eq.s32.totalorder %s39, 3
      %p403 = por %p401, %p402
      %p404 = scmp.ne.s32.totalorder %s396, %s399
      %p405 = scmp.eq.s32.totalorder %s39, 0
      %p406 = por %p404, %p405
      %p407 = scmp.ne.s32.totalorder %s396, %s399
      %p408 = scmp.eq.s32.totalorder %s44, 3
      %p409 = por %p407, %p408
      %p410 = scmp.ne.s32.totalorder %s399, %s400
      %p411 = scmp.eq.s32.totalorder %s44, 0
      %p412 = por %p410, %p411
      %p413 = scmp.ne.s32.totalorder %s399, %s400
      %p414 = scmp.eq.s32.totalorder %s45, 3
      %p415 = por %p413, %p414
      %p417 = scmp.ne.s32.totalorder %s400, %s416
      %p418 = scmp.eq.s32.totalorder %s45, 0
      %p419 = por %p417, %p418
      %s420 = ssub.s32 %s47, %s54
      %p421 = scmp.eq.s32.totalorder %s420, 0
      %s423 = sadd.s32 %s422, 1
      %s424 = scalar_select %p421, %s422, %s423
      %p427 = pneg %p421
      %p428 = scmp.eq.s32.totalorder %s39, 3
      %p429 = por %p427, %p428
      %p430 = scmp.ne.s32.totalorder %s422, %s425
      %p431 = scmp.eq.s32.totalorder %s39, 0
      %p432 = por %p430, %p431
      %p433 = scmp.ne.s32.totalorder %s422, %s425
      %p434 = scmp.eq.s32.totalorder %s44, 3
      %p435 = por %p433, %p434
      %p436 = scmp.ne.s32.totalorder %s425, %s426
      %p437 = scmp.eq.s32.totalorder %s44, 0
      %p438 = por %p436, %p437
      %p439 = scmp.ne.s32.totalorder %s425, %s426
      %p440 = scmp.eq.s32.totalorder %s45, 3
      %p441 = por %p439, %p440
      %p443 = scmp.ne.s32.totalorder %s426, %s442
      %p444 = scmp.eq.s32.totalorder %s45, 0
      %p445 = por %p443, %p444
      %s446 = ssub.s32 %s47, %s54
      %p447 = scmp.eq.s32.totalorder %s446, 0
      %s449 = sadd.s32 %s448, 1
      %s450 = scalar_select %p447, %s448, %s449
      %p453 = pneg %p447
      %p454 = scmp.eq.s32.totalorder %s39, 3
      %p455 = por %p453, %p454
      %p456 = scmp.ne.s32.totalorder %s448, %s451
      %p457 = scmp.eq.s32.totalorder %s39, 0
      %p458 = por %p456, %p457
      %p459 = scmp.ne.s32.totalorder %s448, %s451
      %p460 = scmp.eq.s32.totalorder %s44, 3
      %p461 = por %p459, %p460
      %p462 = scmp.ne.s32.totalorder %s451, %s452
      %p463 = scmp.eq.s32.totalorder %s44, 0
      %p464 = por %p462, %p463
      %p465 = scmp.ne.s32.totalorder %s451, %s452
      %p466 = scmp.eq.s32.totalorder %s45, 3
      %p467 = por %p465, %p466
      %p469 = scmp.ne.s32.totalorder %s452, %s468
      %p470 = scmp.eq.s32.totalorder %s45, 0
      %p471 = por %p469, %p470
      %s472 = ssub.s32 %s47, %s54
      %p473 = scmp.eq.s32.totalorder %s472, 0
      %s475 = sadd.s32 %s474, 1
      %s476 = scalar_select %p473, %s474, %s475
      %p479 = pneg %p473
      %p480 = scmp.eq.s32.totalorder %s39, 3
      %p481 = por %p479, %p480
      %p482 = scmp.ne.s32.totalorder %s474, %s477
      %p483 = scmp.eq.s32.totalorder %s39, 0
      %p484 = por %p482, %p483
      %p485 = scmp.ne.s32.totalorder %s474, %s477
      %p486 = scmp.eq.s32.totalorder %s44, 3
      %p487 = por %p485, %p486
      %p488 = scmp.ne.s32.totalorder %s477, %s478
      %p489 = scmp.eq.s32.totalorder %s44, 0
      %p490 = por %p488, %p489
      %p491 = scmp.ne.s32.totalorder %s477, %s478
      %p492 = scmp.eq.s32.totalorder %s45, 3
      %p493 = por %p491, %p492
      %p495 = scmp.ne.s32.totalorder %s478, %s494
      %p496 = scmp.eq.s32.totalorder %s45, 0
      %p497 = por %p495, %p496
      %s498 = ssub.s32 %s47, %s54
      %p499 = scmp.eq.s32.totalorder %s498, 0
      %s501 = sadd.s32 %s500, 1
      %s502 = scalar_select %p499, %s500, %s501
      %p505 = pneg %p499
      %p506 = scmp.eq.s32.totalorder %s39, 3
      %p507 = por %p505, %p506
      %p508 = scmp.ne.s32.totalorder %s500, %s503
      %p509 = scmp.eq.s32.totalorder %s39, 0
      %p510 = por %p508, %p509
      %p511 = scmp.ne.s32.totalorder %s500, %s503
      %p512 = scmp.eq.s32.totalorder %s44, 3
      %p513 = por %p511, %p512
      %p514 = scmp.ne.s32.totalorder %s503, %s504
      %p515 = scmp.eq.s32.totalorder %s44, 0
      %p516 = por %p514, %p515
      %p517 = scmp.ne.s32.totalorder %s503, %s504
      %p518 = scmp.eq.s32.totalorder %s45, 3
      %p519 = por %p517, %p518
      %p521 = scmp.ne.s32.totalorder %s504, %s520
      %p522 = scmp.eq.s32.totalorder %s45, 0
      %p523 = por %p521, %p522
      %s524 = ssub.s32 %s47, %s54
      %p525 = scmp.eq.s32.totalorder %s524, 0
      %s527 = sadd.s32 %s526, 1
      %s528 = scalar_select %p525, %s526, %s527
      %p531 = pneg %p525
      %p532 = scmp.eq.s32.totalorder %s39, 3
      %p533 = por %p531, %p532
      %p534 = scmp.ne.s32.totalorder %s526, %s529
      %p535 = scmp.eq.s32.totalorder %s39, 0
      %p536 = por %p534, %p535
      %p537 = scmp.ne.s32.totalorder %s526, %s529
      %p538 = scmp.eq.s32.totalorder %s44, 3
      %p539 = por %p537, %p538
      %p540 = scmp.ne.s32.totalorder %s529, %s530
      %p541 = scmp.eq.s32.totalorder %s44, 0
      %p542 = por %p540, %p541
      %p543 = scmp.ne.s32.totalorder %s529, %s530
      %p544 = scmp.eq.s32.totalorder %s45, 3
      %p545 = por %p543, %p544
      %p547 = scmp.ne.s32.totalorder %s530, %s546
      %p548 = scmp.eq.s32.totalorder %s45, 0
      %p549 = por %p547, %p548
      %s550 = ssub.s32 %s47, %s54
      %p551 = scmp.eq.s32.totalorder %s550, 0
      %s553 = sadd.s32 %s552, 1
      %s554 = scalar_select %p551, %s552, %s553
      %p557 = pneg %p551
      %p558 = scmp.eq.s32.totalorder %s39, 3
      %p559 = por %p557, %p558
      %p560 = scmp.ne.s32.totalorder %s552, %s555
      %p561 = scmp.eq.s32.totalorder %s39, 0
      %p562 = por %p560, %p561
      %p563 = scmp.ne.s32.totalorder %s552, %s555
      %p564 = scmp.eq.s32.totalorder %s44, 3
      %p565 = por %p563, %p564
      %p566 = scmp.ne.s32.totalorder %s555, %s556
      %p567 = scmp.eq.s32.totalorder %s44, 0
      %p568 = por %p566, %p567
      %p569 = scmp.ne.s32.totalorder %s555, %s556
      %p570 = scmp.eq.s32.totalorder %s45, 3
      %p571 = por %p569, %p570
      %p573 = scmp.ne.s32.totalorder %s556, %s572
      %p574 = scmp.eq.s32.totalorder %s45, 0
      %p575 = por %p573, %p574
      %s576 = ssub.s32 %s47, %s54
      %p577 = scmp.eq.s32.totalorder %s576, 0
      %s579 = sadd.s32 %s578, 1
      %s580 = scalar_select %p577, %s578, %s579
      %p583 = pneg %p577
      %p584 = scmp.eq.s32.totalorder %s39, 3
      %p585 = por %p583, %p584
      %p586 = scmp.ne.s32.totalorder %s578, %s581
      %p587 = scmp.eq.s32.totalorder %s39, 0
      %p588 = por %p586, %p587
      %p589 = scmp.ne.s32.totalorder %s578, %s581
      %p590 = scmp.eq.s32.totalorder %s44, 3
      %p591 = por %p589, %p590
      %p592 = scmp.ne.s32.totalorder %s581, %s582
      %p593 = scmp.eq.s32.totalorder %s44, 0
      %p594 = por %p592, %p593
      %p595 = scmp.ne.s32.totalorder %s581, %s582
      %p596 = scmp.eq.s32.totalorder %s45, 3
      %p597 = por %p595, %p596
      %p599 = scmp.ne.s32.totalorder %s582, %s598
      %p600 = scmp.eq.s32.totalorder %s45, 0
      %p601 = por %p599, %p600
      %s603 = sadd.s32 %s602, 1
      %p606 = scmp.eq.s32.totalorder %s39, 3
      %p607 = scmp.ne.s32.totalorder %s602, %s604
      %p608 = scmp.eq.s32.totalorder %s39, 0
      %p609 = por %p607, %p608
      %p610 = scmp.ne.s32.totalorder %s602, %s604
      %p611 = scmp.eq.s32.totalorder %s44, 3
      %p612 = por %p610, %p611
      %p613 = scmp.ne.s32.totalorder %s604, %s605
      %p614 = scmp.eq.s32.totalorder %s44, 0
      %p615 = por %p613, %p614
      %p616 = scmp.ne.s32.totalorder %s604, %s605
      %p617 = scmp.eq.s32.totalorder %s45, 3
      %p618 = por %p616, %p617
      %p620 = scmp.ne.s32.totalorder %s605, %s619
      %p621 = scmp.eq.s32.totalorder %s45, 0
      %p622 = por %p620, %p621
      %s624 = sadd.s32 %s623, 1
      %p627 = scmp.eq.s32.totalorder %s39, 3
      %p628 = scmp.ne.s32.totalorder %s623, %s625
      %p629 = scmp.eq.s32.totalorder %s39, 0
      %p630 = por %p628, %p629
      %p631 = scmp.ne.s32.totalorder %s623, %s625
      %p632 = scmp.eq.s32.totalorder %s44, 3
      %p633 = por %p631, %p632
      %p634 = scmp.ne.s32.totalorder %s625, %s626
      %p635 = scmp.eq.s32.totalorder %s44, 0
      %p636 = por %p634, %p635
      %p637 = scmp.ne.s32.totalorder %s625, %s626
      %p638 = scmp.eq.s32.totalorder %s45, 3
      %p639 = por %p637, %p638
      %p641 = scmp.ne.s32.totalorder %s626, %s640
      %p642 = scmp.eq.s32.totalorder %s45, 0
      %p643 = por %p641, %p642
      %s644 = ssub.s32 %s46, %s58
      %p645 = scmp.eq.s32.totalorder %s644, 0
      %s647 = sadd.s32 %s646, 1
      %s648 = scalar_select %p645, %s646, %s647
      %p651 = pneg %p645
      %p652 = scmp.eq.s32.totalorder %s39, 3
      %p653 = por %p651, %p652
      %p654 = scmp.ne.s32.totalorder %s646, %s649
      %p655 = scmp.eq.s32.totalorder %s39, 0
      %p656 = por %p654, %p655
      %p657 = scmp.ne.s32.totalorder %s646, %s649
      %p658 = scmp.eq.s32.totalorder %s44, 3
      %p659 = por %p657, %p658
      %p660 = scmp.ne.s32.totalorder %s649, %s650
      %p661 = scmp.eq.s32.totalorder %s44, 0
      %p662 = por %p660, %p661
      %p663 = scmp.ne.s32.totalorder %s649, %s650
      %p664 = scmp.eq.s32.totalorder %s45, 3
      %p665 = por %p663, %p664
      %p667 = scmp.ne.s32.totalorder %s650, %s666
      %p668 = scmp.eq.s32.totalorder %s45, 0
      %p669 = por %p667, %p668
      %s670 = ssub.s32 %s46, %s58
      %p671 = scmp.eq.s32.totalorder %s670, 0
      %s673 = sadd.s32 %s672, 1
      %s674 = scalar_select %p671, %s672, %s673
      %p677 = pneg %p671
      %p678 = scmp.eq.s32.totalorder %s39, 3
      %p679 = por %p677, %p678
      %p680 = scmp.ne.s32.totalorder %s672, %s675
      %p681 = scmp.eq.s32.totalorder %s39, 0
      %p682 = por %p680, %p681
      %p683 = scmp.ne.s32.totalorder %s672, %s675
      %p684 = scmp.eq.s32.totalorder %s44, 3
      %p685 = por %p683, %p684
      %p686 = scmp.ne.s32.totalorder %s675, %s676
      %p687 = scmp.eq.s32.totalorder %s44, 0
      %p688 = por %p686, %p687
      %p689 = scmp.ne.s32.totalorder %s675, %s676
      %p690 = scmp.eq.s32.totalorder %s45, 3
      %p691 = por %p689, %p690
      %p693 = scmp.ne.s32.totalorder %s676, %s692
      %p694 = scmp.eq.s32.totalorder %s45, 0
      %p695 = por %p693, %p694
      %p696 = scmp.le.s32.totalorder 1, %s39
      %p697 = scmp.lt.s32.totalorder %s39, 5
      %p698 = pnand %p696, %p697
      %p699 = pneg %p698
      // Predicated region
      $region9: #{tpu_custom_call.1} parent=5 // pred_check
        _
      $region10: #{tpu_custom_call.1} parent=5 // pred_check_branch
        %701 = sbr.rel (%p698) target = $region12
      $region11: #{tpu_custom_call.1} parent=5 // pred_region
        %s702 = ssub.s32 %s39, 1
        // Predicated region
        $region13: #{tpu_custom_call.1} parent=11 // pred_check
          %p703 = pneg %p124
        $region14: #{tpu_custom_call.1} parent=11 // pred_check_branch
          %705 = sbr.rel (%p703) target = $region16
        $region15: #{tpu_custom_call.1} parent=11 // pred_region
          _
        $region16: #{tpu_custom_call.1} parent=11 // pred_fallthru
          _
        // Predicated region
        $region17: #{tpu_custom_call.1} parent=11 // pred_check
          %p706 = pneg %p197
        $region18: #{tpu_custom_call.1} parent=11 // pred_check_branch
          %708 = sbr.rel (%p706) target = $region20
        $region19: #{tpu_custom_call.1} parent=11 // pred_region
          _
        $region20: #{tpu_custom_call.1} parent=11 // pred_fallthru
          _
        // Predicated region
        $region21: #{tpu_custom_call.1} parent=11 // pred_check
          %p709 = pneg %p218
        $region22: #{tpu_custom_call.1} parent=11 // pred_check_branch
          %711 = sbr.rel (%p709) target = $region24
        $region23: #{tpu_custom_call.1} parent=11 // pred_region
          _
        $region24: #{tpu_custom_call.1} parent=11 // pred_fallthru
          _
        // Predicated region
        $region25: #{tpu_custom_call.1} parent=11 // pred_check
          %p712 = pneg %p239
        $region26: #{tpu_custom_call.1} parent=11 // pred_check_branch
          %714 = sbr.rel (%p712) target = $region28
        $region27: #{tpu_custom_call.1} parent=11 // pred_region
          _
        $region28: #{tpu_custom_call.1} parent=11 // pred_fallthru
          _
        // Predicated region
        $region29: #{tpu_custom_call.1} parent=11 // pred_check
          %p715 = pneg %p260
        $region30: #{tpu_custom_call.1} parent=11 // pred_check_branch
          %717 = sbr.rel (%p715) target = $region32
        $region31: #{tpu_custom_call.1} parent=11 // pred_region
          _
        $region32: #{tpu_custom_call.1} parent=11 // pred_fallthru
          _
        // Predicated region
        $region33: #{tpu_custom_call.1} parent=11 // pred_check
          %p718 = pneg %p281
        $region34: #{tpu_custom_call.1} parent=11 // pred_check_branch
          %720 = sbr.rel (%p718) target = $region36
        $region35: #{tpu_custom_call.1} parent=11 // pred_region
          _
        $region36: #{tpu_custom_call.1} parent=11 // pred_fallthru
          _
        // Predicated region
        $region37: #{tpu_custom_call.1} parent=11 // pred_check
          %p721 = pneg %p302
        $region38: #{tpu_custom_call.1} parent=11 // pred_check_branch
          %723 = sbr.rel (%p721) target = $region40
        $region39: #{tpu_custom_call.1} parent=11 // pred_region
          _
        $region40: #{tpu_custom_call.1} parent=11 // pred_fallthru
          _
        // Predicated region
        $region41: #{tpu_custom_call.1} parent=11 // pred_check
          %p724 = pneg %p323
        $region42: #{tpu_custom_call.1} parent=11 // pred_check_branch
          %726 = sbr.rel (%p724) target = $region44
        $region43: #{tpu_custom_call.1} parent=11 // pred_region
          _
        $region44: #{tpu_custom_call.1} parent=11 // pred_fallthru
          _
        // Predicated region
        $region45: #{tpu_custom_call.1} parent=11 // pred_check
          %p727 = pneg %p344
        $region46: #{tpu_custom_call.1} parent=11 // pred_check_branch
          %729 = sbr.rel (%p727) target = $region48
        $region47: #{tpu_custom_call.1} parent=11 // pred_region
          _
        $region48: #{tpu_custom_call.1} parent=11 // pred_fallthru
          _
        // Predicated region
        $region49: #{tpu_custom_call.1} parent=11 // pred_check
          %p730 = pneg %p365
        $region50: #{tpu_custom_call.1} parent=11 // pred_check_branch
          %732 = sbr.rel (%p730) target = $region52
        $region51: #{tpu_custom_call.1} parent=11 // pred_region
          _
        $region52: #{tpu_custom_call.1} parent=11 // pred_fallthru
          _
        // Predicated region
        $region53: #{tpu_custom_call.1} parent=11 // pred_check
          %p733 = pneg %p386
        $region54: #{tpu_custom_call.1} parent=11 // pred_check_branch
          %735 = sbr.rel (%p733) target = $region56
        $region55: #{tpu_custom_call.1} parent=11 // pred_region
          _
        $region56: #{tpu_custom_call.1} parent=11 // pred_fallthru
          _
        // Predicated region
        $region57: #{tpu_custom_call.1} parent=11 // pred_check
          %p736 = pneg %p615
        $region58: #{tpu_custom_call.1} parent=11 // pred_check_branch
          %738 = sbr.rel (%p736) target = $region60
        $region59: #{tpu_custom_call.1} parent=11 // pred_region
          _
        $region60: #{tpu_custom_call.1} parent=11 // pred_fallthru
          _
        // Predicated region
        $region61: #{tpu_custom_call.1} parent=11 // pred_check
          %p739 = pneg %p636
        $region62: #{tpu_custom_call.1} parent=11 // pred_check_branch
          %741 = sbr.rel (%p739) target = $region64
        $region63: #{tpu_custom_call.1} parent=11 // pred_region
          _
        $region64: #{tpu_custom_call.1} parent=11 // pred_fallthru
          _
      $region12: #{tpu_custom_call.1} parent=5 // pred_fallthru
        _
      %p742 = scmp.lt.s32.totalorder %s39, 4
      // Predicated region
      $region65: #{tpu_custom_call.1} parent=5 // pred_check
        %p743 = pneg %p742
      $region66: #{tpu_custom_call.1} parent=5 // pred_check_branch
        %745 = sbr.rel (%p743) target = $region68
      $region67: #{tpu_custom_call.1} parent=5 // pred_region
        // Predicated region
        $region69: #{tpu_custom_call.1} parent=67 // pred_check
          %p746 = pneg %p71
        $region70: #{tpu_custom_call.1} parent=67 // pred_check_branch
          %748 = sbr.rel (%p746) target = $region72
        $region71: #{tpu_custom_call.1} parent=67 // pred_region
          %p749 = scmp.lt.s32.totalorder %s46, 1
          %s750 = scalar_select %p749, %s46, 1
          %s751 = smul.addr %s750, 2
          %s752 = smul.addr %s751, 8
          %s753 = scalar_lea.vmem %s0, %s752
        $region72: #{tpu_custom_call.1} parent=67 // pred_fallthru
          _
        // Predicated region
        $region73: #{tpu_custom_call.1} parent=67 // pred_check
          %p754 = pneg %p97
        $region74: #{tpu_custom_call.1} parent=67 // pred_check_branch
          %756 = sbr.rel (%p754) target = $region76
        $region75: #{tpu_custom_call.1} parent=67 // pred_region
          %p757 = scmp.lt.s32.totalorder %s46, 1
          %s758 = scalar_select %p757, %s46, 1
          %s759 = scalar_lea.vmem %s1, %s758
        $region76: #{tpu_custom_call.1} parent=67 // pred_fallthru
          _
        // Predicated region
        $region77: #{tpu_custom_call.1} parent=67 // pred_check
          %p760 = pneg %p144
        $region78: #{tpu_custom_call.1} parent=67 // pred_check_branch
          %762 = sbr.rel (%p760) target = $region80
        $region79: #{tpu_custom_call.1} parent=67 // pred_region
          %p763 = scmp.lt.s32.totalorder %s46, 1
          %s764 = scalar_select %p763, %s46, 1
          %s765 = scalar_lea.vmem %s3, %s764
        $region80: #{tpu_custom_call.1} parent=67 // pred_fallthru
          _
        // Predicated region
        $region81: #{tpu_custom_call.1} parent=67 // pred_check
          %p766 = pneg %p170
        $region82: #{tpu_custom_call.1} parent=67 // pred_check_branch
          %768 = sbr.rel (%p766) target = $region84
        $region83: #{tpu_custom_call.1} parent=67 // pred_region
          %p769 = scmp.lt.s32.totalorder %s46, 1
          %s770 = scalar_select %p769, %s46, 1
          %s771 = smul.addr %s770, 2
          %s772 = smul.addr %s771, 8
          %s773 = scalar_lea.vmem %s4, %s772
        $region84: #{tpu_custom_call.1} parent=67 // pred_fallthru
          _
        // Predicated region
        $region85: #{tpu_custom_call.1} parent=67 // pred_check
          %p774 = pneg %p406
        $region86: #{tpu_custom_call.1} parent=67 // pred_check_branch
          %776 = sbr.rel (%p774) target = $region88
        $region87: #{tpu_custom_call.1} parent=67 // pred_region
          %p777 = scmp.lt.s32.totalorder %s47, 1
          %s778 = scalar_select %p777, %s47, 1
          %s779 = smul.addr %s778, 6
          %s780 = scalar_lea.vmem %s15, %s779
        $region88: #{tpu_custom_call.1} parent=67 // pred_fallthru
          _
        // Predicated region
        $region89: #{tpu_custom_call.1} parent=67 // pred_check
          %p781 = pneg %p432
        $region90: #{tpu_custom_call.1} parent=67 // pred_check_branch
          %783 = sbr.rel (%p781) target = $region92
        $region91: #{tpu_custom_call.1} parent=67 // pred_region
          %p784 = scmp.lt.s32.totalorder %s47, 1
          %s785 = scalar_select %p784, %s47, 1
          %s786 = scalar_lea.vmem %s16, %s785
        $region92: #{tpu_custom_call.1} parent=67 // pred_fallthru
          _
        // Predicated region
        $region93: #{tpu_custom_call.1} parent=67 // pred_check
          %p787 = pneg %p458
        $region94: #{tpu_custom_call.1} parent=67 // pred_check_branch
          %789 = sbr.rel (%p787) target = $region96
        $region95: #{tpu_custom_call.1} parent=67 // pred_region
          %p790 = scmp.lt.s32.totalorder %s47, 1
          %s791 = scalar_select %p790, %s47, 1
          %s792 = scalar_lea.vmem %s17, %s791
        $region96: #{tpu_custom_call.1} parent=67 // pred_fallthru
          _
        // Predicated region
        $region97: #{tpu_custom_call.1} parent=67 // pred_check
          %p793 = pneg %p484
        $region98: #{tpu_custom_call.1} parent=67 // pred_check_branch
          %795 = sbr.rel (%p793) target = $region100
        $region99: #{tpu_custom_call.1} parent=67 // pred_region
          %p796 = scmp.lt.s32.totalorder %s47, 1
          %s797 = scalar_select %p796, %s47, 1
          %s798 = scalar_lea.vmem %s18, %s797
        $region100: #{tpu_custom_call.1} parent=67 // pred_fallthru
          _
        // Predicated region
        $region101: #{tpu_custom_call.1} parent=67 // pred_check
          %p799 = pneg %p510
        $region102: #{tpu_custom_call.1} parent=67 // pred_check_branch
          %801 = sbr.rel (%p799) target = $region104
        $region103: #{tpu_custom_call.1} parent=67 // pred_region
          %p802 = scmp.lt.s32.totalorder %s47, 1
          %s803 = scalar_select %p802, %s47, 1
          %s804 = scalar_lea.vmem %s19, %s803
        $region104: #{tpu_custom_call.1} parent=67 // pred_fallthru
          _
        // Predicated region
        $region105: #{tpu_custom_call.1} parent=67 // pred_check
          %p805 = pneg %p536
        $region106: #{tpu_custom_call.1} parent=67 // pred_check_branch
          %807 = sbr.rel (%p805) target = $region108
        $region107: #{tpu_custom_call.1} parent=67 // pred_region
          %p808 = scmp.lt.s32.totalorder %s47, 1
          %s809 = scalar_select %p808, %s47, 1
          %s810 = scalar_lea.vmem %s20, %s809
        $region108: #{tpu_custom_call.1} parent=67 // pred_fallthru
          _
        // Predicated region
        $region109: #{tpu_custom_call.1} parent=67 // pred_check
          %p811 = pneg %p562
        $region110: #{tpu_custom_call.1} parent=67 // pred_check_branch
          %813 = sbr.rel (%p811) target = $region112
        $region111: #{tpu_custom_call.1} parent=67 // pred_region
          %p814 = scmp.lt.s32.totalorder %s47, 1
          %s815 = scalar_select %p814, %s47, 1
          %s816 = scalar_lea.vmem %s21, %s815
        $region112: #{tpu_custom_call.1} parent=67 // pred_fallthru
          _
        // Predicated region
        $region113: #{tpu_custom_call.1} parent=67 // pred_check
          %p817 = pneg %p588
        $region114: #{tpu_custom_call.1} parent=67 // pred_check_branch
          %819 = sbr.rel (%p817) target = $region116
        $region115: #{tpu_custom_call.1} parent=67 // pred_region
          %p820 = scmp.lt.s32.totalorder %s47, 1
          %s821 = scalar_select %p820, %s47, 1
          %s822 = scalar_lea.vmem %s22, %s821
        $region116: #{tpu_custom_call.1} parent=67 // pred_fallthru
          _
      $region68: #{tpu_custom_call.1} parent=5 // pred_fallthru
        _
      %p823 = scmp.le.s32.totalorder 1, %s39
      %p824 = scmp.lt.s32.totalorder %s39, 5
      %p825 = pnand %p823, %p824
      %p826 = pneg %p825
      // Predicated region
      $region117: #{tpu_custom_call.1} parent=5 // pred_check
        _
      $region118: #{tpu_custom_call.1} parent=5 // pred_check_branch
        %828 = sbr.rel (%p825) target = $region120
      $region119: #{tpu_custom_call.1} parent=5 // pred_region
        %s829 = ssub.s32 %s39, 1
        %p830 = scmp.lt.s32.totalorder %s48, 1
        %s831 = scalar_select %p830, %s48, 1
        %s832 = smul.addr %s831, 2
        %s833 = smul.addr %s832, 8
        %s834 = scalar_lea.vmem %s0, %s833
        %p835 = pneg %p77
        %p836 = pneg %p74
        %p837 = scmp.lt.s32.totalorder %s48, 1
        %s838 = scalar_select %p837, %s48, 1
        %s839 = scalar_lea.vmem %s1, %s838
        %p840 = pneg %p103
        %p841 = pneg %p100
        %p842 = pneg %p124
        %p843 = pneg %p121
        %p844 = scmp.lt.s32.totalorder %s48, 1
        %s845 = scalar_select %p844, %s48, 1
        %s846 = scalar_lea.vmem %s3, %s845
        %p847 = pneg %p150
        %p848 = pneg %p147
        %p849 = scmp.lt.s32.totalorder %s48, 1
        %s850 = scalar_select %p849, %s48, 1
        %s851 = smul.addr %s850, 2
        %s852 = smul.addr %s851, 8
        %s853 = scalar_lea.vmem %s4, %s852
        %p854 = pneg %p176
        %p855 = pneg %p173
        %p856 = pneg %p197
        %p857 = pneg %p194
        %p858 = pneg %p218
        %p859 = pneg %p215
        %p860 = pneg %p239
        %p861 = pneg %p236
        %p862 = pneg %p260
        %p863 = pneg %p257
        %p864 = pneg %p281
        %p865 = pneg %p278
        %p866 = pneg %p302
        %p867 = pneg %p299
        %p868 = pneg %p323
        %p869 = pneg %p320
        %p870 = pneg %p344
        %p871 = pneg %p341
        %p872 = pneg %p365
        %p873 = pneg %p362
        %p874 = pneg %p386
        %p875 = pneg %p383
        %p876 = scmp.lt.s32.totalorder %s49, 1
        %s877 = scalar_select %p876, %s49, 1
        %s878 = smul.addr %s877, 6
        %s879 = scalar_lea.vmem %s15, %s878
        %p880 = pneg %p412
        %p881 = pneg %p409
        %p882 = scmp.lt.s32.totalorder %s49, 1
        %s883 = scalar_select %p882, %s49, 1
        %s884 = scalar_lea.vmem %s16, %s883
        %p885 = pneg %p438
        %p886 = pneg %p435
        %p887 = scmp.lt.s32.totalorder %s49, 1
        %s888 = scalar_select %p887, %s49, 1
        %s889 = scalar_lea.vmem %s17, %s888
        %p890 = pneg %p464
        %p891 = pneg %p461
        %p892 = scmp.lt.s32.totalorder %s49, 1
        %s893 = scalar_select %p892, %s49, 1
        %s894 = scalar_lea.vmem %s18, %s893
        %p895 = pneg %p490
        %p896 = pneg %p487
        %p897 = scmp.lt.s32.totalorder %s49, 1
        %s898 = scalar_select %p897, %s49, 1
        %s899 = scalar_lea.vmem %s19, %s898
        %p900 = pneg %p516
        %p901 = pneg %p513
        %p902 = scmp.lt.s32.totalorder %s49, 1
        %s903 = scalar_select %p902, %s49, 1
        %s904 = scalar_lea.vmem %s20, %s903
        %p905 = pneg %p542
        %p906 = pneg %p539
        %p907 = scmp.lt.s32.totalorder %s49, 1
        %s908 = scalar_select %p907, %s49, 1
        %s909 = scalar_lea.vmem %s21, %s908
        %p910 = pneg %p568
        %p911 = pneg %p565
        %p912 = scmp.lt.s32.totalorder %s49, 1
        %s913 = scalar_select %p912, %s49, 1
        %s914 = scalar_lea.vmem %s22, %s913
        %p915 = pneg %p594
        %p916 = pneg %p591
        %p917 = pneg %p615
        %p918 = pneg %p612
        %p919 = pneg %p636
        %p920 = pneg %p633
        %p921 = pneg %p662
        %p922 = pneg %p659
        %s923 = sand.u32 %s649, 1
        %s924 = scalar_lea.sflag [#allocation4], %s923
        %s925 = sand.u32 %s649, 1
        %s926 = smul.addr %s925, 16
        %s927 = scalar_lea.vmem [#allocation3], %s926
        %p928 = pneg %p688
        %p929 = pneg %p685
        %s930 = sand.u32 %s675, 1
        %s931 = scalar_lea.sflag [#allocation6], %s930
        %s932 = sand.u32 %s675, 1
        %s933 = smul.addr %s932, 16
        %s934 = scalar_lea.vmem [#allocation5], %s933
        %p935 = scmp.lt.s32.totalorder %s48, 1
        %s936 = scalar_select %p935, %s48, 1
        %s937 = smul.addr %s936, 2
        %s938 = smul.addr %s937, 8
        %s939 = scalar_lea.vmem %s0, %s938
        %p940 = scmp.lt.s32.totalorder %s48, 1
        %s941 = scalar_select %p940, %s48, 1
        %s942 = scalar_lea.vmem %s1, %s941
        %p943 = scmp.lt.s32.totalorder %s48, 1
        %s944 = scalar_select %p943, %s48, 1
        %s945 = scalar_lea.vmem %s3, %s944
        %p946 = scmp.lt.s32.totalorder %s48, 1
        %s947 = scalar_select %p946, %s48, 1
        %s948 = smul.addr %s947, 2
        %s949 = smul.addr %s948, 8
        %s950 = scalar_lea.vmem %s4, %s949
        %p951 = scmp.lt.s32.totalorder %s49, 1
        %s952 = scalar_select %p951, %s49, 1
        %s953 = smul.addr %s952, 6
        %s954 = scalar_lea.vmem %s15, %s953
        %p955 = scmp.lt.s32.totalorder %s49, 1
        %s956 = scalar_select %p955, %s49, 1
        %s957 = scalar_lea.vmem %s16, %s956
        %p958 = scmp.lt.s32.totalorder %s49, 1
        %s959 = scalar_select %p958, %s49, 1
        %s960 = scalar_lea.vmem %s17, %s959
        %p961 = scmp.lt.s32.totalorder %s49, 1
        %s962 = scalar_select %p961, %s49, 1
        %s963 = scalar_lea.vmem %s18, %s962
        %p964 = scmp.lt.s32.totalorder %s49, 1
        %s965 = scalar_select %p964, %s49, 1
        %s966 = scalar_lea.vmem %s19, %s965
        %p967 = scmp.lt.s32.totalorder %s49, 1
        %s968 = scalar_select %p967, %s49, 1
        %s969 = scalar_lea.vmem %s20, %s968
        %p970 = scmp.lt.s32.totalorder %s49, 1
        %s971 = scalar_select %p970, %s49, 1
        %s972 = scalar_lea.vmem %s21, %s971
        %p973 = scmp.lt.s32.totalorder %s49, 1
        %s974 = scalar_select %p973, %s49, 1
        %s975 = scalar_lea.vmem %s22, %s974
        %v977 = vld [vmem:[%s950] sm:$0xff]
        %v978 = vld [vmem:[%s950 + $0x8] sm:$0xff]
        %v979 = vld [vmem:[%s945] sm:$0x1]
        %p980 = scmp.eq.s32.totalorder %s49, 0
        // Predicated region
        $region121: #{tpu_custom_call.1} parent=119 // pred_check
          %p981 = pneg %p980
        $region122: #{tpu_custom_call.1} parent=119 // pred_check_branch
          %983 = sbr.rel (%p981) target = $region124
        $region123: #{tpu_custom_call.1} parent=119 // pred_region
          %v984 = vld [vmem:[%s939] sm:$0xff]
          %v985 = vld [vmem:[%s939 + $0x8] sm:$0xff]
          %v986 = vpack.c.bf16 %v985, %v984
          %v987 = vld [vmem:[%s5] sm:$0xf]
          %v988 = vld [vmem:[%s6] sm:$0x1]
          %v990 = vlaneseq
          %v991 = vshrl.u32 %v990, 7
          %v992 = vsub.s32 0, %v991
          %v993 = vrot.slane %v988, %v992
          %vm995 = vcmask 64512
          %v997 = vsel %vm995, %v986, 0
          %vm999 = vcmask 1043456
          %v1001 = vsel %vm999, %v987, 0
          %1003 = vmatprep.subr.bf16.mxu0 0
          %1004 = vmatpush1.bf16.msra.mxu0 %v1001
          %1005 = vmatprep.subr.bf16.mxu0 0
          %1006 = vmatpush1.bf16.msra.mxu0 0
          %1007 = vmatprep.subr.bf16.mxu0 0
          %1008 = vmatpush1.bf16.msra.mxu0 0
          %1009 = vmatprep.subr.bf16.mxu0 0
          %1010 = vmatpush1.bf16.msra.mxu0 0
          %1011 = vmatprep.subr.bf16.mxu0 0
          %1012 = vmatpush1.bf16.msra.mxu0 0
          %1013 = vmatprep.subr.bf16.mxu0 0
          %1014 = vmatpush1.bf16.msra.mxu0 0
          %1015 = vmatprep.subr.bf16.mxu0 0
          %1016 = vmatpush1.bf16.msra.mxu0 0
          %1017 = vmatprep.subr.bf16.mxu0 0
          %1018 = vmatpush1.bf16.msra.mxu0 0
          %1019 = vmatprep.subr.bf16.mxu0 0
          %1020 = vmatpush1.bf16.msra.mxu0 0
          %1021 = vmatprep.subr.bf16.mxu0 0
          %1022 = vmatpush1.bf16.msra.mxu0 0
          %1023 = vmatprep.subr.bf16.mxu0 0
          %1024 = vmatpush1.bf16.msra.mxu0 0
          %1025 = vmatprep.subr.bf16.mxu0 0
          %1026 = vmatpush1.bf16.msra.mxu0 0
          %1027 = vmatprep.subr.bf16.mxu0 0
          %1028 = vmatpush1.bf16.msra.mxu0 0
          %1029 = vmatprep.subr.bf16.mxu0 0
          %1030 = vmatpush1.bf16.msra.mxu0 0
          %1031 = vmatprep.subr.bf16.mxu0 0
          %1032 = vmatpush1.bf16.msra.mxu0 0
          %1033 = vmatprep.subr.bf16.mxu0 0
          %1034 = vmatpush1.bf16.msra.mxu0 0
          %1035 = vmatprep.mubr.bf16.mxu0 0
          %1036 = vmatmul.mubr.bf16.gmra.mrb[0].mxu0 %v997
          %v1037 = vpop.f32.mrb[0].mxu0
          %v1038 = vadd.f32 %v993, %v1037
          %v1039 = vpop.f32.mrb[0].mxu0
          %v1040 = vpop.f32.mrb[0].mxu0
          %v1041 = vadd.f32 %v993, %v1040
          %v1042 = vpop.f32.mrb[0].mxu0
          %1043 = vdwg.mxu0
          %v1044 = vld [vmem:[%s7] sm:$0x1]
          %v1045 = vld [vmem:[%s8] sm:$0x1]
          %vm1046 = vcmask 261120
          %v1047 = vsel %vm1046, %v1038, 0.0
          %1048 = vadd.xlane.f32.xlu0 %v1047
          %v1049 = vpop.xlane.xlu0 %1048
          %v1050 = vsel %vm1046, %v1041, 0.0
          %1051 = vadd.xlane.f32.xlu0 %v1050
          %v1052 = vpop.xlane.xlu0 %1051
          %v1053 = vrcp.pop 32.0
          %v1054 = vmul.f32 %v1049, %v1053
          %v1055 = vmul.f32 %v1052, %v1053
          %v1056 = vsub.f32 %v1038, %v1054
          %v1057 = vsub.f32 %v1041, %v1055
          %v1058 = vmul.f32 %v1056, %v1056
          %v1059 = vmul.f32 %v1057, %v1057
          %v1060 = vsel %vm1046, %v1058, 0.0
          %1061 = vadd.xlane.f32.xlu0 %v1060
          %v1062 = vpop.xlane.xlu0 %1061
          %v1063 = vsel %vm1046, %v1059, 0.0
          %1064 = vadd.xlane.f32.xlu0 %v1063
          %v1065 = vpop.xlane.xlu0 %1064
          %v1066 = vmul.f32 %v1062, %v1053
          %v1067 = vmul.f32 %v1065, %v1053
          %v1068 = vadd.f32 %v1066, 1e-05
          %v1069 = vadd.f32 %v1067, 1e-05
          %v1070 = vrsqrt.pop %v1068
          %v1071 = vrsqrt.pop %v1069
          %v1072 = vmul.f32 %v1056, %v1070
          %v1073 = vmul.f32 %v1057, %v1071
          %v1075 = vlaneseq
          %v1076 = vshrl.u32 %v1075, 7
          %v1077 = vsub.s32 0, %v1076
          %v1078 = vrot.slane %v1044, %v1077
          %v1080 = vmul.f32 %v1072, %v1078
          %v1081 = vmul.f32 %v1073, %v1078
          %v1083 = vlaneseq
          %v1084 = vshrl.u32 %v1083, 7
          %v1085 = vsub.s32 0, %v1084
          %v1086 = vrot.slane %v1045, %v1085
          %v1088 = vadd.f32 %v1080, %v1086
          %v1089 = vadd.f32 %v1081, %v1086
          %v1090 = vld [vmem:[%s942] sm:$0x1]
          %v1092 = vlaneseq
          %v1093 = vshrl.u32 %v1092, 7
          %v1094 = vsub.s32 0, %v1093
          %v1095 = vrot.slane %v1090, %v1094
          %v1097 = vadd.f32 %v1088, %v1095
          %v1098 = vadd.f32 %v1089, %v1095
          %v1099 = vmul.f32 %v1097, 5.656854
          %v1100 = vmul.f32 %v1098, 5.656854
          %v1101 = vld [vmem:[%s2] sm:$0xff]
          %v1102 = vld [vmem:[%s2 + $0x8] sm:$0xff]
          %v1103 = vadd.f32 %v1099, %v1101
          %v1104 = vadd.f32 %v1100, %v1102
          %1106 = vset.pattern.permute.xlu0 0
          %1107 = vperm.xlu0 %1106, %v977
          %v1108 = vpop.permute.xlu0 %1107
          %1111 = vset.pattern.permute.xlu0 0
          %1112 = vperm.xlu0 %1111, %v978
          %v1113 = vpop.permute.xlu0 %1112
          %v1115 = vmul.f32 %v1103, %v1108
          %v1116 = vmul.f32 %v1104, %v1113
          %1117 = vst.msk [vmem:[%s927] sm:$0xff] %vm1046, %v1115
          %1118 = vst.msk [vmem:[%s927 + $0x8] sm:$0xff] %vm1046, %v1116
          %v1119 = vlaneseq
          %v1120 = vshrl.u32 %v1119, 7
          %v1121 = vadd.s32 %v1120, 8
          %v1122 = vlaneseq
          %v1123 = vand.u32 %v1122, 127
          %v1124 = vsub.s32 %v1123, %v1120
          %v1125 = vsub.s32 %v1123, %v1121
          %vm1126 = vcmp.gt.s32.totalorder %v1124, 4294967291
          %v1127 = vsel %vm1126, %v1124, 4294967291
          %vm1128 = vcmp.gt.s32.totalorder %v1125, 4294967291
          %v1129 = vsel %vm1128, %v1125, 4294967291
          %vm1130 = vcmp.lt.s32.totalorder %v1127, 5
          %v1131 = vsel %vm1130, %v1127, 5
          %vm1132 = vcmp.lt.s32.totalorder %v1129, 5
          %v1133 = vsel %vm1132, %v1129, 5
          %v1134 = vcvt.s32.f32 %v1131
          %v1135 = vcvt.s32.f32 %v1133
          %vm1136 = vcmask 130048
          %1137 = vst.msk [vmem:[#allocation2] sm:$0xff] %vm1136, %v1134
          %1138 = vst.msk [vmem:[#allocation2 + $0x8] sm:$0xff] %vm1136, %v1135
        $region124: #{tpu_custom_call.1} parent=119 // pred_fallthru
          _
        %v1139 = vld [vmem:[%s927] sm:$0xff]
        %v1140 = vld [vmem:[%s927 + $0x8] sm:$0xff]
        %v1141 = vld [vmem:[#allocation2] sm:$0xff]
        %v1142 = vld [vmem:[#allocation2 + $0x8] sm:$0xff]
        %vm1143 = vcmp.eq.f32.partialorder %v1141, -4.0
        %vm1144 = vcmp.eq.f32.partialorder %v1142, -4.0
        %v1145 = vsel %vm1143, 1, 0
        %v1146 = vsel %vm1144, 1, 0
        %v1147 = vcvt.s32.f32 %v1145
        %v1148 = vcvt.s32.f32 %v1146
        %vm1149 = vcmp.eq.f32.partialorder %v1141, -3.0
        %vm1150 = vcmp.eq.f32.partialorder %v1142, -3.0
        %v1151 = vsel %vm1149, 1, 0
        %v1152 = vsel %vm1150, 1, 0
        %v1153 = vcvt.s32.f32 %v1151
        %v1154 = vcvt.s32.f32 %v1152
        %vm1155 = vcmp.eq.f32.partialorder %v1141, -2.0
        %vm1156 = vcmp.eq.f32.partialorder %v1142, -2.0
        %v1157 = vsel %vm1155, 1, 0
        %v1158 = vsel %vm1156, 1, 0
        %v1159 = vcvt.s32.f32 %v1157
        %v1160 = vcvt.s32.f32 %v1158
        %vm1161 = vcmp.eq.f32.partialorder %v1141, -1.0
        %vm1162 = vcmp.eq.f32.partialorder %v1142, -1.0
        %v1163 = vsel %vm1161, 1, 0
        %v1164 = vsel %vm1162, 1, 0
        %v1165 = vcvt.s32.f32 %v1163
        %v1166 = vcvt.s32.f32 %v1164
        %vm1167 = vcmp.eq.f32.partialorder %v1141, 0.0
        %vm1168 = vcmp.eq.f32.partialorder %v1142, 0.0
        %v1169 = vsel %vm1167, 1, 0
        %v1170 = vsel %vm1168, 1, 0
        %v1171 = vcvt.s32.f32 %v1169
        %v1172 = vcvt.s32.f32 %v1170
        %vm1173 = vcmp.eq.f32.partialorder %v1141, 1.0
        %vm1174 = vcmp.eq.f32.partialorder %v1142, 1.0
        %v1175 = vsel %vm1173, 1, 0
        %v1176 = vsel %vm1174, 1, 0
        %v1177 = vcvt.s32.f32 %v1175
        %v1178 = vcvt.s32.f32 %v1176
        %vm1179 = vcmp.eq.f32.partialorder %v1141, 2.0
        %vm1180 = vcmp.eq.f32.partialorder %v1142, 2.0
        %v1181 = vsel %vm1179, 1, 0
        %v1182 = vsel %vm1180, 1, 0
        %v1183 = vcvt.s32.f32 %v1181
        %v1184 = vcvt.s32.f32 %v1182
        %vm1185 = vcmp.eq.f32.partialorder %v1141, 3.0
        %vm1186 = vcmp.eq.f32.partialorder %v1142, 3.0
        %v1187 = vsel %vm1185, 1, 0
        %v1188 = vsel %vm1186, 1, 0
        %v1189 = vcvt.s32.f32 %v1187
        %v1190 = vcvt.s32.f32 %v1188
        %vm1191 = vcmp.eq.f32.partialorder %v1141, 4.0
        %vm1192 = vcmp.eq.f32.partialorder %v1142, 4.0
        %v1193 = vsel %vm1191, 1, 0
        %v1194 = vsel %vm1192, 1, 0
        %v1195 = vcvt.s32.f32 %v1193
        %v1196 = vcvt.s32.f32 %v1194
        %vm1197 = vcmp.gt.f32.partialorder %v979, 0.0
        %v1198 = vpack.c.bf16 %v1140, %v1139
        %s1199 = smul.u32 %s49, 24
        %s1200 = smul.addr %s1199, 4
        %s1201 = scalar_lea.vmem %s9, %s1200
        %v1202 = vld [vmem:[%s1201] sm:$0xff]
        %v1203 = vld [vmem:[%s1201 + $0x8] sm:$0xff]
        %v1204 = vld [vmem:[%s1201 + $0x10] sm:$0xff]
        %v1205 = vld [vmem:[%s1201 + $0x18] sm:$0xff]
        %v1206 = vld [vmem:[%s1201 + $0x20] sm:$0xff]
        %v1207 = vld [vmem:[%s1201 + $0x28] sm:$0xff]
        %v1208 = vld [vmem:[%s1201 + $0x30] sm:$0xff]
        %v1209 = vld [vmem:[%s1201 + $0x38] sm:$0xff]
        %v1210 = vld [vmem:[%s1201 + $0x40] sm:$0xff]
        %v1211 = vld [vmem:[%s1201 + $0x48] sm:$0xff]
        %v1212 = vld [vmem:[%s1201 + $0x50] sm:$0xff]
        %v1213 = vld [vmem:[%s1201 + $0x58] sm:$0xff]
        %v1214 = vld [vmem:[%s954] sm:$0x3f]
        %v1216 = vlaneseq
        %v1217 = vshrl.u32 %v1216, 7
        %v1218 = vsub.s32 0, %v1217
        %v1219 = vrot.slane %v1214, %v1218
        %v1220 = vlaneseq
        %v1221 = vshrl.u32 %v1220, 7
        %v1222 = vsub.s32 1, %v1221
        %v1223 = vrot.slane %v1214, %v1222
        %v1224 = vlaneseq
        %v1225 = vshrl.u32 %v1224, 7
        %v1226 = vsub.s32 2, %v1225
        %v1227 = vrot.slane %v1214, %v1226
        %v1228 = vlaneseq
        %v1229 = vshrl.u32 %v1228, 7
        %v1230 = vsub.s32 3, %v1229
        %v1231 = vrot.slane %v1214, %v1230
        %v1232 = vlaneseq
        %v1233 = vshrl.u32 %v1232, 7
        %v1234 = vsub.s32 4, %v1233
        %v1235 = vrot.slane %v1214, %v1234
        %v1236 = vlaneseq
        %v1237 = vshrl.u32 %v1236, 7
        %v1238 = vsub.s32 5, %v1237
        %v1239 = vrot.slane %v1214, %v1238
        %v1258 = vunpack.c.l.b16 %v1202
        %v1259 = vunpack.c.h.b16 %v1202
        %v1260 = vunpack.c.l.b16 %v1203
        %v1261 = vunpack.c.h.b16 %v1203
        %v1262 = vunpack.c.l.b16 %v1204
        %v1263 = vunpack.c.h.b16 %v1204
        %v1264 = vunpack.c.l.b16 %v1205
        %v1265 = vunpack.c.h.b16 %v1205
        %v1266 = vunpack.c.l.b16 %v1206
        %v1267 = vunpack.c.h.b16 %v1206
        %v1268 = vunpack.c.l.b16 %v1207
        %v1269 = vunpack.c.h.b16 %v1207
        %v1270 = vunpack.c.l.b16 %v1208
        %v1271 = vunpack.c.h.b16 %v1208
        %v1272 = vunpack.c.l.b16 %v1209
        %v1273 = vunpack.c.h.b16 %v1209
        %v1274 = vunpack.c.l.b16 %v1210
        %v1275 = vunpack.c.h.b16 %v1210
        %v1276 = vunpack.c.l.b16 %v1211
        %v1277 = vunpack.c.h.b16 %v1211
        %v1278 = vunpack.c.l.b16 %v1212
        %v1279 = vunpack.c.h.b16 %v1212
        %v1280 = vunpack.c.l.b16 %v1213
        %v1281 = vunpack.c.h.b16 %v1213
        %v1282 = vpack.c.b16 %v1264, %v1258
        %v1283 = vpack.c.b16 %v1265, %v1259
        %v1284 = vpack.c.b16 %v1266, %v1260
        %v1285 = vpack.c.b16 %v1267, %v1261
        %v1286 = vpack.c.b16 %v1268, %v1262
        %v1287 = vpack.c.b16 %v1269, %v1263
        %v1288 = vpack.c.b16 %v1276, %v1270
        %v1289 = vpack.c.b16 %v1277, %v1271
        %v1290 = vpack.c.b16 %v1278, %v1272
        %v1291 = vpack.c.b16 %v1279, %v1273
        %v1292 = vpack.c.b16 %v1280, %v1274
        %v1293 = vpack.c.b16 %v1281, %v1275
        %vm1306 = vcmask 261120
        %v1308 = vsel %vm1306, %v1198, 0
        %1310 = vmatprep.subr.bf16.mxu0 %v1283
        %1311 = vmatpush1.bf16.msra.mxu0 %v1282
        %1312 = vmatprep.subr.bf16.mxu0 %v1289
        %1313 = vmatpush1.bf16.msra.mxu0 %v1288
        %1314 = vmatprep.subr.bf16.mxu0 0
        %1315 = vmatpush1.bf16.msra.mxu0 0
        %1316 = vmatprep.subr.bf16.mxu0 0
        %1317 = vmatpush1.bf16.msra.mxu0 0
        %1318 = vmatprep.subr.bf16.mxu0 0
        %1319 = vmatpush1.bf16.msra.mxu0 0
        %1320 = vmatprep.subr.bf16.mxu0 0
        %1321 = vmatpush1.bf16.msra.mxu0 0
        %1322 = vmatprep.subr.bf16.mxu0 0
        %1323 = vmatpush1.bf16.msra.mxu0 0
        %1324 = vmatprep.subr.bf16.mxu0 0
        %1325 = vmatpush1.bf16.msra.mxu0 0
        %1326 = vmatprep.subr.bf16.mxu0 0
        %1327 = vmatpush1.bf16.msra.mxu0 0
        %1328 = vmatprep.subr.bf16.mxu0 0
        %1329 = vmatpush1.bf16.msra.mxu0 0
        %1330 = vmatprep.subr.bf16.mxu0 0
        %1331 = vmatpush1.bf16.msra.mxu0 0
        %1332 = vmatprep.subr.bf16.mxu0 0
        %1333 = vmatpush1.bf16.msra.mxu0 0
        %1334 = vmatprep.subr.bf16.mxu0 0
        %1335 = vmatpush1.bf16.msra.mxu0 0
        %1336 = vmatprep.subr.bf16.mxu0 0
        %1337 = vmatpush1.bf16.msra.mxu0 0
        %1338 = vmatprep.subr.bf16.mxu0 0
        %1339 = vmatpush1.bf16.msra.mxu0 0
        %1340 = vmatprep.subr.bf16.mxu0 0
        %1341 = vmatpush1.bf16.msra.mxu0 0
        %1342 = vmatprep.mubr.bf16.mxu0 0
        %1343 = vmatmul.mubr.bf16.gmra.mrb[0].mxu0 %v1308
        %v1344 = vpop.f32.mrb[0].mxu0
        %v1345 = vadd.f32 %v1219, %v1344
        %v1346 = vpop.f32.mrb[0].mxu0
        %v1347 = vadd.f32 %v1223, %v1346
        %v1348 = vpop.f32.mrb[0].mxu0
        %v1349 = vadd.f32 %v1219, %v1348
        %v1350 = vpop.f32.mrb[0].mxu0
        %v1351 = vadd.f32 %v1223, %v1350
        %1352 = vdwg.mxu0
        %1353 = vmatprep.subr.bf16.mxu0 %v1285
        %1354 = vmatpush1.bf16.msra.mxu0 %v1284
        %1355 = vmatprep.subr.bf16.mxu0 %v1291
        %1356 = vmatpush1.bf16.msra.mxu0 %v1290
        %1357 = vmatprep.subr.bf16.mxu0 0
        %1358 = vmatpush1.bf16.msra.mxu0 0
        %1359 = vmatprep.subr.bf16.mxu0 0
        %1360 = vmatpush1.bf16.msra.mxu0 0
        %1361 = vmatprep.subr.bf16.mxu0 0
        %1362 = vmatpush1.bf16.msra.mxu0 0
        %1363 = vmatprep.subr.bf16.mxu0 0
        %1364 = vmatpush1.bf16.msra.mxu0 0
        %1365 = vmatprep.subr.bf16.mxu0 0
        %1366 = vmatpush1.bf16.msra.mxu0 0
        %1367 = vmatprep.subr.bf16.mxu0 0
        %1368 = vmatpush1.bf16.msra.mxu0 0
        %1369 = vmatprep.subr.bf16.mxu0 0
        %1370 = vmatpush1.bf16.msra.mxu0 0
        %1371 = vmatprep.subr.bf16.mxu0 0
        %1372 = vmatpush1.bf16.msra.mxu0 0
        %1373 = vmatprep.subr.bf16.mxu0 0
        %1374 = vmatpush1.bf16.msra.mxu0 0
        %1375 = vmatprep.subr.bf16.mxu0 0
        %1376 = vmatpush1.bf16.msra.mxu0 0
        %1377 = vmatprep.subr.bf16.mxu0 0
        %1378 = vmatpush1.bf16.msra.mxu0 0
        %1379 = vmatprep.subr.bf16.mxu0 0
        %1380 = vmatpush1.bf16.msra.mxu0 0
        %1381 = vmatprep.subr.bf16.mxu0 0
        %1382 = vmatpush1.bf16.msra.mxu0 0
        %1383 = vmatprep.subr.bf16.mxu0 0
        %1384 = vmatpush1.bf16.msra.mxu0 0
        %1385 = vmatprep.mubr.bf16.mxu0 0
        %1386 = vmatmul.mubr.bf16.gmra.mrb[0].mxu0 %v1308
        %v1387 = vpop.f32.mrb[0].mxu0
        %v1388 = vadd.f32 %v1227, %v1387
        %v1389 = vpop.f32.mrb[0].mxu0
        %v1390 = vadd.f32 %v1231, %v1389
        %v1391 = vpop.f32.mrb[0].mxu0
        %v1392 = vadd.f32 %v1227, %v1391
        %v1393 = vpop.f32.mrb[0].mxu0
        %v1394 = vadd.f32 %v1231, %v1393
        %1395 = vdwg.mxu0
        %1396 = vmatprep.subr.bf16.mxu0 %v1287
        %1397 = vmatpush1.bf16.msra.mxu0 %v1286
        %1398 = vmatprep.subr.bf16.mxu0 %v1293
        %1399 = vmatpush1.bf16.msra.mxu0 %v1292
        %1400 = vmatprep.subr.bf16.mxu0 0
        %1401 = vmatpush1.bf16.msra.mxu0 0
        %1402 = vmatprep.subr.bf16.mxu0 0
        %1403 = vmatpush1.bf16.msra.mxu0 0
        %1404 = vmatprep.subr.bf16.mxu0 0
        %1405 = vmatpush1.bf16.msra.mxu0 0
        %1406 = vmatprep.subr.bf16.mxu0 0
        %1407 = vmatpush1.bf16.msra.mxu0 0
        %1408 = vmatprep.subr.bf16.mxu0 0
        %1409 = vmatpush1.bf16.msra.mxu0 0
        %1410 = vmatprep.subr.bf16.mxu0 0
        %1411 = vmatpush1.bf16.msra.mxu0 0
        %1412 = vmatprep.subr.bf16.mxu0 0
        %1413 = vmatpush1.bf16.msra.mxu0 0
        %1414 = vmatprep.subr.bf16.mxu0 0
        %1415 = vmatpush1.bf16.msra.mxu0 0
        %1416 = vmatprep.subr.bf16.mxu0 0
        %1417 = vmatpush1.bf16.msra.mxu0 0
        %1418 = vmatprep.subr.bf16.mxu0 0
        %1419 = vmatpush1.bf16.msra.mxu0 0
        %1420 = vmatprep.subr.bf16.mxu0 0
        %1421 = vmatpush1.bf16.msra.mxu0 0
        %1422 = vmatprep.subr.bf16.mxu0 0
        %1423 = vmatpush1.bf16.msra.mxu0 0
        %1424 = vmatprep.subr.bf16.mxu0 0
        %1425 = vmatpush1.bf16.msra.mxu0 0
        %1426 = vmatprep.subr.bf16.mxu0 0
        %1427 = vmatpush1.bf16.msra.mxu0 0
        %1428 = vmatprep.mubr.bf16.mxu0 0
        %1429 = vmatmul.mubr.bf16.gmra.mrb[0].mxu0 %v1308
        %v1430 = vpop.f32.mrb[0].mxu0
        %v1431 = vadd.f32 %v1235, %v1430
        %v1432 = vpop.f32.mrb[0].mxu0
        %v1433 = vadd.f32 %v1239, %v1432
        %v1434 = vpop.f32.mrb[0].mxu0
        %v1435 = vadd.f32 %v1235, %v1434
        %v1436 = vpop.f32.mrb[0].mxu0
        %v1437 = vadd.f32 %v1239, %v1436
        %1438 = vdwg.mxu0
        %s1439 = smul.u32 %s49, 16
        %s1440 = smul.addr %s1439, 4
        %s1441 = scalar_lea.vmem %s11, %s1440
        %v1442 = vld [vmem:[%s1441] sm:$0xf]
        %v1443 = vld [vmem:[%s1441 + $0x4] sm:$0xf]
        %v1444 = vld [vmem:[%s1441 + $0x8] sm:$0xf]
        %v1445 = vld [vmem:[%s1441 + $0xc] sm:$0xf]
        %v1446 = vld [vmem:[%s1441 + $0x10] sm:$0xf]
        %v1447 = vld [vmem:[%s1441 + $0x14] sm:$0xf]
        %v1448 = vld [vmem:[%s1441 + $0x18] sm:$0xf]
        %v1449 = vld [vmem:[%s1441 + $0x1c] sm:$0xf]
        %v1450 = vld [vmem:[%s1441 + $0x20] sm:$0xf]
        %v1451 = vld [vmem:[%s1441 + $0x24] sm:$0xf]
        %v1452 = vld [vmem:[%s1441 + $0x28] sm:$0xf]
        %v1453 = vld [vmem:[%s1441 + $0x2c] sm:$0xf]
        %v1454 = vld [vmem:[%s1441 + $0x30] sm:$0xf]
        %v1455 = vld [vmem:[%s1441 + $0x34] sm:$0xf]
        %v1456 = vld [vmem:[%s1441 + $0x38] sm:$0xf]
        %v1457 = vld [vmem:[%s1441 + $0x3c] sm:$0xf]
        %s1458 = scalar_lea.vmem %s12, %s1439
        %v1459 = vld [vmem:[%s1458] sm:$0xff]
        %v1460 = vld [vmem:[%s1458 + $0x8] sm:$0xff]
        %s1461 = smul.u32 %s49, 32
        %s1462 = smul.addr %s1461, 4
        %s1463 = scalar_lea.vmem %s10, %s1462
        %v1464 = vld [vmem:[%s1463] sm:$0xf]
        %v1465 = vld [vmem:[%s1463 + $0x4] sm:$0xf]
        %v1466 = vld [vmem:[%s1463 + $0x8] sm:$0xf]
        %v1467 = vld [vmem:[%s1463 + $0xc] sm:$0xf]
        %v1468 = vld [vmem:[%s1463 + $0x10] sm:$0xf]
        %v1469 = vld [vmem:[%s1463 + $0x14] sm:$0xf]
        %v1470 = vld [vmem:[%s1463 + $0x18] sm:$0xf]
        %v1471 = vld [vmem:[%s1463 + $0x1c] sm:$0xf]
        %v1472 = vld [vmem:[%s1463 + $0x20] sm:$0xf]
        %v1473 = vld [vmem:[%s1463 + $0x24] sm:$0xf]
        %v1474 = vld [vmem:[%s1463 + $0x28] sm:$0xf]
        %v1475 = vld [vmem:[%s1463 + $0x2c] sm:$0xf]
        %v1476 = vld [vmem:[%s1463 + $0x30] sm:$0xf]
        %v1477 = vld [vmem:[%s1463 + $0x34] sm:$0xf]
        %v1478 = vld [vmem:[%s1463 + $0x38] sm:$0xf]
        %v1479 = vld [vmem:[%s1463 + $0x3c] sm:$0xf]
        %v1480 = vld [vmem:[%s1463 + $0x40] sm:$0xf]
        %v1481 = vld [vmem:[%s1463 + $0x44] sm:$0xf]
        %v1482 = vld [vmem:[%s1463 + $0x48] sm:$0xf]
        %v1483 = vld [vmem:[%s1463 + $0x4c] sm:$0xf]
        %v1484 = vld [vmem:[%s1463 + $0x50] sm:$0xf]
        %v1485 = vld [vmem:[%s1463 + $0x54] sm:$0xf]
        %v1486 = vld [vmem:[%s1463 + $0x58] sm:$0xf]
        %v1487 = vld [vmem:[%s1463 + $0x5c] sm:$0xf]
        %v1488 = vld [vmem:[%s1463 + $0x60] sm:$0xf]
        %v1489 = vld [vmem:[%s1463 + $0x64] sm:$0xf]
        %v1490 = vld [vmem:[%s1463 + $0x68] sm:$0xf]
        %v1491 = vld [vmem:[%s1463 + $0x6c] sm:$0xf]
        %v1492 = vld [vmem:[%s1463 + $0x70] sm:$0xf]
        %v1493 = vld [vmem:[%s1463 + $0x74] sm:$0xf]
        %v1494 = vld [vmem:[%s1463 + $0x78] sm:$0xf]
        %v1495 = vld [vmem:[%s1463 + $0x7c] sm:$0xf]
        %v1496 = vld [vmem:[%s957] sm:$0x1]
        %v1498 = vlaneseq
        %v1499 = vshrl.u32 %v1498, 7
        %v1500 = vsub.s32 0, %v1499
        %v1501 = vrot.slane %v1496, %v1500
        %v1503 = vadd.f32 %v1501, 0.0
        %v1504 = vmul.f32 %v1345, 0.25
        %v1505 = vmul.f32 %v1349, 0.25
        %v1506 = vpack.c.bf16 %v1505, %v1504
        %v1507 = vpack.c.bf16 %v1392, %v1388
        %v1508 = vpack.c.bf16 %v1435, %v1431
        %v1525 = vunpack.c.l.b16 %v1442
        %v1526 = vunpack.c.l.b16 %v1443
        %v1527 = vunpack.c.l.b16 %v1444
        %v1528 = vunpack.c.l.b16 %v1445
        %v1529 = vunpack.c.l.b16 %v1446
        %v1530 = vunpack.c.l.b16 %v1447
        %v1531 = vunpack.c.l.b16 %v1448
        %v1532 = vunpack.c.l.b16 %v1449
        %v1533 = vunpack.c.l.b16 %v1450
        %v1534 = vunpack.c.l.b16 %v1451
        %v1535 = vunpack.c.l.b16 %v1452
        %v1536 = vunpack.c.l.b16 %v1453
        %v1537 = vunpack.c.l.b16 %v1454
        %v1538 = vunpack.c.l.b16 %v1455
        %v1539 = vunpack.c.l.b16 %v1456
        %v1540 = vunpack.c.l.b16 %v1457
        %v1541 = vpack.c.b16 %v1526, %v1525
        %v1542 = vpack.c.b16 %v1528, %v1527
        %v1543 = vpack.c.b16 %v1530, %v1529
        %v1544 = vpack.c.b16 %v1532, %v1531
        %v1545 = vpack.c.b16 %v1534, %v1533
        %v1546 = vpack.c.b16 %v1536, %v1535
        %v1547 = vpack.c.b16 %v1538, %v1537
        %v1548 = vpack.c.b16 %v1540, %v1539
        %1557 = vmatprep.subr.bf16.mxu0 0
        %1558 = vmatpush1.bf16.msra.mxu0 %v1541
        %1559 = vmatprep.subr.bf16.mxu0 0
        %1560 = vmatpush1.bf16.msra.mxu0 %v1542
        %1561 = vmatprep.subr.bf16.mxu0 0
        %1562 = vmatpush1.bf16.msra.mxu0 %v1543
        %1563 = vmatprep.subr.bf16.mxu0 0
        %1564 = vmatpush1.bf16.msra.mxu0 %v1544
        %1565 = vmatprep.subr.bf16.mxu0 0
        %1566 = vmatpush1.bf16.msra.mxu0 %v1545
        %1567 = vmatprep.subr.bf16.mxu0 0
        %1568 = vmatpush1.bf16.msra.mxu0 %v1546
        %1569 = vmatprep.subr.bf16.mxu0 0
        %1570 = vmatpush1.bf16.msra.mxu0 %v1547
        %1571 = vmatprep.subr.bf16.mxu0 0
        %1572 = vmatpush1.bf16.msra.mxu0 %v1548
        %1573 = vmatprep.subr.bf16.mxu0 0
        %1574 = vmatpush1.bf16.msra.mxu0 0
        %1575 = vmatprep.subr.bf16.mxu0 0
        %1576 = vmatpush1.bf16.msra.mxu0 0
        %1577 = vmatprep.subr.bf16.mxu0 0
        %1578 = vmatpush1.bf16.msra.mxu0 0
        %1579 = vmatprep.subr.bf16.mxu0 0
        %1580 = vmatpush1.bf16.msra.mxu0 0
        %1581 = vmatprep.subr.bf16.mxu0 0
        %1582 = vmatpush1.bf16.msra.mxu0 0
        %1583 = vmatprep.subr.bf16.mxu0 0
        %1584 = vmatpush1.bf16.msra.mxu0 0
        %1585 = vmatprep.subr.bf16.mxu0 0
        %1586 = vmatpush1.bf16.msra.mxu0 0
        %1587 = vmatprep.subr.bf16.mxu0 0
        %1588 = vmatpush1.bf16.msra.mxu0 0
        %1589 = vmatprep.mubr.bf16.mxu0 0
        %1590 = vmatmul.mubr.bf16.gmra.mrb[0].mxu0 %v1506
        %v1591 = vpop.f32.mrb[0].mxu0
        %v1592 = vadd.f32 0.0, %v1591
        %v1593 = vpop.f32.mrb[0].mxu0
        %v1594 = vpop.f32.mrb[0].mxu0
        %v1595 = vadd.f32 0.0, %v1594
        %v1596 = vpop.f32.mrb[0].mxu0
        %1597 = vdwg.mxu0
        %1599 = vset.pattern.permute.xlu0 0
        %1600 = vperm.xlu0 %1599, %v1592
        %v1601 = vpop.permute.xlu0 %1600
        %1604 = vset.pattern.permute.xlu0 0
        %1605 = vperm.xlu0 %1604, %v1595
        %v1606 = vpop.permute.xlu0 %1605
        %v1608 = vmul.f32 %v1147, %v1601
        %v1609 = vmul.f32 %v1148, %v1606
        %1610 = vset.pattern.permute.xlu0 1
        %1611 = vperm.xlu0 %1610, %v1592
        %v1612 = vpop.permute.xlu0 %1611
        %1614 = vset.pattern.permute.xlu0 1
        %1615 = vperm.xlu0 %1614, %v1595
        %v1616 = vpop.permute.xlu0 %1615
        %v1618 = vmul.f32 %v1153, %v1612
        %v1619 = vmul.f32 %v1154, %v1616
        %v1620 = vadd.f32 %v1608, %v1618
        %v1621 = vadd.f32 %v1609, %v1619
        %1622 = vset.pattern.permute.xlu0 2
        %1623 = vperm.xlu0 %1622, %v1592
        %v1624 = vpop.permute.xlu0 %1623
        %1626 = vset.pattern.permute.xlu0 2
        %1627 = vperm.xlu0 %1626, %v1595
        %v1628 = vpop.permute.xlu0 %1627
        %v1630 = vmul.f32 %v1159, %v1624
        %v1631 = vmul.f32 %v1160, %v1628
        %v1632 = vadd.f32 %v1620, %v1630
        %v1633 = vadd.f32 %v1621, %v1631
        %1634 = vset.pattern.permute.xlu0 3
        %1635 = vperm.xlu0 %1634, %v1592
        %v1636 = vpop.permute.xlu0 %1635
        %1638 = vset.pattern.permute.xlu0 3
        %1639 = vperm.xlu0 %1638, %v1595
        %v1640 = vpop.permute.xlu0 %1639
        %v1642 = vmul.f32 %v1165, %v1636
        %v1643 = vmul.f32 %v1166, %v1640
        %v1644 = vadd.f32 %v1632, %v1642
        %v1645 = vadd.f32 %v1633, %v1643
        %1646 = vset.pattern.permute.xlu0 4
        %1647 = vperm.xlu0 %1646, %v1592
        %v1648 = vpop.permute.xlu0 %1647
        %1650 = vset.pattern.permute.xlu0 4
        %1651 = vperm.xlu0 %1650, %v1595
        %v1652 = vpop.permute.xlu0 %1651
        %v1654 = vmul.f32 %v1171, %v1648
        %v1655 = vmul.f32 %v1172, %v1652
        %v1656 = vadd.f32 %v1644, %v1654
        %v1657 = vadd.f32 %v1645, %v1655
        %1658 = vset.pattern.permute.xlu0 5
        %1659 = vperm.xlu0 %1658, %v1592
        %v1660 = vpop.permute.xlu0 %1659
        %1662 = vset.pattern.permute.xlu0 5
        %1663 = vperm.xlu0 %1662, %v1595
        %v1664 = vpop.permute.xlu0 %1663
        %v1666 = vmul.f32 %v1177, %v1660
        %v1667 = vmul.f32 %v1178, %v1664
        %v1668 = vadd.f32 %v1656, %v1666
        %v1669 = vadd.f32 %v1657, %v1667
        %1670 = vset.pattern.permute.xlu0 6
        %1671 = vperm.xlu0 %1670, %v1592
        %v1672 = vpop.permute.xlu0 %1671
        %1674 = vset.pattern.permute.xlu0 6
        %1675 = vperm.xlu0 %1674, %v1595
        %v1676 = vpop.permute.xlu0 %1675
        %v1678 = vmul.f32 %v1183, %v1672
        %v1679 = vmul.f32 %v1184, %v1676
        %v1680 = vadd.f32 %v1668, %v1678
        %v1681 = vadd.f32 %v1669, %v1679
        %1682 = vset.pattern.permute.xlu0 7
        %1683 = vperm.xlu0 %1682, %v1592
        %v1684 = vpop.permute.xlu0 %1683
        %1686 = vset.pattern.permute.xlu0 7
        %1687 = vperm.xlu0 %1686, %v1595
        %v1688 = vpop.permute.xlu0 %1687
        %v1690 = vmul.f32 %v1189, %v1684
        %v1691 = vmul.f32 %v1190, %v1688
        %v1692 = vadd.f32 %v1680, %v1690
        %v1693 = vadd.f32 %v1681, %v1691
        %1694 = vset.pattern.permute.xlu0 8
        %1695 = vperm.xlu0 %1694, %v1592
        %v1696 = vpop.permute.xlu0 %1695
        %1698 = vset.pattern.permute.xlu0 8
        %1699 = vperm.xlu0 %1698, %v1595
        %v1700 = vpop.permute.xlu0 %1699
        %v1702 = vmul.f32 %v1195, %v1696
        %v1703 = vmul.f32 %v1196, %v1700
        %v1704 = vadd.f32 %v1692, %v1702
        %v1705 = vadd.f32 %v1693, %v1703
        %1706 = vmatprep.subr.bf16.mxu0 0
        %1707 = vmatpush1.bf16.xpose.msra.mxu0 %v1507
        %1708 = vmatprep.subr.bf16.mxu0 0
        %1709 = vmatpush1.bf16.xpose.msra.mxu0 0
        %1710 = vmatprep.subr.bf16.mxu0 0
        %1711 = vmatpush1.bf16.xpose.msra.mxu0 0
        %1712 = vmatprep.subr.bf16.mxu0 0
        %1713 = vmatpush1.bf16.xpose.msra.mxu0 0
        %1714 = vmatprep.subr.bf16.mxu0 0
        %1715 = vmatpush1.bf16.xpose.msra.mxu0 0
        %1716 = vmatprep.subr.bf16.mxu0 0
        %1717 = vmatpush1.bf16.xpose.msra.mxu0 0
        %1718 = vmatprep.subr.bf16.mxu0 0
        %1719 = vmatpush1.bf16.xpose.msra.mxu0 0
        %1720 = vmatprep.subr.bf16.mxu0 0
        %1721 = vmatpush1.bf16.xpose.msra.mxu0 0
        %1722 = vmatprep.subr.bf16.mxu0 0
        %1723 = vmatpush1.bf16.xpose.msra.mxu0 0
        %1724 = vmatprep.subr.bf16.mxu0 0
        %1725 = vmatpush1.bf16.xpose.msra.mxu0 0
        %1726 = vmatprep.subr.bf16.mxu0 0
        %1727 = vmatpush1.bf16.xpose.msra.mxu0 0
        %1728 = vmatprep.subr.bf16.mxu0 0
        %1729 = vmatpush1.bf16.xpose.msra.mxu0 0
        %1730 = vmatprep.subr.bf16.mxu0 0
        %1731 = vmatpush1.bf16.xpose.msra.mxu0 0
        %1732 = vmatprep.subr.bf16.mxu0 0
        %1733 = vmatpush1.bf16.xpose.msra.mxu0 0
        %1734 = vmatprep.subr.bf16.mxu0 0
        %1735 = vmatpush1.bf16.xpose.msra.mxu0 0
        %1736 = vmatprep.subr.bf16.mxu0 0
        %1737 = vmatpush1.bf16.xpose.msra.mxu0 0
        %1738 = vmatprep.mubr.bf16.mxu0 0
        %1739 = vmatmul.mubr.bf16.gmra.mrb[0].mxu0 %v1506
        %v1740 = vpop.f32.mrb[0].mxu0
        %v1741 = vadd.f32 %v1704, %v1740
        %v1742 = vpop.f32.mrb[0].mxu0
        %v1743 = vpop.f32.mrb[0].mxu0
        %v1744 = vadd.f32 %v1705, %v1743
        %v1745 = vpop.f32.mrb[0].mxu0
        %1746 = vdwg.mxu0
        %v1747 = vsel %vm1197, 1, 0
        %v1748 = vlaneseq
        %v1749 = vshrl.u32 %v1748, 7
        %v1750 = vsub.s32 0, %v1749
        %v1751 = vrot.slane %v1747, %v1750
        %vm1752 = vcmp.eq.s32.totalorder %v1751, 1
        %v1753 = vsel %vm1752, %v1741, -10000.0
        %v1754 = vsel %vm1752, %v1744, -10000.0
        %vm1755 = vcmask 130048
        %v1756 = vsel %vm1755, %v1753, -inf
        %1757 = vmax.xlane.f32.xlu0 %v1756
        %v1758 = vpop.xlane.xlu0 %1757
        %v1759 = vsel %vm1755, %v1754, -inf
        %1760 = vmax.xlane.f32.xlu0 %v1759
        %v1761 = vpop.xlane.xlu0 %1760
        %v1762 = vsub.f32 %v1753, %v1758
        %v1763 = vsub.f32 %v1754, %v1761
        %v1764 = vmul.f32 %v1762, 1.442695
        %v1765 = vpow.pop %v1764
        %v1766 = vmul.f32 %v1763, 1.442695
        %v1767 = vpow.pop %v1766
        %v1768 = vsel %vm1755, %v1765, 0.0
        %1769 = vadd.xlane.f32.xlu0 %v1768
        %v1770 = vpop.xlane.xlu0 %1769
        %v1771 = vsel %vm1755, %v1767, 0.0
        %1772 = vadd.xlane.f32.xlu0 %v1771
        %v1773 = vpop.xlane.xlu0 %1772
        %v1774 = vrcp.pop %v1770
        %v1775 = vrcp.pop %v1773
        %v1776 = vmul.f32 %v1765, %v1774
        %v1777 = vmul.f32 %v1767, %v1775
        %v1778 = vpack.c.bf16 %v1777, %v1776
        %v1779 = vmul.f32 %v1776, %v1147
        %v1780 = vmul.f32 %v1777, %v1148
        %v1781 = vsel %vm1755, %v1779, 0.0
        %1782 = vadd.xlane.f32.xlu0 %v1781
        %v1783 = vpop.xlane.xlu0 %1782
        %v1784 = vsel %vm1755, %v1780, 0.0
        %1785 = vadd.xlane.f32.xlu0 %v1784
        %v1786 = vpop.xlane.xlu0 %1785
        %v1787 = vlaneseq
        %v1788 = vshrl.u32 %v1787, 7
        %v1789 = vsub.s32 0, %v1788
        %v1790 = vrot.slane %v1459, %v1789
        %v1791 = vmul.f32 %v1783, %v1790
        %v1792 = vmul.f32 %v1786, %v1790
        %v1794 = vsel %vm1755, %v1778, 0
        %1796 = vmatprep.subr.bf16.mxu0 0
        %1797 = vmatpush1.bf16.msra.mxu0 %v1508
        %1798 = vmatprep.subr.bf16.mxu0 0
        %1799 = vmatpush1.bf16.msra.mxu0 0
        %1800 = vmatprep.subr.bf16.mxu0 0
        %1801 = vmatpush1.bf16.msra.mxu0 0
        %1802 = vmatprep.subr.bf16.mxu0 0
        %1803 = vmatpush1.bf16.msra.mxu0 0
        %1804 = vmatprep.subr.bf16.mxu0 0
        %1805 = vmatpush1.bf16.msra.mxu0 0
        %1806 = vmatprep.subr.bf16.mxu0 0
        %1807 = vmatpush1.bf16.msra.mxu0 0
        %1808 = vmatprep.subr.bf16.mxu0 0
        %1809 = vmatpush1.bf16.msra.mxu0 0
        %1810 = vmatprep.subr.bf16.mxu0 0
        %1811 = vmatpush1.bf16.msra.mxu0 0
        %1812 = vmatprep.subr.bf16.mxu0 0
        %1813 = vmatpush1.bf16.msra.mxu0 0
        %1814 = vmatprep.subr.bf16.mxu0 0
        %1815 = vmatpush1.bf16.msra.mxu0 0
        %1816 = vmatprep.subr.bf16.mxu0 0
        %1817 = vmatpush1.bf16.msra.mxu0 0
        %1818 = vmatprep.subr.bf16.mxu0 0
        %1819 = vmatpush1.bf16.msra.mxu0 0
        %1820 = vmatprep.subr.bf16.mxu0 0
        %1821 = vmatpush1.bf16.msra.mxu0 0
        %1822 = vmatprep.subr.bf16.mxu0 0
        %1823 = vmatpush1.bf16.msra.mxu0 0
        %1824 = vmatprep.subr.bf16.mxu0 0
        %1825 = vmatpush1.bf16.msra.mxu0 0
        %1826 = vmatprep.subr.bf16.mxu0 0
        %1827 = vmatpush1.bf16.msra.mxu0 0
        %1828 = vmatprep.mubr.bf16.mxu0 0
        %1829 = vmatmul.mubr.bf16.gmra.mrb[0].mxu0 %v1794
        %v1830 = vpop.f32.mrb[0].mxu0
        %v1831 = vadd.f32 %v1791, %v1830
        %v1832 = vpop.f32.mrb[0].mxu0
        %v1833 = vpop.f32.mrb[0].mxu0
        %v1834 = vadd.f32 %v1792, %v1833
        %v1835 = vpop.f32.mrb[0].mxu0
        %1836 = vdwg.mxu0
        %v1837 = vmul.f32 %v1776, %v1153
        %v1838 = vmul.f32 %v1777, %v1154
        %v1839 = vsel %vm1755, %v1837, 0.0
        %1840 = vadd.xlane.f32.xlu0 %v1839
        %v1841 = vpop.xlane.xlu0 %1840
        %v1842 = vsel %vm1755, %v1838, 0.0
        %1843 = vadd.xlane.f32.xlu0 %v1842
        %v1844 = vpop.xlane.xlu0 %1843
        %v1845 = vlaneseq
        %v1846 = vshrl.u32 %v1845, 7
        %v1847 = vsub.s32 1, %v1846
        %v1848 = vrot.slane %v1459, %v1847
        %v1849 = vmul.f32 %v1841, %v1848
        %v1850 = vmul.f32 %v1844, %v1848
        %v1851 = vadd.f32 %v1831, %v1849
        %v1852 = vadd.f32 %v1834, %v1850
        %v1853 = vmul.f32 %v1776, %v1159
        %v1854 = vmul.f32 %v1777, %v1160
        %v1855 = vsel %vm1755, %v1853, 0.0
        %1856 = vadd.xlane.f32.xlu0 %v1855
        %v1857 = vpop.xlane.xlu0 %1856
        %v1858 = vsel %vm1755, %v1854, 0.0
        %1859 = vadd.xlane.f32.xlu0 %v1858
        %v1860 = vpop.xlane.xlu0 %1859
        %v1861 = vlaneseq
        %v1862 = vshrl.u32 %v1861, 7
        %v1863 = vsub.s32 2, %v1862
        %v1864 = vrot.slane %v1459, %v1863
        %v1865 = vmul.f32 %v1857, %v1864
        %v1866 = vmul.f32 %v1860, %v1864
        %v1867 = vadd.f32 %v1851, %v1865
        %v1868 = vadd.f32 %v1852, %v1866
        %v1869 = vmul.f32 %v1776, %v1165
        %v1870 = vmul.f32 %v1777, %v1166
        %v1871 = vsel %vm1755, %v1869, 0.0
        %1872 = vadd.xlane.f32.xlu0 %v1871
        %v1873 = vpop.xlane.xlu0 %1872
        %v1874 = vsel %vm1755, %v1870, 0.0
        %1875 = vadd.xlane.f32.xlu0 %v1874
        %v1876 = vpop.xlane.xlu0 %1875
        %v1877 = vlaneseq
        %v1878 = vshrl.u32 %v1877, 7
        %v1879 = vsub.s32 3, %v1878
        %v1880 = vrot.slane %v1459, %v1879
        %v1881 = vmul.f32 %v1873, %v1880
        %v1882 = vmul.f32 %v1876, %v1880
        %v1883 = vadd.f32 %v1867, %v1881
        %v1884 = vadd.f32 %v1868, %v1882
        %v1885 = vmul.f32 %v1776, %v1171
        %v1886 = vmul.f32 %v1777, %v1172
        %v1887 = vsel %vm1755, %v1885, 0.0
        %1888 = vadd.xlane.f32.xlu0 %v1887
        %v1889 = vpop.xlane.xlu0 %1888
        %v1890 = vsel %vm1755, %v1886, 0.0
        %1891 = vadd.xlane.f32.xlu0 %v1890
        %v1892 = vpop.xlane.xlu0 %1891
        %v1893 = vlaneseq
        %v1894 = vshrl.u32 %v1893, 7
        %v1895 = vsub.s32 4, %v1894
        %v1896 = vrot.slane %v1459, %v1895
        %v1897 = vmul.f32 %v1889, %v1896
        %v1898 = vmul.f32 %v1892, %v1896
        %v1899 = vadd.f32 %v1883, %v1897
        %v1900 = vadd.f32 %v1884, %v1898
        %v1901 = vmul.f32 %v1776, %v1177
        %v1902 = vmul.f32 %v1777, %v1178
        %v1903 = vsel %vm1755, %v1901, 0.0
        %1904 = vadd.xlane.f32.xlu0 %v1903
        %v1905 = vpop.xlane.xlu0 %1904
        %v1906 = vsel %vm1755, %v1902, 0.0
        %1907 = vadd.xlane.f32.xlu0 %v1906
        %v1908 = vpop.xlane.xlu0 %1907
        %v1909 = vlaneseq
        %v1910 = vshrl.u32 %v1909, 7
        %v1911 = vsub.s32 5, %v1910
        %v1912 = vrot.slane %v1459, %v1911
        %v1913 = vmul.f32 %v1905, %v1912
        %v1914 = vmul.f32 %v1908, %v1912
        %v1915 = vadd.f32 %v1899, %v1913
        %v1916 = vadd.f32 %v1900, %v1914
        %v1917 = vmul.f32 %v1776, %v1183
        %v1918 = vmul.f32 %v1777, %v1184
        %v1919 = vsel %vm1755, %v1917, 0.0
        %1920 = vadd.xlane.f32.xlu0 %v1919
        %v1921 = vpop.xlane.xlu0 %1920
        %v1922 = vsel %vm1755, %v1918, 0.0
        %1923 = vadd.xlane.f32.xlu0 %v1922
        %v1924 = vpop.xlane.xlu0 %1923
        %v1925 = vlaneseq
        %v1926 = vshrl.u32 %v1925, 7
        %v1927 = vsub.s32 6, %v1926
        %v1928 = vrot.slane %v1459, %v1927
        %v1929 = vmul.f32 %v1921, %v1928
        %v1930 = vmul.f32 %v1924, %v1928
        %v1931 = vadd.f32 %v1915, %v1929
        %v1932 = vadd.f32 %v1916, %v1930
        %v1933 = vmul.f32 %v1776, %v1189
        %v1934 = vmul.f32 %v1777, %v1190
        %v1935 = vsel %vm1755, %v1933, 0.0
        %1936 = vadd.xlane.f32.xlu0 %v1935
        %v1937 = vpop.xlane.xlu0 %1936
        %v1938 = vsel %vm1755, %v1934, 0.0
        %1939 = vadd.xlane.f32.xlu0 %v1938
        %v1940 = vpop.xlane.xlu0 %1939
        %v1941 = vlaneseq
        %v1942 = vshrl.u32 %v1941, 7
        %v1943 = vsub.s32 7, %v1942
        %v1944 = vrot.slane %v1459, %v1943
        %v1945 = vmul.f32 %v1937, %v1944
        %v1946 = vmul.f32 %v1940, %v1944
        %v1947 = vadd.f32 %v1931, %v1945
        %v1948 = vadd.f32 %v1932, %v1946
        %v1949 = vmul.f32 %v1776, %v1195
        %v1950 = vmul.f32 %v1777, %v1196
        %v1951 = vsel %vm1755, %v1949, 0.0
        %1952 = vadd.xlane.f32.xlu0 %v1951
        %v1953 = vpop.xlane.xlu0 %1952
        %v1954 = vsel %vm1755, %v1950, 0.0
        %1955 = vadd.xlane.f32.xlu0 %v1954
        %v1956 = vpop.xlane.xlu0 %1955
        %v1957 = vlaneseq
        %v1958 = vshrl.u32 %v1957, 7
        %v1959 = vsub.s32 0, %v1958
        %v1960 = vrot.slane %v1460, %v1959
        %v1961 = vmul.f32 %v1953, %v1960
        %v1962 = vmul.f32 %v1956, %v1960
        %v1963 = vadd.f32 %v1947, %v1961
        %v1964 = vadd.f32 %v1948, %v1962
        %v1965 = vpack.c.bf16 %v1964, %v1963
        %v1982 = vunpack.c.l.b16 %v1464
        %v1983 = vunpack.c.l.b16 %v1465
        %v1984 = vunpack.c.l.b16 %v1466
        %v1985 = vunpack.c.l.b16 %v1467
        %v1986 = vunpack.c.l.b16 %v1468
        %v1987 = vunpack.c.l.b16 %v1469
        %v1988 = vunpack.c.l.b16 %v1470
        %v1989 = vunpack.c.l.b16 %v1471
        %v1990 = vunpack.c.l.b16 %v1472
        %v1991 = vunpack.c.l.b16 %v1473
        %v1992 = vunpack.c.l.b16 %v1474
        %v1993 = vunpack.c.l.b16 %v1475
        %v1994 = vunpack.c.l.b16 %v1476
        %v1995 = vunpack.c.l.b16 %v1477
        %v1996 = vunpack.c.l.b16 %v1478
        %v1997 = vunpack.c.l.b16 %v1479
        %v1998 = vpack.c.b16 %v1983, %v1982
        %v1999 = vpack.c.b16 %v1985, %v1984
        %v2000 = vpack.c.b16 %v1987, %v1986
        %v2001 = vpack.c.b16 %v1989, %v1988
        %v2002 = vpack.c.b16 %v1991, %v1990
        %v2003 = vpack.c.b16 %v1993, %v1992
        %v2004 = vpack.c.b16 %v1995, %v1994
        %v2005 = vpack.c.b16 %v1997, %v1996
        %2014 = vmatprep.subr.bf16.mxu0 0
        %2015 = vmatpush1.bf16.msra.mxu0 %v1998
        %2016 = vmatprep.subr.bf16.mxu0 0
        %2017 = vmatpush1.bf16.msra.mxu0 %v1999
        %2018 = vmatprep.subr.bf16.mxu0 0
        %2019 = vmatpush1.bf16.msra.mxu0 %v2000
        %2020 = vmatprep.subr.bf16.mxu0 0
        %2021 = vmatpush1.bf16.msra.mxu0 %v2001
        %2022 = vmatprep.subr.bf16.mxu0 0
        %2023 = vmatpush1.bf16.msra.mxu0 %v2002
        %2024 = vmatprep.subr.bf16.mxu0 0
        %2025 = vmatpush1.bf16.msra.mxu0 %v2003
        %2026 = vmatprep.subr.bf16.mxu0 0
        %2027 = vmatpush1.bf16.msra.mxu0 %v2004
        %2028 = vmatprep.subr.bf16.mxu0 0
        %2029 = vmatpush1.bf16.msra.mxu0 %v2005
        %2030 = vmatprep.subr.bf16.mxu0 0
        %2031 = vmatpush1.bf16.msra.mxu0 0
        %2032 = vmatprep.subr.bf16.mxu0 0
        %2033 = vmatpush1.bf16.msra.mxu0 0
        %2034 = vmatprep.subr.bf16.mxu0 0
        %2035 = vmatpush1.bf16.msra.mxu0 0
        %2036 = vmatprep.subr.bf16.mxu0 0
        %2037 = vmatpush1.bf16.msra.mxu0 0
        %2038 = vmatprep.subr.bf16.mxu0 0
        %2039 = vmatpush1.bf16.msra.mxu0 0
        %2040 = vmatprep.subr.bf16.mxu0 0
        %2041 = vmatpush1.bf16.msra.mxu0 0
        %2042 = vmatprep.subr.bf16.mxu0 0
        %2043 = vmatpush1.bf16.msra.mxu0 0
        %2044 = vmatprep.subr.bf16.mxu0 0
        %2045 = vmatpush1.bf16.msra.mxu0 0
        %2046 = vmatprep.mubr.bf16.mxu0 0
        %2047 = vmatmul.mubr.bf16.gmra.mrb[0].mxu0 %v1965
        %v2048 = vpop.f32.mrb[0].mxu0
        %v2049 = vadd.f32 0.0, %v2048
        %v2050 = vpop.f32.mrb[0].mxu0
        %v2051 = vpop.f32.mrb[0].mxu0
        %v2052 = vadd.f32 0.0, %v2051
        %v2053 = vpop.f32.mrb[0].mxu0
        %2054 = vdwg.mxu0
        %v2055 = vadd.f32 %v1503, %v2049
        %v2056 = vadd.f32 %v1503, %v2052
        %v2057 = vmul.f32 %v1347, 0.25
        %v2058 = vmul.f32 %v1351, 0.25
        %v2059 = vpack.c.bf16 %v2058, %v2057
        %v2060 = vpack.c.bf16 %v1394, %v1390
        %v2061 = vpack.c.bf16 %v1437, %v1433
        %2062 = vmatprep.subr.bf16.mxu0 0
        %2063 = vmatpush1.bf16.msra.mxu0 %v1541
        %2064 = vmatprep.subr.bf16.mxu0 0
        %2065 = vmatpush1.bf16.msra.mxu0 %v1542
        %2066 = vmatprep.subr.bf16.mxu0 0
        %2067 = vmatpush1.bf16.msra.mxu0 %v1543
        %2068 = vmatprep.subr.bf16.mxu0 0
        %2069 = vmatpush1.bf16.msra.mxu0 %v1544
        %2070 = vmatprep.subr.bf16.mxu0 0
        %2071 = vmatpush1.bf16.msra.mxu0 %v1545
        %2072 = vmatprep.subr.bf16.mxu0 0
        %2073 = vmatpush1.bf16.msra.mxu0 %v1546
        %2074 = vmatprep.subr.bf16.mxu0 0
        %2075 = vmatpush1.bf16.msra.mxu0 %v1547
        %2076 = vmatprep.subr.bf16.mxu0 0
        %2077 = vmatpush1.bf16.msra.mxu0 %v1548
        %2078 = vmatprep.subr.bf16.mxu0 0
        %2079 = vmatpush1.bf16.msra.mxu0 0
        %2080 = vmatprep.subr.bf16.mxu0 0
        %2081 = vmatpush1.bf16.msra.mxu0 0
        %2082 = vmatprep.subr.bf16.mxu0 0
        %2083 = vmatpush1.bf16.msra.mxu0 0
        %2084 = vmatprep.subr.bf16.mxu0 0
        %2085 = vmatpush1.bf16.msra.mxu0 0
        %2086 = vmatprep.subr.bf16.mxu0 0
        %2087 = vmatpush1.bf16.msra.mxu0 0
        %2088 = vmatprep.subr.bf16.mxu0 0
        %2089 = vmatpush1.bf16.msra.mxu0 0
        %2090 = vmatprep.subr.bf16.mxu0 0
        %2091 = vmatpush1.bf16.msra.mxu0 0
        %2092 = vmatprep.subr.bf16.mxu0 0
        %2093 = vmatpush1.bf16.msra.mxu0 0
        %2094 = vmatprep.mubr.bf16.mxu0 0
        %2095 = vmatmul.mubr.bf16.gmra.mrb[0].mxu0 %v2059
        %v2096 = vpop.f32.mrb[0].mxu0
        %v2097 = vadd.f32 0.0, %v2096
        %v2098 = vpop.f32.mrb[0].mxu0
        %v2099 = vpop.f32.mrb[0].mxu0
        %v2100 = vadd.f32 0.0, %v2099
        %v2101 = vpop.f32.mrb[0].mxu0
        %2102 = vdwg.mxu0
        %2104 = vset.pattern.permute.xlu0 0
        %2105 = vperm.xlu0 %2104, %v2097
        %v2106 = vpop.permute.xlu0 %2105
        %2109 = vset.pattern.permute.xlu0 0
        %2110 = vperm.xlu0 %2109, %v2100
        %v2111 = vpop.permute.xlu0 %2110
        %v2113 = vmul.f32 %v1147, %v2106
        %v2114 = vmul.f32 %v1148, %v2111
        %2115 = vset.pattern.permute.xlu0 1
        %2116 = vperm.xlu0 %2115, %v2097
        %v2117 = vpop.permute.xlu0 %2116
        %2119 = vset.pattern.permute.xlu0 1
        %2120 = vperm.xlu0 %2119, %v2100
        %v2121 = vpop.permute.xlu0 %2120
        %v2123 = vmul.f32 %v1153, %v2117
        %v2124 = vmul.f32 %v1154, %v2121
        %v2125 = vadd.f32 %v2113, %v2123
        %v2126 = vadd.f32 %v2114, %v2124
        %2127 = vset.pattern.permute.xlu0 2
        %2128 = vperm.xlu0 %2127, %v2097
        %v2129 = vpop.permute.xlu0 %2128
        %2131 = vset.pattern.permute.xlu0 2
        %2132 = vperm.xlu0 %2131, %v2100
        %v2133 = vpop.permute.xlu0 %2132
        %v2135 = vmul.f32 %v1159, %v2129
        %v2136 = vmul.f32 %v1160, %v2133
        %v2137 = vadd.f32 %v2125, %v2135
        %v2138 = vadd.f32 %v2126, %v2136
        %2139 = vset.pattern.permute.xlu0 3
        %2140 = vperm.xlu0 %2139, %v2097
        %v2141 = vpop.permute.xlu0 %2140
        %2143 = vset.pattern.permute.xlu0 3
        %2144 = vperm.xlu0 %2143, %v2100
        %v2145 = vpop.permute.xlu0 %2144
        %v2147 = vmul.f32 %v1165, %v2141
        %v2148 = vmul.f32 %v1166, %v2145
        %v2149 = vadd.f32 %v2137, %v2147
        %v2150 = vadd.f32 %v2138, %v2148
        %2151 = vset.pattern.permute.xlu0 4
        %2152 = vperm.xlu0 %2151, %v2097
        %v2153 = vpop.permute.xlu0 %2152
        %2155 = vset.pattern.permute.xlu0 4
        %2156 = vperm.xlu0 %2155, %v2100
        %v2157 = vpop.permute.xlu0 %2156
        %v2159 = vmul.f32 %v1171, %v2153
        %v2160 = vmul.f32 %v1172, %v2157
        %v2161 = vadd.f32 %v2149, %v2159
        %v2162 = vadd.f32 %v2150, %v2160
        %2163 = vset.pattern.permute.xlu0 5
        %2164 = vperm.xlu0 %2163, %v2097
        %v2165 = vpop.permute.xlu0 %2164
        %2167 = vset.pattern.permute.xlu0 5
        %2168 = vperm.xlu0 %2167, %v2100
        %v2169 = vpop.permute.xlu0 %2168
        %v2171 = vmul.f32 %v1177, %v2165
        %v2172 = vmul.f32 %v1178, %v2169
        %v2173 = vadd.f32 %v2161, %v2171
        %v2174 = vadd.f32 %v2162, %v2172
        %2175 = vset.pattern.permute.xlu0 6
        %2176 = vperm.xlu0 %2175, %v2097
        %v2177 = vpop.permute.xlu0 %2176
        %2179 = vset.pattern.permute.xlu0 6
        %2180 = vperm.xlu0 %2179, %v2100
        %v2181 = vpop.permute.xlu0 %2180
        %v2183 = vmul.f32 %v1183, %v2177
        %v2184 = vmul.f32 %v1184, %v2181
        %v2185 = vadd.f32 %v2173, %v2183
        %v2186 = vadd.f32 %v2174, %v2184
        %2187 = vset.pattern.permute.xlu0 7
        %2188 = vperm.xlu0 %2187, %v2097
        %v2189 = vpop.permute.xlu0 %2188
        %2191 = vset.pattern.permute.xlu0 7
        %2192 = vperm.xlu0 %2191, %v2100
        %v2193 = vpop.permute.xlu0 %2192
        %v2195 = vmul.f32 %v1189, %v2189
        %v2196 = vmul.f32 %v1190, %v2193
        %v2197 = vadd.f32 %v2185, %v2195
        %v2198 = vadd.f32 %v2186, %v2196
        %2199 = vset.pattern.permute.xlu0 8
        %2200 = vperm.xlu0 %2199, %v2097
        %v2201 = vpop.permute.xlu0 %2200
        %2203 = vset.pattern.permute.xlu0 8
        %2204 = vperm.xlu0 %2203, %v2100
        %v2205 = vpop.permute.xlu0 %2204
        %v2207 = vmul.f32 %v1195, %v2201
        %v2208 = vmul.f32 %v1196, %v2205
        %v2209 = vadd.f32 %v2197, %v2207
        %v2210 = vadd.f32 %v2198, %v2208
        %2211 = vmatprep.subr.bf16.mxu0 0
        %2212 = vmatpush1.bf16.xpose.msra.mxu0 %v2060
        %2213 = vmatprep.subr.bf16.mxu0 0
        %2214 = vmatpush1.bf16.xpose.msra.mxu0 0
        %2215 = vmatprep.subr.bf16.mxu0 0
        %2216 = vmatpush1.bf16.xpose.msra.mxu0 0
        %2217 = vmatprep.subr.bf16.mxu0 0
        %2218 = vmatpush1.bf16.xpose.msra.mxu0 0
        %2219 = vmatprep.subr.bf16.mxu0 0
        %2220 = vmatpush1.bf16.xpose.msra.mxu0 0
        %2221 = vmatprep.subr.bf16.mxu0 0
        %2222 = vmatpush1.bf16.xpose.msra.mxu0 0
        %2223 = vmatprep.subr.bf16.mxu0 0
        %2224 = vmatpush1.bf16.xpose.msra.mxu0 0
        %2225 = vmatprep.subr.bf16.mxu0 0
        %2226 = vmatpush1.bf16.xpose.msra.mxu0 0
        %2227 = vmatprep.subr.bf16.mxu0 0
        %2228 = vmatpush1.bf16.xpose.msra.mxu0 0
        %2229 = vmatprep.subr.bf16.mxu0 0
        %2230 = vmatpush1.bf16.xpose.msra.mxu0 0
        %2231 = vmatprep.subr.bf16.mxu0 0
        %2232 = vmatpush1.bf16.xpose.msra.mxu0 0
        %2233 = vmatprep.subr.bf16.mxu0 0
        %2234 = vmatpush1.bf16.xpose.msra.mxu0 0
        %2235 = vmatprep.subr.bf16.mxu0 0
        %2236 = vmatpush1.bf16.xpose.msra.mxu0 0
        %2237 = vmatprep.subr.bf16.mxu0 0
        %2238 = vmatpush1.bf16.xpose.msra.mxu0 0
        %2239 = vmatprep.subr.bf16.mxu0 0
        %2240 = vmatpush1.bf16.xpose.msra.mxu0 0
        %2241 = vmatprep.subr.bf16.mxu0 0
        %2242 = vmatpush1.bf16.xpose.msra.mxu0 0
        %2243 = vmatprep.mubr.bf16.mxu0 0
        %2244 = vmatmul.mubr.bf16.gmra.mrb[0].mxu0 %v2059
        %v2245 = vpop.f32.mrb[0].mxu0
        %v2246 = vadd.f32 %v2209, %v2245
        %v2247 = vpop.f32.mrb[0].mxu0
        %v2248 = vpop.f32.mrb[0].mxu0
        %v2249 = vadd.f32 %v2210, %v2248
        %v2250 = vpop.f32.mrb[0].mxu0
        %2251 = vdwg.mxu0
        %v2252 = vsel %vm1752, %v2246, -10000.0
        %v2253 = vsel %vm1752, %v2249, -10000.0
        %v2254 = vsel %vm1755, %v2252, -inf
        %2255 = vmax.xlane.f32.xlu0 %v2254
        %v2256 = vpop.xlane.xlu0 %2255
        %v2257 = vsel %vm1755, %v2253, -inf
        %2258 = vmax.xlane.f32.xlu0 %v2257
        %v2259 = vpop.xlane.xlu0 %2258
        %v2260 = vsub.f32 %v2252, %v2256
        %v2261 = vsub.f32 %v2253, %v2259
        %v2262 = vmul.f32 %v2260, 1.442695
        %v2263 = vpow.pop %v2262
        %v2264 = vmul.f32 %v2261, 1.442695
        %v2265 = vpow.pop %v2264
        %v2266 = vsel %vm1755, %v2263, 0.0
        %2267 = vadd.xlane.f32.xlu0 %v2266
        %v2268 = vpop.xlane.xlu0 %2267
        %v2269 = vsel %vm1755, %v2265, 0.0
        %2270 = vadd.xlane.f32.xlu0 %v2269
        %v2271 = vpop.xlane.xlu0 %2270
        %v2272 = vrcp.pop %v2268
        %v2273 = vrcp.pop %v2271
        %v2274 = vmul.f32 %v2263, %v2272
        %v2275 = vmul.f32 %v2265, %v2273
        %v2276 = vpack.c.bf16 %v2275, %v2274
        %v2277 = vmul.f32 %v2274, %v1147
        %v2278 = vmul.f32 %v2275, %v1148
        %v2279 = vsel %vm1755, %v2277, 0.0
        %2280 = vadd.xlane.f32.xlu0 %v2279
        %v2281 = vpop.xlane.xlu0 %2280
        %v2282 = vsel %vm1755, %v2278, 0.0
        %2283 = vadd.xlane.f32.xlu0 %v2282
        %v2284 = vpop.xlane.xlu0 %2283
        %v2285 = vmul.f32 %v2281, %v1790
        %v2286 = vmul.f32 %v2284, %v1790
        %v2288 = vsel %vm1755, %v2276, 0
        %2290 = vmatprep.subr.bf16.mxu0 0
        %2291 = vmatpush1.bf16.msra.mxu0 %v2061
        %2292 = vmatprep.subr.bf16.mxu0 0
        %2293 = vmatpush1.bf16.msra.mxu0 0
        %2294 = vmatprep.subr.bf16.mxu0 0
        %2295 = vmatpush1.bf16.msra.mxu0 0
        %2296 = vmatprep.subr.bf16.mxu0 0
        %2297 = vmatpush1.bf16.msra.mxu0 0
        %2298 = vmatprep.subr.bf16.mxu0 0
        %2299 = vmatpush1.bf16.msra.mxu0 0
        %2300 = vmatprep.subr.bf16.mxu0 0
        %2301 = vmatpush1.bf16.msra.mxu0 0
        %2302 = vmatprep.subr.bf16.mxu0 0
        %2303 = vmatpush1.bf16.msra.mxu0 0
        %2304 = vmatprep.subr.bf16.mxu0 0
        %2305 = vmatpush1.bf16.msra.mxu0 0
        %2306 = vmatprep.subr.bf16.mxu0 0
        %2307 = vmatpush1.bf16.msra.mxu0 0
        %2308 = vmatprep.subr.bf16.mxu0 0
        %2309 = vmatpush1.bf16.msra.mxu0 0
        %2310 = vmatprep.subr.bf16.mxu0 0
        %2311 = vmatpush1.bf16.msra.mxu0 0
        %2312 = vmatprep.subr.bf16.mxu0 0
        %2313 = vmatpush1.bf16.msra.mxu0 0
        %2314 = vmatprep.subr.bf16.mxu0 0
        %2315 = vmatpush1.bf16.msra.mxu0 0
        %2316 = vmatprep.subr.bf16.mxu0 0
        %2317 = vmatpush1.bf16.msra.mxu0 0
        %2318 = vmatprep.subr.bf16.mxu0 0
        %2319 = vmatpush1.bf16.msra.mxu0 0
        %2320 = vmatprep.subr.bf16.mxu0 0
        %2321 = vmatpush1.bf16.msra.mxu0 0
        %2322 = vmatprep.mubr.bf16.mxu0 0
        %2323 = vmatmul.mubr.bf16.gmra.mrb[0].mxu0 %v2288
        %v2324 = vpop.f32.mrb[0].mxu0
        %v2325 = vadd.f32 %v2285, %v2324
        %v2326 = vpop.f32.mrb[0].mxu0
        %v2327 = vpop.f32.mrb[0].mxu0
        %v2328 = vadd.f32 %v2286, %v2327
        %v2329 = vpop.f32.mrb[0].mxu0
        %2330 = vdwg.mxu0
        %v2331 = vmul.f32 %v2274, %v1153
        %v2332 = vmul.f32 %v2275, %v1154
        %v2333 = vsel %vm1755, %v2331, 0.0
        %2334 = vadd.xlane.f32.xlu0 %v2333
        %v2335 = vpop.xlane.xlu0 %2334
        %v2336 = vsel %vm1755, %v2332, 0.0
        %2337 = vadd.xlane.f32.xlu0 %v2336
        %v2338 = vpop.xlane.xlu0 %2337
        %v2339 = vmul.f32 %v2335, %v1848
        %v2340 = vmul.f32 %v2338, %v1848
        %v2341 = vadd.f32 %v2325, %v2339
        %v2342 = vadd.f32 %v2328, %v2340
        %v2343 = vmul.f32 %v2274, %v1159
        %v2344 = vmul.f32 %v2275, %v1160
        %v2345 = vsel %vm1755, %v2343, 0.0
        %2346 = vadd.xlane.f32.xlu0 %v2345
        %v2347 = vpop.xlane.xlu0 %2346
        %v2348 = vsel %vm1755, %v2344, 0.0
        %2349 = vadd.xlane.f32.xlu0 %v2348
        %v2350 = vpop.xlane.xlu0 %2349
        %v2351 = vmul.f32 %v2347, %v1864
        %v2352 = vmul.f32 %v2350, %v1864
        %v2353 = vadd.f32 %v2341, %v2351
        %v2354 = vadd.f32 %v2342, %v2352
        %v2355 = vmul.f32 %v2274, %v1165
        %v2356 = vmul.f32 %v2275, %v1166
        %v2357 = vsel %vm1755, %v2355, 0.0
        %2358 = vadd.xlane.f32.xlu0 %v2357
        %v2359 = vpop.xlane.xlu0 %2358
        %v2360 = vsel %vm1755, %v2356, 0.0
        %2361 = vadd.xlane.f32.xlu0 %v2360
        %v2362 = vpop.xlane.xlu0 %2361
        %v2363 = vmul.f32 %v2359, %v1880
        %v2364 = vmul.f32 %v2362, %v1880
        %v2365 = vadd.f32 %v2353, %v2363
        %v2366 = vadd.f32 %v2354, %v2364
        %v2367 = vmul.f32 %v2274, %v1171
        %v2368 = vmul.f32 %v2275, %v1172
        %v2369 = vsel %vm1755, %v2367, 0.0
        %2370 = vadd.xlane.f32.xlu0 %v2369
        %v2371 = vpop.xlane.xlu0 %2370
        %v2372 = vsel %vm1755, %v2368, 0.0
        %2373 = vadd.xlane.f32.xlu0 %v2372
        %v2374 = vpop.xlane.xlu0 %2373
        %v2375 = vmul.f32 %v2371, %v1896
        %v2376 = vmul.f32 %v2374, %v1896
        %v2377 = vadd.f32 %v2365, %v2375
        %v2378 = vadd.f32 %v2366, %v2376
        %v2379 = vmul.f32 %v2274, %v1177
        %v2380 = vmul.f32 %v2275, %v1178
        %v2381 = vsel %vm1755, %v2379, 0.0
        %2382 = vadd.xlane.f32.xlu0 %v2381
        %v2383 = vpop.xlane.xlu0 %2382
        %v2384 = vsel %vm1755, %v2380, 0.0
        %2385 = vadd.xlane.f32.xlu0 %v2384
        %v2386 = vpop.xlane.xlu0 %2385
        %v2387 = vmul.f32 %v2383, %v1912
        %v2388 = vmul.f32 %v2386, %v1912
        %v2389 = vadd.f32 %v2377, %v2387
        %v2390 = vadd.f32 %v2378, %v2388
        %v2391 = vmul.f32 %v2274, %v1183
        %v2392 = vmul.f32 %v2275, %v1184
        %v2393 = vsel %vm1755, %v2391, 0.0
        %2394 = vadd.xlane.f32.xlu0 %v2393
        %v2395 = vpop.xlane.xlu0 %2394
        %v2396 = vsel %vm1755, %v2392, 0.0
        %2397 = vadd.xlane.f32.xlu0 %v2396
        %v2398 = vpop.xlane.xlu0 %2397
        %v2399 = vmul.f32 %v2395, %v1928
        %v2400 = vmul.f32 %v2398, %v1928
        %v2401 = vadd.f32 %v2389, %v2399
        %v2402 = vadd.f32 %v2390, %v2400
        %v2403 = vmul.f32 %v2274, %v1189
        %v2404 = vmul.f32 %v2275, %v1190
        %v2405 = vsel %vm1755, %v2403, 0.0
        %2406 = vadd.xlane.f32.xlu0 %v2405
        %v2407 = vpop.xlane.xlu0 %2406
        %v2408 = vsel %vm1755, %v2404, 0.0
        %2409 = vadd.xlane.f32.xlu0 %v2408
        %v2410 = vpop.xlane.xlu0 %2409
        %v2411 = vmul.f32 %v2407, %v1944
        %v2412 = vmul.f32 %v2410, %v1944
        %v2413 = vadd.f32 %v2401, %v2411
        %v2414 = vadd.f32 %v2402, %v2412
        %v2415 = vmul.f32 %v2274, %v1195
        %v2416 = vmul.f32 %v2275, %v1196
        %v2417 = vsel %vm1755, %v2415, 0.0
        %2418 = vadd.xlane.f32.xlu0 %v2417
        %v2419 = vpop.xlane.xlu0 %2418
        %v2420 = vsel %vm1755, %v2416, 0.0
        %2421 = vadd.xlane.f32.xlu0 %v2420
        %v2422 = vpop.xlane.xlu0 %2421
        %v2423 = vmul.f32 %v2419, %v1960
        %v2424 = vmul.f32 %v2422, %v1960
        %v2425 = vadd.f32 %v2413, %v2423
        %v2426 = vadd.f32 %v2414, %v2424
        %v2427 = vpack.c.bf16 %v2426, %v2425
        %v2444 = vunpack.c.l.b16 %v1480
        %v2445 = vunpack.c.l.b16 %v1481
        %v2446 = vunpack.c.l.b16 %v1482
        %v2447 = vunpack.c.l.b16 %v1483
        %v2448 = vunpack.c.l.b16 %v1484
        %v2449 = vunpack.c.l.b16 %v1485
        %v2450 = vunpack.c.l.b16 %v1486
        %v2451 = vunpack.c.l.b16 %v1487
        %v2452 = vunpack.c.l.b16 %v1488
        %v2453 = vunpack.c.l.b16 %v1489
        %v2454 = vunpack.c.l.b16 %v1490
        %v2455 = vunpack.c.l.b16 %v1491
        %v2456 = vunpack.c.l.b16 %v1492
        %v2457 = vunpack.c.l.b16 %v1493
        %v2458 = vunpack.c.l.b16 %v1494
        %v2459 = vunpack.c.l.b16 %v1495
        %v2460 = vpack.c.b16 %v2445, %v2444
        %v2461 = vpack.c.b16 %v2447, %v2446
        %v2462 = vpack.c.b16 %v2449, %v2448
        %v2463 = vpack.c.b16 %v2451, %v2450
        %v2464 = vpack.c.b16 %v2453, %v2452
        %v2465 = vpack.c.b16 %v2455, %v2454
        %v2466 = vpack.c.b16 %v2457, %v2456
        %v2467 = vpack.c.b16 %v2459, %v2458
        %2476 = vmatprep.subr.bf16.mxu0 0
        %2477 = vmatpush1.bf16.msra.mxu0 %v2460
        %2478 = vmatprep.subr.bf16.mxu0 0
        %2479 = vmatpush1.bf16.msra.mxu0 %v2461
        %2480 = vmatprep.subr.bf16.mxu0 0
        %2481 = vmatpush1.bf16.msra.mxu0 %v2462
        %2482 = vmatprep.subr.bf16.mxu0 0
        %2483 = vmatpush1.bf16.msra.mxu0 %v2463
        %2484 = vmatprep.subr.bf16.mxu0 0
        %2485 = vmatpush1.bf16.msra.mxu0 %v2464
        %2486 = vmatprep.subr.bf16.mxu0 0
        %2487 = vmatpush1.bf16.msra.mxu0 %v2465
        %2488 = vmatprep.subr.bf16.mxu0 0
        %2489 = vmatpush1.bf16.msra.mxu0 %v2466
        %2490 = vmatprep.subr.bf16.mxu0 0
        %2491 = vmatpush1.bf16.msra.mxu0 %v2467
        %2492 = vmatprep.subr.bf16.mxu0 0
        %2493 = vmatpush1.bf16.msra.mxu0 0
        %2494 = vmatprep.subr.bf16.mxu0 0
        %2495 = vmatpush1.bf16.msra.mxu0 0
        %2496 = vmatprep.subr.bf16.mxu0 0
        %2497 = vmatpush1.bf16.msra.mxu0 0
        %2498 = vmatprep.subr.bf16.mxu0 0
        %2499 = vmatpush1.bf16.msra.mxu0 0
        %2500 = vmatprep.subr.bf16.mxu0 0
        %2501 = vmatpush1.bf16.msra.mxu0 0
        %2502 = vmatprep.subr.bf16.mxu0 0
        %2503 = vmatpush1.bf16.msra.mxu0 0
        %2504 = vmatprep.subr.bf16.mxu0 0
        %2505 = vmatpush1.bf16.msra.mxu0 0
        %2506 = vmatprep.subr.bf16.mxu0 0
        %2507 = vmatpush1.bf16.msra.mxu0 0
        %2508 = vmatprep.mubr.bf16.mxu0 0
        %2509 = vmatmul.mubr.bf16.gmra.mrb[0].mxu0 %v2427
        %v2510 = vpop.f32.mrb[0].mxu0
        %v2511 = vadd.f32 0.0, %v2510
        %v2512 = vpop.f32.mrb[0].mxu0
        %v2513 = vpop.f32.mrb[0].mxu0
        %v2514 = vadd.f32 0.0, %v2513
        %v2515 = vpop.f32.mrb[0].mxu0
        %2516 = vdwg.mxu0
        %v2517 = vadd.f32 %v2055, %v2511
        %v2518 = vadd.f32 %v2056, %v2514
        %v2519 = vadd.f32 %v1139, %v2517
        %v2520 = vadd.f32 %v1140, %v2518
        %v2521 = vld [vmem:[%s960] sm:$0x1]
        %v2522 = vld [vmem:[%s963] sm:$0x1]
        %v2523 = vsel %vm1306, %v2519, 0.0
        %2524 = vadd.xlane.f32.xlu0 %v2523
        %v2525 = vpop.xlane.xlu0 %2524
        %v2526 = vsel %vm1306, %v2520, 0.0
        %2527 = vadd.xlane.f32.xlu0 %v2526
        %v2528 = vpop.xlane.xlu0 %2527
        %v2529 = vrcp.pop 32.0
        %v2530 = vmul.f32 %v2525, %v2529
        %v2531 = vmul.f32 %v2528, %v2529
        %v2532 = vsub.f32 %v2519, %v2530
        %v2533 = vsub.f32 %v2520, %v2531
        %v2534 = vmul.f32 %v2532, %v2532
        %v2535 = vmul.f32 %v2533, %v2533
        %v2536 = vsel %vm1306, %v2534, 0.0
        %2537 = vadd.xlane.f32.xlu0 %v2536
        %v2538 = vpop.xlane.xlu0 %2537
        %v2539 = vsel %vm1306, %v2535, 0.0
        %2540 = vadd.xlane.f32.xlu0 %v2539
        %v2541 = vpop.xlane.xlu0 %2540
        %v2542 = vmul.f32 %v2538, %v2529
        %v2543 = vmul.f32 %v2541, %v2529
        %v2544 = vadd.f32 %v2542, 1e-05
        %v2545 = vadd.f32 %v2543, 1e-05
        %v2546 = vrsqrt.pop %v2544
        %v2547 = vrsqrt.pop %v2545
        %v2548 = vmul.f32 %v2532, %v2546
        %v2549 = vmul.f32 %v2533, %v2547
        %v2551 = vlaneseq
        %v2552 = vshrl.u32 %v2551, 7
        %v2553 = vsub.s32 0, %v2552
        %v2554 = vrot.slane %v2521, %v2553
        %v2556 = vmul.f32 %v2548, %v2554
        %v2557 = vmul.f32 %v2549, %v2554
        %v2559 = vlaneseq
        %v2560 = vshrl.u32 %v2559, 7
        %v2561 = vsub.s32 0, %v2560
        %v2562 = vrot.slane %v2522, %v2561
        %v2564 = vadd.f32 %v2556, %v2562
        %v2565 = vadd.f32 %v2557, %v2562
        %2567 = vset.pattern.permute.xlu0 0
        %2568 = vperm.xlu0 %2567, %v977
        %v2569 = vpop.permute.xlu0 %2568
        %2572 = vset.pattern.permute.xlu0 0
        %2573 = vperm.xlu0 %2572, %v978
        %v2574 = vpop.permute.xlu0 %2573
        %v2576 = vmul.f32 %v2564, %v2569
        %v2577 = vmul.f32 %v2565, %v2574
        %v2578 = vpack.c.bf16 %v2577, %v2576
        %v2580 = vshrl.u32 %v2578, 16
        %v2582 = vrot.slane %v2580, 7
        %v2583 = vshll.u32 %v2578, 16
        %v2585 = vor.u32 %v2582, %v2583
        %vm2587 = vcmask 1040384
        %vm2588 = vsmask.f32 256
        %vm2589 = vmand %vm2587, %vm2588
        %v2590 = vsel %vm2589, 0, %v2585
        %s2591 = smul.u32 %s49, 3
        %s2592 = smul.u32 %s2591, 4
        %s2593 = smul.addr %s2592, 4
        %s2594 = scalar_lea.vmem %s13, %s2593
        %v2595 = vld [vmem:[%s2594] sm:$0xf]
        %v2596 = vld [vmem:[%s2594 + $0x4] sm:$0xf]
        %v2597 = vld [vmem:[%s2594 + $0x8] sm:$0xf]
        %v2598 = vld [vmem:[%s2594 + $0xc] sm:$0xf]
        %s2599 = sadd.s32 %s2591, 1
        %s2600 = smul.u32 %s2599, 4
        %s2601 = smul.addr %s2600, 4
        %s2602 = scalar_lea.vmem %s13, %s2601
        %v2603 = vld [vmem:[%s2602] sm:$0xf]
        %v2604 = vld [vmem:[%s2602 + $0x4] sm:$0xf]
        %v2605 = vld [vmem:[%s2602 + $0x8] sm:$0xf]
        %v2606 = vld [vmem:[%s2602 + $0xc] sm:$0xf]
        %v2611 = vunpack.c.l.b16 %v2603
        %v2612 = vunpack.c.l.b16 %v2604
        %v2613 = vunpack.c.l.b16 %v2605
        %v2614 = vunpack.c.l.b16 %v2606
        %v2615 = vpack.c.b16 %v2612, %v2611
        %v2616 = vpack.c.b16 %v2614, %v2613
        %v2619 = vsel %vm1306, %v2578, 0
        %2621 = vmatprep.subr.bf16.mxu0 0
        %2622 = vmatpush1.bf16.msra.mxu0 %v2615
        %2623 = vmatprep.subr.bf16.mxu0 0
        %2624 = vmatpush1.bf16.msra.mxu0 %v2616
        %2625 = vmatprep.subr.bf16.mxu0 0
        %2626 = vmatpush1.bf16.msra.mxu0 0
        %2627 = vmatprep.subr.bf16.mxu0 0
        %2628 = vmatpush1.bf16.msra.mxu0 0
        %2629 = vmatprep.subr.bf16.mxu0 0
        %2630 = vmatpush1.bf16.msra.mxu0 0
        %2631 = vmatprep.subr.bf16.mxu0 0
        %2632 = vmatpush1.bf16.msra.mxu0 0
        %2633 = vmatprep.subr.bf16.mxu0 0
        %2634 = vmatpush1.bf16.msra.mxu0 0
        %2635 = vmatprep.subr.bf16.mxu0 0
        %2636 = vmatpush1.bf16.msra.mxu0 0
        %2637 = vmatprep.subr.bf16.mxu0 0
        %2638 = vmatpush1.bf16.msra.mxu0 0
        %2639 = vmatprep.subr.bf16.mxu0 0
        %2640 = vmatpush1.bf16.msra.mxu0 0
        %2641 = vmatprep.subr.bf16.mxu0 0
        %2642 = vmatpush1.bf16.msra.mxu0 0
        %2643 = vmatprep.subr.bf16.mxu0 0
        %2644 = vmatpush1.bf16.msra.mxu0 0
        %2645 = vmatprep.subr.bf16.mxu0 0
        %2646 = vmatpush1.bf16.msra.mxu0 0
        %2647 = vmatprep.subr.bf16.mxu0 0
        %2648 = vmatpush1.bf16.msra.mxu0 0
        %2649 = vmatprep.subr.bf16.mxu0 0
        %2650 = vmatpush1.bf16.msra.mxu0 0
        %2651 = vmatprep.subr.bf16.mxu0 0
        %2652 = vmatpush1.bf16.msra.mxu0 0
        %2653 = vmatprep.mubr.bf16.mxu0 0
        %2654 = vmatmul.mubr.bf16.gmra.mrb[0].mxu0 %v2619
        %v2655 = vpop.f32.mrb[0].mxu0
        %v2656 = vadd.f32 0.0, %v2655
        %v2657 = vpop.f32.mrb[0].mxu0
        %v2658 = vpop.f32.mrb[0].mxu0
        %v2659 = vadd.f32 0.0, %v2658
        %v2660 = vpop.f32.mrb[0].mxu0
        %2661 = vdwg.mxu0
        %v2666 = vunpack.c.l.b16 %v2595
        %v2667 = vunpack.c.l.b16 %v2596
        %v2668 = vunpack.c.l.b16 %v2597
        %v2669 = vunpack.c.l.b16 %v2598
        %v2670 = vpack.c.b16 %v2667, %v2666
        %v2671 = vpack.c.b16 %v2669, %v2668
        %v2675 = vsel %vm1306, %v2590, 0
        %2677 = vmatprep.subr.bf16.mxu0 0
        %2678 = vmatpush1.bf16.msra.mxu0 %v2670
        %2679 = vmatprep.subr.bf16.mxu0 0
        %2680 = vmatpush1.bf16.msra.mxu0 %v2671
        %2681 = vmatprep.subr.bf16.mxu0 0
        %2682 = vmatpush1.bf16.msra.mxu0 0
        %2683 = vmatprep.subr.bf16.mxu0 0
        %2684 = vmatpush1.bf16.msra.mxu0 0
        %2685 = vmatprep.subr.bf16.mxu0 0
        %2686 = vmatpush1.bf16.msra.mxu0 0
        %2687 = vmatprep.subr.bf16.mxu0 0
        %2688 = vmatpush1.bf16.msra.mxu0 0
        %2689 = vmatprep.subr.bf16.mxu0 0
        %2690 = vmatpush1.bf16.msra.mxu0 0
        %2691 = vmatprep.subr.bf16.mxu0 0
        %2692 = vmatpush1.bf16.msra.mxu0 0
        %2693 = vmatprep.subr.bf16.mxu0 0
        %2694 = vmatpush1.bf16.msra.mxu0 0
        %2695 = vmatprep.subr.bf16.mxu0 0
        %2696 = vmatpush1.bf16.msra.mxu0 0
        %2697 = vmatprep.subr.bf16.mxu0 0
        %2698 = vmatpush1.bf16.msra.mxu0 0
        %2699 = vmatprep.subr.bf16.mxu0 0
        %2700 = vmatpush1.bf16.msra.mxu0 0
        %2701 = vmatprep.subr.bf16.mxu0 0
        %2702 = vmatpush1.bf16.msra.mxu0 0
        %2703 = vmatprep.subr.bf16.mxu0 0
        %2704 = vmatpush1.bf16.msra.mxu0 0
        %2705 = vmatprep.subr.bf16.mxu0 0
        %2706 = vmatpush1.bf16.msra.mxu0 0
        %2707 = vmatprep.subr.bf16.mxu0 0
        %2708 = vmatpush1.bf16.msra.mxu0 0
        %2709 = vmatprep.mubr.bf16.mxu0 0
        %2710 = vmatmul.mubr.bf16.gmra.mrb[0].mxu0 %v2675
        %v2711 = vpop.f32.mrb[0].mxu0
        %v2712 = vadd.f32 %v2656, %v2711
        %v2713 = vpop.f32.mrb[0].mxu0
        %v2714 = vpop.f32.mrb[0].mxu0
        %v2715 = vadd.f32 %v2659, %v2714
        %v2716 = vpop.f32.mrb[0].mxu0
        %2717 = vdwg.mxu0
        %v2718 = vrot.slane %v2583, 1
        %v2719 = vor.u32 %v2580, %v2718
        %vm2721 = vcmask 1047552
        %vm2722 = vsmask.f32 7424
        %vm2723 = vmand %vm2721, %vm2722
        %v2724 = vsel %vm2723, %v2719, 0
        %s2725 = sadd.s32 %s2591, 2
        %s2726 = smul.u32 %s2725, 4
        %s2727 = smul.addr %s2726, 4
        %s2728 = scalar_lea.vmem %s13, %s2727
        %v2729 = vld [vmem:[%s2728] sm:$0xf]
        %v2730 = vld [vmem:[%s2728 + $0x4] sm:$0xf]
        %v2731 = vld [vmem:[%s2728 + $0x8] sm:$0xf]
        %v2732 = vld [vmem:[%s2728 + $0xc] sm:$0xf]
        %v2737 = vunpack.c.l.b16 %v2729
        %v2738 = vunpack.c.l.b16 %v2730
        %v2739 = vunpack.c.l.b16 %v2731
        %v2740 = vunpack.c.l.b16 %v2732
        %v2741 = vpack.c.b16 %v2738, %v2737
        %v2742 = vpack.c.b16 %v2740, %v2739
        %v2746 = vsel %vm1306, %v2724, 0
        %2748 = vmatprep.subr.bf16.mxu0 0
        %2749 = vmatpush1.bf16.msra.mxu0 %v2741
        %2750 = vmatprep.subr.bf16.mxu0 0
        %2751 = vmatpush1.bf16.msra.mxu0 %v2742
        %2752 = vmatprep.subr.bf16.mxu0 0
        %2753 = vmatpush1.bf16.msra.mxu0 0
        %2754 = vmatprep.subr.bf16.mxu0 0
        %2755 = vmatpush1.bf16.msra.mxu0 0
        %2756 = vmatprep.subr.bf16.mxu0 0
        %2757 = vmatpush1.bf16.msra.mxu0 0
        %2758 = vmatprep.subr.bf16.mxu0 0
        %2759 = vmatpush1.bf16.msra.mxu0 0
        %2760 = vmatprep.subr.bf16.mxu0 0
        %2761 = vmatpush1.bf16.msra.mxu0 0
        %2762 = vmatprep.subr.bf16.mxu0 0
        %2763 = vmatpush1.bf16.msra.mxu0 0
        %2764 = vmatprep.subr.bf16.mxu0 0
        %2765 = vmatpush1.bf16.msra.mxu0 0
        %2766 = vmatprep.subr.bf16.mxu0 0
        %2767 = vmatpush1.bf16.msra.mxu0 0
        %2768 = vmatprep.subr.bf16.mxu0 0
        %2769 = vmatpush1.bf16.msra.mxu0 0
        %2770 = vmatprep.subr.bf16.mxu0 0
        %2771 = vmatpush1.bf16.msra.mxu0 0
        %2772 = vmatprep.subr.bf16.mxu0 0
        %2773 = vmatpush1.bf16.msra.mxu0 0
        %2774 = vmatprep.subr.bf16.mxu0 0
        %2775 = vmatpush1.bf16.msra.mxu0 0
        %2776 = vmatprep.subr.bf16.mxu0 0
        %2777 = vmatpush1.bf16.msra.mxu0 0
        %2778 = vmatprep.subr.bf16.mxu0 0
        %2779 = vmatpush1.bf16.msra.mxu0 0
        %2780 = vmatprep.mubr.bf16.mxu0 0
        %2781 = vmatmul.mubr.bf16.gmra.mrb[0].mxu0 %v2746
        %v2782 = vpop.f32.mrb[0].mxu0
        %v2783 = vadd.f32 0.0, %v2782
        %v2784 = vpop.f32.mrb[0].mxu0
        %v2785 = vpop.f32.mrb[0].mxu0
        %v2786 = vadd.f32 0.0, %v2785
        %v2787 = vpop.f32.mrb[0].mxu0
        %2788 = vdwg.mxu0
        %v2789 = vadd.f32 %v2712, %v2783
        %v2790 = vadd.f32 %v2715, %v2786
        %v2791 = vld [vmem:[%s966] sm:$0x1]
        %v2793 = vlaneseq
        %v2794 = vshrl.u32 %v2793, 7
        %v2795 = vsub.s32 0, %v2794
        %v2796 = vrot.slane %v2791, %v2795
        %v2798 = vadd.f32 %v2789, %v2796
        %v2799 = vadd.f32 %v2790, %v2796
        %v2800 = vmax.f32 %v2798, 0.0
        %v2801 = vmax.f32 %v2799, 0.0
        %v2802 = vmul.f32 %v2800, %v2569
        %v2803 = vmul.f32 %v2801, %v2574
        %v2804 = vpack.c.bf16 %v2803, %v2802
        %v2806 = vshrl.u32 %v2804, 16
        %v2808 = vrot.slane %v2806, 7
        %v2809 = vshll.u32 %v2804, 16
        %v2811 = vor.u32 %v2808, %v2809
        %v2813 = vsel %vm2589, 0, %v2811
        %s2814 = smul.u32 %s2591, 8
        %s2815 = smul.addr %s2814, 4
        %s2816 = scalar_lea.vmem %s14, %s2815
        %v2817 = vld [vmem:[%s2816] sm:$0xf]
        %v2818 = vld [vmem:[%s2816 + $0x4] sm:$0xf]
        %v2819 = vld [vmem:[%s2816 + $0x8] sm:$0xf]
        %v2820 = vld [vmem:[%s2816 + $0xc] sm:$0xf]
        %v2821 = vld [vmem:[%s2816 + $0x10] sm:$0xf]
        %v2822 = vld [vmem:[%s2816 + $0x14] sm:$0xf]
        %v2823 = vld [vmem:[%s2816 + $0x18] sm:$0xf]
        %v2824 = vld [vmem:[%s2816 + $0x1c] sm:$0xf]
        %s2825 = smul.u32 %s2599, 8
        %s2826 = smul.addr %s2825, 4
        %s2827 = scalar_lea.vmem %s14, %s2826
        %v2828 = vld [vmem:[%s2827] sm:$0xf]
        %v2829 = vld [vmem:[%s2827 + $0x4] sm:$0xf]
        %v2830 = vld [vmem:[%s2827 + $0x8] sm:$0xf]
        %v2831 = vld [vmem:[%s2827 + $0xc] sm:$0xf]
        %v2832 = vld [vmem:[%s2827 + $0x10] sm:$0xf]
        %v2833 = vld [vmem:[%s2827 + $0x14] sm:$0xf]
        %v2834 = vld [vmem:[%s2827 + $0x18] sm:$0xf]
        %v2835 = vld [vmem:[%s2827 + $0x1c] sm:$0xf]
        %v2844 = vunpack.c.l.b16 %v2828
        %v2845 = vunpack.c.l.b16 %v2829
        %v2846 = vunpack.c.l.b16 %v2830
        %v2847 = vunpack.c.l.b16 %v2831
        %v2848 = vunpack.c.l.b16 %v2832
        %v2849 = vunpack.c.l.b16 %v2833
        %v2850 = vunpack.c.l.b16 %v2834
        %v2851 = vunpack.c.l.b16 %v2835
        %v2852 = vpack.c.b16 %v2845, %v2844
        %v2853 = vpack.c.b16 %v2847, %v2846
        %v2854 = vpack.c.b16 %v2849, %v2848
        %v2855 = vpack.c.b16 %v2851, %v2850
        %vm2860 = vcmask 523264
        %v2861 = vsel %vm2860, %v2804, 0
        %2863 = vmatprep.subr.bf16.mxu0 0
        %2864 = vmatpush1.bf16.msra.mxu0 %v2852
        %2865 = vmatprep.subr.bf16.mxu0 0
        %2866 = vmatpush1.bf16.msra.mxu0 %v2853
        %2867 = vmatprep.subr.bf16.mxu0 0
        %2868 = vmatpush1.bf16.msra.mxu0 %v2854
        %2869 = vmatprep.subr.bf16.mxu0 0
        %2870 = vmatpush1.bf16.msra.mxu0 %v2855
        %2871 = vmatprep.subr.bf16.mxu0 0
        %2872 = vmatpush1.bf16.msra.mxu0 0
        %2873 = vmatprep.subr.bf16.mxu0 0
        %2874 = vmatpush1.bf16.msra.mxu0 0
        %2875 = vmatprep.subr.bf16.mxu0 0
        %2876 = vmatpush1.bf16.msra.mxu0 0
        %2877 = vmatprep.subr.bf16.mxu0 0
        %2878 = vmatpush1.bf16.msra.mxu0 0
        %2879 = vmatprep.subr.bf16.mxu0 0
        %2880 = vmatpush1.bf16.msra.mxu0 0
        %2881 = vmatprep.subr.bf16.mxu0 0
        %2882 = vmatpush1.bf16.msra.mxu0 0
        %2883 = vmatprep.subr.bf16.mxu0 0
        %2884 = vmatpush1.bf16.msra.mxu0 0
        %2885 = vmatprep.subr.bf16.mxu0 0
        %2886 = vmatpush1.bf16.msra.mxu0 0
        %2887 = vmatprep.subr.bf16.mxu0 0
        %2888 = vmatpush1.bf16.msra.mxu0 0
        %2889 = vmatprep.subr.bf16.mxu0 0
        %2890 = vmatpush1.bf16.msra.mxu0 0
        %2891 = vmatprep.subr.bf16.mxu0 0
        %2892 = vmatpush1.bf16.msra.mxu0 0
        %2893 = vmatprep.subr.bf16.mxu0 0
        %2894 = vmatpush1.bf16.msra.mxu0 0
        %2895 = vmatprep.mubr.bf16.mxu0 0
        %2896 = vmatmul.mubr.bf16.gmra.mrb[0].mxu0 %v2861
        %v2897 = vpop.f32.mrb[0].mxu0
        %v2898 = vadd.f32 0.0, %v2897
        %v2899 = vpop.f32.mrb[0].mxu0
        %v2900 = vpop.f32.mrb[0].mxu0
        %v2901 = vadd.f32 0.0, %v2900
        %v2902 = vpop.f32.mrb[0].mxu0
        %2903 = vdwg.mxu0
        %v2912 = vunpack.c.l.b16 %v2817
        %v2913 = vunpack.c.l.b16 %v2818
        %v2914 = vunpack.c.l.b16 %v2819
        %v2915 = vunpack.c.l.b16 %v2820
        %v2916 = vunpack.c.l.b16 %v2821
        %v2917 = vunpack.c.l.b16 %v2822
        %v2918 = vunpack.c.l.b16 %v2823
        %v2919 = vunpack.c.l.b16 %v2824
        %v2920 = vpack.c.b16 %v2913, %v2912
        %v2921 = vpack.c.b16 %v2915, %v2914
        %v2922 = vpack.c.b16 %v2917, %v2916
        %v2923 = vpack.c.b16 %v2919, %v2918
        %v2929 = vsel %vm2860, %v2813, 0
        %2931 = vmatprep.subr.bf16.mxu0 0
        %2932 = vmatpush1.bf16.msra.mxu0 %v2920
        %2933 = vmatprep.subr.bf16.mxu0 0
        %2934 = vmatpush1.bf16.msra.mxu0 %v2921
        %2935 = vmatprep.subr.bf16.mxu0 0
        %2936 = vmatpush1.bf16.msra.mxu0 %v2922
        %2937 = vmatprep.subr.bf16.mxu0 0
        %2938 = vmatpush1.bf16.msra.mxu0 %v2923
        %2939 = vmatprep.subr.bf16.mxu0 0
        %2940 = vmatpush1.bf16.msra.mxu0 0
        %2941 = vmatprep.subr.bf16.mxu0 0
        %2942 = vmatpush1.bf16.msra.mxu0 0
        %2943 = vmatprep.subr.bf16.mxu0 0
        %2944 = vmatpush1.bf16.msra.mxu0 0
        %2945 = vmatprep.subr.bf16.mxu0 0
        %2946 = vmatpush1.bf16.msra.mxu0 0
        %2947 = vmatprep.subr.bf16.mxu0 0
        %2948 = vmatpush1.bf16.msra.mxu0 0
        %2949 = vmatprep.subr.bf16.mxu0 0
        %2950 = vmatpush1.bf16.msra.mxu0 0
        %2951 = vmatprep.subr.bf16.mxu0 0
        %2952 = vmatpush1.bf16.msra.mxu0 0
        %2953 = vmatprep.subr.bf16.mxu0 0
        %2954 = vmatpush1.bf16.msra.mxu0 0
        %2955 = vmatprep.subr.bf16.mxu0 0
        %2956 = vmatpush1.bf16.msra.mxu0 0
        %2957 = vmatprep.subr.bf16.mxu0 0
        %2958 = vmatpush1.bf16.msra.mxu0 0
        %2959 = vmatprep.subr.bf16.mxu0 0
        %2960 = vmatpush1.bf16.msra.mxu0 0
        %2961 = vmatprep.subr.bf16.mxu0 0
        %2962 = vmatpush1.bf16.msra.mxu0 0
        %2963 = vmatprep.mubr.bf16.mxu0 0
        %2964 = vmatmul.mubr.bf16.gmra.mrb[0].mxu0 %v2929
        %v2965 = vpop.f32.mrb[0].mxu0
        %v2966 = vadd.f32 %v2898, %v2965
        %v2967 = vpop.f32.mrb[0].mxu0
        %v2968 = vpop.f32.mrb[0].mxu0
        %v2969 = vadd.f32 %v2901, %v2968
        %v2970 = vpop.f32.mrb[0].mxu0
        %2971 = vdwg.mxu0
        %v2972 = vrot.slane %v2809, 1
        %v2973 = vor.u32 %v2806, %v2972
        %v2975 = vsel %vm2723, %v2973, 0
        %s2976 = smul.u32 %s2725, 8
        %s2977 = smul.addr %s2976, 4
        %s2978 = scalar_lea.vmem %s14, %s2977
        %v2979 = vld [vmem:[%s2978] sm:$0xf]
        %v2980 = vld [vmem:[%s2978 + $0x4] sm:$0xf]
        %v2981 = vld [vmem:[%s2978 + $0x8] sm:$0xf]
        %v2982 = vld [vmem:[%s2978 + $0xc] sm:$0xf]
        %v2983 = vld [vmem:[%s2978 + $0x10] sm:$0xf]
        %v2984 = vld [vmem:[%s2978 + $0x14] sm:$0xf]
        %v2985 = vld [vmem:[%s2978 + $0x18] sm:$0xf]
        %v2986 = vld [vmem:[%s2978 + $0x1c] sm:$0xf]
        %v2995 = vunpack.c.l.b16 %v2979
        %v2996 = vunpack.c.l.b16 %v2980
        %v2997 = vunpack.c.l.b16 %v2981
        %v2998 = vunpack.c.l.b16 %v2982
        %v2999 = vunpack.c.l.b16 %v2983
        %v3000 = vunpack.c.l.b16 %v2984
        %v3001 = vunpack.c.l.b16 %v2985
        %v3002 = vunpack.c.l.b16 %v2986
        %v3003 = vpack.c.b16 %v2996, %v2995
        %v3004 = vpack.c.b16 %v2998, %v2997
        %v3005 = vpack.c.b16 %v3000, %v2999
        %v3006 = vpack.c.b16 %v3002, %v3001
        %v3012 = vsel %vm2860, %v2975, 0
        %3014 = vmatprep.subr.bf16.mxu0 0
        %3015 = vmatpush1.bf16.msra.mxu0 %v3003
        %3016 = vmatprep.subr.bf16.mxu0 0
        %3017 = vmatpush1.bf16.msra.mxu0 %v3004
        %3018 = vmatprep.subr.bf16.mxu0 0
        %3019 = vmatpush1.bf16.msra.mxu0 %v3005
        %3020 = vmatprep.subr.bf16.mxu0 0
        %3021 = vmatpush1.bf16.msra.mxu0 %v3006
        %3022 = vmatprep.subr.bf16.mxu0 0
        %3023 = vmatpush1.bf16.msra.mxu0 0
        %3024 = vmatprep.subr.bf16.mxu0 0
        %3025 = vmatpush1.bf16.msra.mxu0 0
        %3026 = vmatprep.subr.bf16.mxu0 0
        %3027 = vmatpush1.bf16.msra.mxu0 0
        %3028 = vmatprep.subr.bf16.mxu0 0
        %3029 = vmatpush1.bf16.msra.mxu0 0
        %3030 = vmatprep.subr.bf16.mxu0 0
        %3031 = vmatpush1.bf16.msra.mxu0 0
        %3032 = vmatprep.subr.bf16.mxu0 0
        %3033 = vmatpush1.bf16.msra.mxu0 0
        %3034 = vmatprep.subr.bf16.mxu0 0
        %3035 = vmatpush1.bf16.msra.mxu0 0
        %3036 = vmatprep.subr.bf16.mxu0 0
        %3037 = vmatpush1.bf16.msra.mxu0 0
        %3038 = vmatprep.subr.bf16.mxu0 0
        %3039 = vmatpush1.bf16.msra.mxu0 0
        %3040 = vmatprep.subr.bf16.mxu0 0
        %3041 = vmatpush1.bf16.msra.mxu0 0
        %3042 = vmatprep.subr.bf16.mxu0 0
        %3043 = vmatpush1.bf16.msra.mxu0 0
        %3044 = vmatprep.subr.bf16.mxu0 0
        %3045 = vmatpush1.bf16.msra.mxu0 0
        %3046 = vmatprep.mubr.bf16.mxu0 0
        %3047 = vmatmul.mubr.bf16.gmra.mrb[0].mxu0 %v3012
        %v3048 = vpop.f32.mrb[0].mxu0
        %v3049 = vadd.f32 0.0, %v3048
        %v3050 = vpop.f32.mrb[0].mxu0
        %v3051 = vpop.f32.mrb[0].mxu0
        %v3052 = vadd.f32 0.0, %v3051
        %v3053 = vpop.f32.mrb[0].mxu0
        %3054 = vdwg.mxu0
        %v3055 = vadd.f32 %v2966, %v3049
        %v3056 = vadd.f32 %v2969, %v3052
        %v3057 = vld [vmem:[%s969] sm:$0x1]
        %v3059 = vlaneseq
        %v3060 = vshrl.u32 %v3059, 7
        %v3061 = vsub.s32 0, %v3060
        %v3062 = vrot.slane %v3057, %v3061
        %v3064 = vadd.f32 %v3055, %v3062
        %v3065 = vadd.f32 %v3056, %v3062
        %v3066 = vmul.f32 %v3064, %v2569
        %v3067 = vmul.f32 %v3065, %v2574
        %v3068 = vadd.f32 %v2564, %v3066
        %v3069 = vadd.f32 %v2565, %v3067
        %v3070 = vld [vmem:[%s972] sm:$0x1]
        %v3071 = vld [vmem:[%s975] sm:$0x1]
        %v3072 = vsel %vm1306, %v3068, 0.0
        %3073 = vadd.xlane.f32.xlu0 %v3072
        %v3074 = vpop.xlane.xlu0 %3073
        %v3075 = vsel %vm1306, %v3069, 0.0
        %3076 = vadd.xlane.f32.xlu0 %v3075
        %v3077 = vpop.xlane.xlu0 %3076
        %v3078 = vmul.f32 %v3074, %v2529
        %v3079 = vmul.f32 %v3077, %v2529
        %v3080 = vsub.f32 %v3068, %v3078
        %v3081 = vsub.f32 %v3069, %v3079
        %v3082 = vmul.f32 %v3080, %v3080
        %v3083 = vmul.f32 %v3081, %v3081
        %v3084 = vsel %vm1306, %v3082, 0.0
        %3085 = vadd.xlane.f32.xlu0 %v3084
        %v3086 = vpop.xlane.xlu0 %3085
        %v3087 = vsel %vm1306, %v3083, 0.0
        %3088 = vadd.xlane.f32.xlu0 %v3087
        %v3089 = vpop.xlane.xlu0 %3088
        %v3090 = vmul.f32 %v3086, %v2529
        %v3091 = vmul.f32 %v3089, %v2529
        %v3092 = vadd.f32 %v3090, 1e-05
        %v3093 = vadd.f32 %v3091, 1e-05
        %v3094 = vrsqrt.pop %v3092
        %v3095 = vrsqrt.pop %v3093
        %v3096 = vmul.f32 %v3080, %v3094
        %v3097 = vmul.f32 %v3081, %v3095
        %v3099 = vlaneseq
        %v3100 = vshrl.u32 %v3099, 7
        %v3101 = vsub.s32 0, %v3100
        %v3102 = vrot.slane %v3070, %v3101
        %v3104 = vmul.f32 %v3096, %v3102
        %v3105 = vmul.f32 %v3097, %v3102
        %v3107 = vlaneseq
        %v3108 = vshrl.u32 %v3107, 7
        %v3109 = vsub.s32 0, %v3108
        %v3110 = vrot.slane %v3071, %v3109
        %v3112 = vadd.f32 %v3104, %v3110
        %v3113 = vadd.f32 %v3105, %v3110
        %3114 = vst.msk [vmem:[%s927] sm:$0xff] %vm1306, %v3112
        %3115 = vst.msk [vmem:[%s927 + $0x8] sm:$0xff] %vm1306, %v3113
        %p3116 = scmp.eq.s32.totalorder %s49, 1
        // Predicated region
        $region125: #{tpu_custom_call.1} parent=119 // pred_check
          %p3117 = pneg %p3116
        $region126: #{tpu_custom_call.1} parent=119 // pred_check_branch
          %3119 = sbr.rel (%p3117) target = $region128
        $region127: #{tpu_custom_call.1} parent=119 // pred_region
          %v3120 = vmul.f32 %v3112, %v2569
          %v3121 = vmul.f32 %v3113, %v2574
          %3122 = vst.msk [vmem:[%s927] sm:$0xff] %vm1306, %v3120
          %3123 = vst.msk [vmem:[%s927 + $0x8] sm:$0xff] %vm1306, %v3121
          %v3124 = vpack.c.bf16 %v3121, %v3120
          %v3125 = vld [vmem:[%s23] sm:$0xf]
          %v3126 = vld [vmem:[%s23 + $0x4] sm:$0xf]
          %v3127 = vld [vmem:[%s23 + $0x8] sm:$0xf]
          %v3128 = vld [vmem:[%s23 + $0xc] sm:$0xf]
          %v3129 = vld [vmem:[%s24] sm:$0x1]
          %v3131 = vlaneseq
          %v3132 = vshrl.u32 %v3131, 7
          %v3133 = vsub.s32 0, %v3132
          %v3134 = vrot.slane %v3129, %v3133
          %v3140 = vunpack.c.l.b16 %v3125
          %v3141 = vunpack.c.l.b16 %v3126
          %v3142 = vunpack.c.l.b16 %v3127
          %v3143 = vunpack.c.l.b16 %v3128
          %v3144 = vpack.c.b16 %v3141, %v3140
          %v3145 = vpack.c.b16 %v3143, %v3142
          %v3149 = vsel %vm1306, %v3124, 0
          %3151 = vmatprep.subr.bf16.mxu0 0
          %3152 = vmatpush1.bf16.msra.mxu0 %v3144
          %3153 = vmatprep.subr.bf16.mxu0 0
          %3154 = vmatpush1.bf16.msra.mxu0 %v3145
          %3155 = vmatprep.subr.bf16.mxu0 0
          %3156 = vmatpush1.bf16.msra.mxu0 0
          %3157 = vmatprep.subr.bf16.mxu0 0
          %3158 = vmatpush1.bf16.msra.mxu0 0
          %3159 = vmatprep.subr.bf16.mxu0 0
          %3160 = vmatpush1.bf16.msra.mxu0 0
          %3161 = vmatprep.subr.bf16.mxu0 0
          %3162 = vmatpush1.bf16.msra.mxu0 0
          %3163 = vmatprep.subr.bf16.mxu0 0
          %3164 = vmatpush1.bf16.msra.mxu0 0
          %3165 = vmatprep.subr.bf16.mxu0 0
          %3166 = vmatpush1.bf16.msra.mxu0 0
          %3167 = vmatprep.subr.bf16.mxu0 0
          %3168 = vmatpush1.bf16.msra.mxu0 0
          %3169 = vmatprep.subr.bf16.mxu0 0
          %3170 = vmatpush1.bf16.msra.mxu0 0
          %3171 = vmatprep.subr.bf16.mxu0 0
          %3172 = vmatpush1.bf16.msra.mxu0 0
          %3173 = vmatprep.subr.bf16.mxu0 0
          %3174 = vmatpush1.bf16.msra.mxu0 0
          %3175 = vmatprep.subr.bf16.mxu0 0
          %3176 = vmatpush1.bf16.msra.mxu0 0
          %3177 = vmatprep.subr.bf16.mxu0 0
          %3178 = vmatpush1.bf16.msra.mxu0 0
          %3179 = vmatprep.subr.bf16.mxu0 0
          %3180 = vmatpush1.bf16.msra.mxu0 0
          %3181 = vmatprep.subr.bf16.mxu0 0
          %3182 = vmatpush1.bf16.msra.mxu0 0
          %3183 = vmatprep.mubr.bf16.mxu0 0
          %3184 = vmatmul.mubr.bf16.gmra.mrb[0].mxu0 %v3149
          %v3185 = vpop.f32.mrb[0].mxu0
          %v3186 = vadd.f32 %v3134, %v3185
          %v3187 = vpop.f32.mrb[0].mxu0
          %v3188 = vpop.f32.mrb[0].mxu0
          %v3189 = vadd.f32 %v3134, %v3188
          %v3190 = vpop.f32.mrb[0].mxu0
          %3191 = vdwg.mxu0
          %v3192 = vmul.f32 %v3186, %v2569
          %v3193 = vmul.f32 %v3189, %v2574
          %3194 = vst [vmem:[%s934] sm:$0xff] %v3192
          %3195 = vst [vmem:[%s934 + $0x8] sm:$0xff] %v3193
        $region128: #{tpu_custom_call.1} parent=119 // pred_fallthru
          _
        %s3196 = sand.u32 %s649, 1
        %s3197 = scalar_lea.sflag [#allocation4], %s3196
        %s3198 = sand.u32 %s649, 1
        %s3199 = smul.addr %s3198, 16
        %s3200 = scalar_lea.vmem [#allocation3], %s3199
        %s3201 = sand.u32 %s675, 1
        %s3202 = scalar_lea.sflag [#allocation6], %s3201
        %s3203 = sand.u32 %s675, 1
        %s3204 = smul.addr %s3203, 16
        %s3205 = scalar_lea.vmem [#allocation5], %s3204
        // Predicated region
        $region129: #{tpu_custom_call.1} parent=119 // pred_check
          %p3206 = pneg %p659
        $region130: #{tpu_custom_call.1} parent=119 // pred_check_branch
          %3208 = sbr.rel (%p3206) target = $region132
        $region131: #{tpu_custom_call.1} parent=119 // pred_region
          %s3210 = ssub.s32 256, 256
          %3211 = vsyncadd %s3197, %s3210
          %s3212 = smul.addr %s48, 2
          %s3213 = smul.addr %s3212, 128
          %s3214 = scalar_lea.hbm %s25, %s3213
          %s3215 = sshll.u32 %s3200, 4
          %s3216 = int_to_ptr.vmem [resolvable:$true] %s3215
          %3221 = dma.vmem_to_hbm [thread:$0]  %s3216, 256, %s3214, %s3197, 128, 128, 8
        $region132: #{tpu_custom_call.1} parent=119 // pred_fallthru
          _
        // Predicated region
        $region133: #{tpu_custom_call.1} parent=119 // pred_check
          %p3222 = pneg %p685
        $region134: #{tpu_custom_call.1} parent=119 // pred_check_branch
          %3224 = sbr.rel (%p3222) target = $region136
        $region135: #{tpu_custom_call.1} parent=119 // pred_region
          %s3226 = ssub.s32 256, 256
          %3227 = vsyncadd %s3202, %s3226
          %s3228 = smul.addr %s48, 2
          %s3229 = smul.addr %s3228, 128
          %s3230 = scalar_lea.hbm %s26, %s3229
          %s3231 = sshll.u32 %s3205, 4
          %s3232 = int_to_ptr.vmem [resolvable:$true] %s3231
          %3237 = dma.vmem_to_hbm [thread:$0]  %s3232, 256, %s3230, %s3202, 128, 128, 8
        $region136: #{tpu_custom_call.1} parent=119 // pred_fallthru
          _
      $region120: #{tpu_custom_call.1} parent=5 // pred_fallthru
        _
      %p3238 = scmp.le.s32.totalorder 2, %s39
      // Predicated region
      $region137: #{tpu_custom_call.1} parent=5 // pred_check
        %p3239 = pneg %p3238
      $region138: #{tpu_custom_call.1} parent=5 // pred_check_branch
        %3241 = sbr.rel (%p3239) target = $region140
      $region139: #{tpu_custom_call.1} parent=5 // pred_region
        %s3242 = ssub.s32 %s39, 2
        // Predicated region
        $region141: #{tpu_custom_call.1} parent=139 // pred_check
          %p3243 = pneg %p665
        $region142: #{tpu_custom_call.1} parent=139 // pred_check_branch
          %3245 = sbr.rel (%p3243) target = $region144
        $region143: #{tpu_custom_call.1} parent=139 // pred_region
          %s3246 = sand.u32 %s650, 1
          %s3247 = scalar_lea.sflag [#allocation4], %s3246
          %s3248 = sand.u32 %s650, 1
          %s3249 = smul.addr %s3248, 16
          %s3250 = scalar_lea.vmem [#allocation3], %s3249
          %3251 = dma.done %s3247, 256
        $region144: #{tpu_custom_call.1} parent=139 // pred_fallthru
          _
        // Predicated region
        $region145: #{tpu_custom_call.1} parent=139 // pred_check
          %p3252 = pneg %p691
        $region146: #{tpu_custom_call.1} parent=139 // pred_check_branch
          %3254 = sbr.rel (%p3252) target = $region148
        $region147: #{tpu_custom_call.1} parent=139 // pred_region
          %s3255 = sand.u32 %s676, 1
          %s3256 = scalar_lea.sflag [#allocation6], %s3255
          %s3257 = sand.u32 %s676, 1
          %s3258 = smul.addr %s3257, 16
          %s3259 = scalar_lea.vmem [#allocation5], %s3258
          %3260 = dma.done %s3256, 256
        $region148: #{tpu_custom_call.1} parent=139 // pred_fallthru
          _
      $region140: #{tpu_custom_call.1} parent=5 // pred_fallthru
        _
    $region6: #{tpu_custom_call.1} parent=1 // loop_footer
      %s43 = sadd.s32 1, %s39
    $region7: #{tpu_custom_call.1} parent=1 // loop_footer_branch
      %38 = sbr.rel target = $region3
    $region8: #{tpu_custom_call.1} parent=1 // loop_exit
      _
    %3261 = vsyncpa [#allocation4], 1
    %s3262 = scalar_lea.sflag [#allocation4], 1
    %3263 = vsyncpa %s3262, 1
    %3264 = vsyncpa [#allocation6], 1
    %s3265 = scalar_lea.sflag [#allocation6], 1
    %3266 = vsyncpa %s3265, 1

</llo_original>
